<compile_context>
chip_gen: v7x
topology: tpu7x:2x2x1
jax: 0.10.0
libtpu: 0.0.40
codegen_flags: <defaults>
</compile_context>

<pallas_src>
import functools

import jax
import jax.numpy as jnp
import numpy as np
from jax.experimental import pallas as pl
from jax.experimental.pallas import tpu as pltpu

EPS = 1e-5
LANES = 128


# ------------------------------- small helpers ------------------------------ #

def _rup(v, m):
    return (v + m - 1) // m * m


def _pad_last(a, target):
    pad = target - a.shape[-1]
    if pad == 0:
        return a
    return jnp.pad(a, [(0, 0)] * (a.ndim - 1) + [(0, pad)])


def _pick_tm(rows):
    # Largest row tile <= 512 that divides `rows` and leaves >= 4 (else >= 2)
    # grid steps, so the BlockSpec pipeline overlaps DMA/compute on all chips
    # (including v7x's two TensorCores).
    for steps in (4, 2):
        for cand in (512, 256, 128, 64, 32, 16, 8):
            if rows % cand == 0 and rows // cand >= steps:
                return cand
    return rows


def _pick_th(ho, wo):
    # Output-row tile for the 3x3 conv: keep the patch matrix <= 512 rows and
    # leave >= 2 row tiles per image for pipelining.
    for th in range(ho, 0, -1):
        if ho % th == 0 and th * wo <= 512 and ho // th >= 2:
            return th
    return ho


def _bytes(shape, dtype):
    return int(np.prod(shape)) * jnp.dtype(dtype).itemsize


def _cp(sem, blocks, scratch_bytes=0):
    # vmem budget from actual block sizes (x2 for double buffering) + scratch
    # + headroom, capped at v7x's 64 MiB per TensorCore.
    est = 2 * sum(_bytes(s, d) for s, d in blocks) + scratch_bytes + (4 << 20)
    return pltpu.CompilerParams(
        dimension_semantics=sem,
        vmem_limit_bytes=int(min(max(est, 16 << 20), 64 << 20)))


# ----------------------------- Pallas kernels ------------------------------- #

def _conv1_kernel(x_ref, w_ref, y_ref, ps_ref):
    # conv1 (1x1) as a matmul (bf16 MXU, f32 acc) + bn1 per-tile partial sums.
    y = jnp.dot(x_ref[...].astype(jnp.bfloat16), w_ref[...],
                preferred_element_type=jnp.float32)
    yb = y.astype(y_ref.dtype)
    y_ref[...] = yb
    yf = yb.astype(jnp.float32)
    ps_ref[0, 0:1, :] = jnp.sum(yf, axis=0, keepdims=True)
    ps_ref[0, 1:2, :] = jnp.sum(yf * yf, axis=0, keepdims=True)


def _conv3x3_kernel(y1_ref, st_ref, g_ref, b_ref, w_ref, y2_ref, ps_ref,
                    xn_ref, p_ref, *, stride, th, wo, h, w, inv_n):
    # bn1+ReLU fused with the 3x3 conv.  The raw conv1 slab for one image is
    # VMEM-resident across all row tiles (its block index is constant in t);
    # at t == 0 it is normalized band-by-band into the zero-padded scratch
    # slab (zero halo == spatial padding).  Every step then builds a
    # (th*wo, 9*C) patch matrix in a VMEM scratch and does one wide-K matmul.
    c = xn_ref.shape[-1]
    t = pl.program_id(1)
    band = th * stride

    @pl.when(t == 0)
    def _():
        mean = (st_ref[0:1, :] * inv_n).reshape(1, 1, c)
        var = jnp.maximum((st_ref[1:2, :] * inv_n).reshape(1, 1, c)
                          - mean * mean, 0.0)
        scale = jax.lax.rsqrt(var + EPS) * g_ref[...].reshape(1, 1, c)
        shift = b_ref[...].reshape(1, 1, c) - mean * scale
        xn_ref[...] = jnp.zeros_like(xn_ref)              # zero halo / padding
        r = 0
        while r < h:                                       # static band loop
            bsz = min(band, h - r)
            a = jnp.maximum(
                y1_ref[0, r:r + bsz, :, :].astype(jnp.float32) * scale + shift,
                0.0)
            xn_ref[1 + r:1 + r + bsz, 1:w + 1, :] = a.astype(xn_ref.dtype)
            r += bsz

    row0 = pl.multiple_of(t * band, band)
    for di in range(3):
        for dj in range(3):
            tap = di * 3 + dj
            if stride == 1:
                blk = xn_ref[pl.ds(row0 + di, th), dj:dj + wo, :]
            else:
                # TODO(synk): stride>1 (strided ref reads) is implemented but
                # not exercised by the built-in tests.
                blk = xn_ref[pl.ds(row0 + di, th, stride=stride),
                             pl.ds(dj, wo, stride=stride), :]
            p_ref[:, tap * c:(tap + 1) * c] = blk.reshape(th * wo, c)

    y = jnp.dot(p_ref[...], w_ref[...], preferred_element_type=jnp.float32)
    yb = y.astype(y2_ref.dtype)
    y2_ref[...] = yb.reshape(1, th, wo, c)
    yf = yb.astype(jnp.float32)
    ps_ref[0, 0, 0:1, :] = jnp.sum(yf, axis=0, keepdims=True)
    ps_ref[0, 0, 1:2, :] = jnp.sum(yf * yf, axis=0, keepdims=True)


def _conv3_kernel(y2_ref, st_ref, g_ref, b_ref, w_ref, y_ref, ps_ref, *, inv_n):
    # bn2+ReLU fused with conv3 (1x1 matmul) + bn3 per-tile partial sums.
    mean = st_ref[0:1, :] * inv_n
    var = jnp.maximum(st_ref[1:2, :] * inv_n - mean * mean, 0.0)
    scale = jax.lax.rsqrt(var + EPS) * g_ref[...]
    a = jnp.maximum(y2_ref[...].astype(jnp.float32) * scale
                    + (b_ref[...] - mean * scale), 0.0)
    y = jnp.dot(a.astype(jnp.bfloat16), w_ref[...],
                preferred_element_type=jnp.float32)
    yb = y.astype(y_ref.dtype)
    y_ref[...] = yb
    yf = yb.astype(jnp.float32)
    ps_ref[0, 0:1, :] = jnp.sum(yf, axis=0, keepdims=True)
    ps_ref[0, 1:2, :] = jnp.sum(yf * yf, axis=0, keepdims=True)


def _head_proj_kernel(y3_ref, st_ref, g_ref, b_ref, xs_ref, w4_ref, b4_ref,
                      o_ref, *, inv_n):
    # bn3 + projection skip (1x1 conv + bias) + residual add + ReLU.
    mean = st_ref[0:1, :] * inv_n
    var = jnp.maximum(st_ref[1:2, :] * inv_n - mean * mean, 0.0)
    scale = jax.lax.rsqrt(var + EPS) * g_ref[...]
    y = y3_ref[...].astype(jnp.float32) * scale + (b_ref[...] - mean * scale)
    skip = jnp.dot(xs_ref[...].astype(jnp.bfloat16), w4_ref[...],
                   preferred_element_type=jnp.float32) + b4_ref[...]
    o_ref[...] = jnp.maximum(y + skip, 0.0)


def _head_id_kernel(y3_ref, st_ref, g_ref, b_ref, xs_ref, o_ref, *, inv_n):
    # bn3 + identity skip + residual add + ReLU.
    mean = st_ref[0:1, :] * inv_n
    var = jnp.maximum(st_ref[1:2, :] * inv_n - mean * mean, 0.0)
    scale = jax.lax.rsqrt(var + EPS) * g_ref[...]
    y = y3_ref[...].astype(jnp.float32) * scale + (b_ref[...] - mean * scale)
    o_ref[...] = jnp.maximum(y + xs_ref[...], 0.0)


# ---------------------------- pallas_call wrappers --------------------------- #

def _conv1(x2d, w1, tm):
    rows, cin = x2d.shape
    cm_p = w1.shape[1]
    nt = rows // tm
    blocks = [((tm, cin), x2d.dtype), ((cin, cm_p), jnp.bfloat16),
              ((tm, cm_p), jnp.bfloat16), ((1, 2, cm_p), jnp.float32)]
    y1, ps = pl.pallas_call(
        _conv1_kernel,
        grid=(nt,),
        in_specs=[pl.BlockSpec((tm, cin), lambda i: (i, 0)),
                  pl.BlockSpec((cin, cm_p), lambda i: (0, 0))],
        out_specs=(pl.BlockSpec((tm, cm_p), lambda i: (i, 0)),
                   pl.BlockSpec((1, 2, cm_p), lambda i: (i, 0, 0))),
        out_shape=(jax.ShapeDtypeStruct((rows, cm_p), jnp.bfloat16),
                   jax.ShapeDtypeStruct((nt, 2, cm_p), jnp.float32)),
        compiler_params=_cp(("parallel",), blocks),
    )(x2d, w1)
    return y1, jnp.sum(ps, axis=0)


def _conv3x3(y1, stats1, g1, be1, w2flat, stride, ho, wo, th, inv_n):
    n, h, w, c = y1.shape
    t_steps = ho // th
    scratch = [pltpu.VMEM((h + 2, w + 2, c), jnp.bfloat16),
               pltpu.VMEM((th * wo, 9 * c), jnp.bfloat16)]
    scratch_bytes = (_bytes((h + 2, w + 2, c), jnp.bfloat16)
                     + _bytes((th * wo, 9 * c), jnp.bfloat16))
    blocks = [((1, h, w, c), jnp.bfloat16), ((2, c), jnp.float32),
              ((1, c), jnp.float32), ((1, c), jnp.float32),
              ((9 * c, c), jnp.bfloat16), ((1, th, wo, c), jnp.bfloat16),
              ((1, 1, 2, c), jnp.float32)]
    kern = functools.partial(_conv3x3_kernel, stride=stride, th=th, wo=wo,
                             h=h, w=w, inv_n=inv_n)
    y2, ps = pl.pallas_call(
        kern,
        grid=(n, t_steps),
        in_specs=[pl.BlockSpec((1, h, w, c), lambda i, t: (i, 0, 0, 0)),
                  pl.BlockSpec((2, c), lambda i, t: (0, 0)),
                  pl.BlockSpec((1, c), lambda i, t: (0, 0)),
                  pl.BlockSpec((1, c), lambda i, t: (0, 0)),
                  pl.BlockSpec((9 * c, c), lambda i, t: (0, 0))],
        out_specs=(pl.BlockSpec((1, th, wo, c), lambda i, t: (i, t, 0, 0)),
                   pl.BlockSpec((1, 1, 2, c), lambda i, t: (i, t, 0, 0))),
        out_shape=(jax.ShapeDtypeStruct((n, ho, wo, c), jnp.bfloat16),
                   jax.ShapeDtypeStruct((n, t_steps, 2, c), jnp.float32)),
        scratch_shapes=scratch,
        compiler_params=_cp(("parallel", "arbitrary"), blocks, scratch_bytes),
    )(y1, stats1, g1, be1, w2flat)
    return y2, jnp.sum(ps, axis=(0, 1))


def _conv3(y2, stats2, g2, be2, w3, tm, inv_n):
    rows, c = y2.shape
    cout = w3.shape[1]
    nt = rows // tm
    blocks = [((tm, c), jnp.bfloat16), ((2, c), jnp.float32),
              ((1, c), jnp.float32), ((1, c), jnp.float32),
              ((c, cout), jnp.bfloat16), ((tm, cout), jnp.bfloat16),
              ((1, 2, cout), jnp.float32)]
    y3, ps = pl.pallas_call(
        functools.partial(_conv3_kernel, inv_n=inv_n),
        grid=(nt,),
        in_specs=[pl.BlockSpec((tm, c), lambda i: (i, 0)),
                  pl.BlockSpec((2, c), lambda i: (0, 0)),
                  pl.BlockSpec((1, c), lambda i: (0, 0)),
                  pl.BlockSpec((1, c), lambda i: (0, 0)),
                  pl.BlockSpec((c, cout), lambda i: (0, 0))],
        out_specs=(pl.BlockSpec((tm, cout), lambda i: (i, 0)),
                   pl.BlockSpec((1, 2, cout), lambda i: (i, 0, 0))),
        out_shape=(jax.ShapeDtypeStruct((rows, cout), jnp.bfloat16),
                   jax.ShapeDtypeStruct((nt, 2, cout), jnp.float32)),
        compiler_params=_cp(("parallel",), blocks),
    )(y2, stats2, g2, be2, w3)
    return y3, jnp.sum(ps, axis=0)


def _head_proj(y3, stats3, g3, be3, xs, w4, b4, tm, inv_n):
    rows, cout = y3.shape
    cin = xs.shape[1]
    nt = rows // tm
    blocks = [((tm, cout), jnp.bfloat16), ((2, cout), jnp.float32),
              ((1, cout), jnp.float32), ((1, cout), jnp.float32),
              ((tm, cin), xs.dtype), ((cin, cout), jnp.bfloat16),
              ((1, cout), jnp.float32), ((tm, cout), jnp.float32)]
    return pl.pallas_call(
        functools.partial(_head_proj_kernel, inv_n=inv_n),
        grid=(nt,),
        in_specs=[pl.BlockSpec((tm, cout), lambda i: (i, 0)),
                  pl.BlockSpec((2, cout), lambda i: (0, 0)),
                  pl.BlockSpec((1, cout), lambda i: (0, 0)),
                  pl.BlockSpec((1, cout), lambda i: (0, 0)),
                  pl.BlockSpec((tm, cin), lambda i: (i, 0)),
                  pl.BlockSpec((cin, cout), lambda i: (0, 0)),
                  pl.BlockSpec((1, cout), lambda i: (0, 0))],
        out_specs=pl.BlockSpec((tm, cout), lambda i: (i, 0)),
        out_shape=jax.ShapeDtypeStruct((rows, cout), jnp.float32),
        compiler_params=_cp(("parallel",), blocks),
    )(y3, stats3, g3, be3, xs, w4, b4)


def _head_id(y3, stats3, g3, be3, xs, tm, inv_n):
    rows, cout = y3.shape
    nt = rows // tm
    blocks = [((tm, cout), jnp.bfloat16), ((2, cout), jnp.float32),
              ((1, cout), jnp.float32), ((1, cout), jnp.float32),
              ((tm, cout), xs.dtype), ((tm, cout), jnp.float32)]
    return pl.pallas_call(
        functools.partial(_head_id_kernel, inv_n=inv_n),
        grid=(nt,),
        in_specs=[pl.BlockSpec((tm, cout), lambda i: (i, 0)),
                  pl.BlockSpec((2, cout), lambda i: (0, 0)),
                  pl.BlockSpec((1, cout), lambda i: (0, 0)),
                  pl.BlockSpec((1, cout), lambda i: (0, 0)),
                  pl.BlockSpec((tm, cout), lambda i: (i, 0))],
        out_specs=pl.BlockSpec((tm, cout), lambda i: (i, 0)),
        out_shape=jax.ShapeDtypeStruct((rows, cout), jnp.float32),
        compiler_params=_cp(("parallel",), blocks),
    )(y3, stats3, g3, be3, xs)


# ------------------------------ forward wrapper ------------------------------ #

def _prepare_params(p, use_1x1conv, cm_p):
    # bf16 weights; middle channel dim zero-padded to a 128 multiple; Cout left
    # at its natural size (it is a 128 multiple in real ResNet-50 configs).
    cm = p["w2"].shape[2]
    q = {
        "w1": _pad_last(p["w1"], cm_p).astype(jnp.bfloat16),
        "w3": jnp.pad(p["w3"], ((0, cm_p - cm), (0, 0))).astype(jnp.bfloat16),
        "g1": _pad_last(p["g1"], cm_p), "be1": _pad_last(p["be1"], cm_p),
        "g2": _pad_last(p["g2"], cm_p), "be2": _pad_last(p["be2"], cm_p),
        "g3": p["g3"], "be3": p["be3"],
    }
    w2 = jnp.pad(p["w2"], ((0, 0), (0, 0), (0, cm_p - cm), (0, cm_p - cm)))
    q["w2"] = w2.reshape(9 * cm_p, cm_p).astype(jnp.bfloat16)   # tap-major rows
    if use_1x1conv:
        q["w4"] = p["w4"].astype(jnp.bfloat16)
        q["b4"] = p["b4"]
    return q


def residual50_forward(x, p, *, use_1x1conv, strides):
    """x: (N, H, W, Cin) float32 NHWC -> (N, Ho, Wo, 4*num_channels) float32."""
    n, h, w, cin = x.shape
    cm = p["w1"].shape[1]
    cout = p["w3"].shape[1]
    cm_p = _rup(cm, LANES)
    q = _prepare_params(p, use_1x1conv, cm_p)

    ho = (h - 1) // strides + 1
    wo = (w - 1) // strides + 1
    rows1, rows2 = n * h * w, n * ho * wo
    tm1, tm2 = _pick_tm(rows1), _pick_tm(rows2)
    th = _pick_th(ho, wo)

    # conv1 (1x1) + bn1 partial stats (x consumed as f32, cast in-kernel).
    y1, stats1 = _conv1(x.reshape(rows1, cin), q["w1"], tm1)

    # fused bn1+ReLU (+ zero halo) + conv2 (3x3) + bn2 partial stats.
    y2, stats2 = _conv3x3(y1.reshape(n, h, w, cm_p), stats1, q["g1"], q["be1"],
                          q["w2"], strides, ho, wo, th, 1.0 / rows1)

    # fused bn2+ReLU + conv3 (1x1) + bn3 partial stats.
    y3, stats3 = _conv3(y2.reshape(rows2, cm_p), stats2, q["g2"], q["be2"],
                        q["w3"], tm2, 1.0 / rows2)

    # fused bn3 + skip + residual add + ReLU (natural Cout, no final slice).
    if use_1x1conv:
        xs = x if strides == 1 else x[:, ::strides, ::strides, :]
        # TODO(synk): fold the strides>1 skip subsampling into the head
        # kernel's BlockSpec index_map instead of a wrapper-level slice.
        out = _head_proj(y3, stats3, q["g3"], q["be3"], xs.reshape(rows2, cin),
                         q["w4"], q["b4"], tm2, 1.0 / rows2)
    else:
        assert strides == 1 and cin == cout, "identity skip needs matching shapes"
        out = _head_id(y3, stats3, q["g3"], q["be3"], x.reshape(rows2, cout),
                       tm2, 1.0 / rows2)
    return out.reshape(n, ho, wo, cout)


# ----------------------------- parameters / reference ------------------------ #

def init_params(key, input_channels, num_channels, use_1x1conv):
    cin, cm = input_channels, num_channels
    cout = 4 * num_channels
    ks = jax.random.split(key, 16)

    def rnd(k, shape, scale=0.1):
        return (scale * jax.random.normal(k, shape)).astype(jnp.float32)

    p = dict(
        w1=rnd(ks[0], (cin, cm)), b1=rnd(ks[1], (1, cm)),
        w2=rnd(ks[2], (3, 3, cm, cm)), b2=rnd(ks[3], (1, cm)),
        w3=rnd(ks[4], (cm, cout)), b3=rnd(ks[5], (1, cout)),
        g1=1.0 + rnd(ks[6], (1, cm)), be1=rnd(ks[7], (1, cm)),
        g2=1.0 + rnd(ks[8], (1, cm)), be2=rnd(ks[9], (1, cm)),
        g3=1.0 + rnd(ks[10], (1, cout)), be3=rnd(ks[11], (1, cout)),
    )
    if use_1x1conv:
        p["w4"] = rnd(ks[12], (cin, cout))
        p["b4"] = rnd(ks[13], (1, cout))
    return p


def ref_forward(x, p, *, use_1x1conv, strides):
    """Pure-JAX f32 reference (same math as the PyTorch module, biases included)."""
    dn = ("NHWC", "HWIO", "NHWC")
    prec = jax.lax.Precision.HIGHEST

    def conv(v, wgt, stride, pad):
        return jax.lax.conv_general_dilated(
            v, wgt, window_strides=(stride, stride), padding=pad,
            dimension_numbers=dn, precision=prec)

    def bn(v, g, b):
        mean = jnp.mean(v, axis=(0, 1, 2), keepdims=True)
        var = jnp.mean((v - mean) ** 2, axis=(0, 1, 2), keepdims=True)
        return ((v - mean) / jnp.sqrt(var + EPS) * g.reshape(1, 1, 1, -1)
                + b.reshape(1, 1, 1, -1))

    cin, cm = p["w1"].shape
    cout = p["w3"].shape[1]
    y = conv(x, p["w1"].reshape(1, 1, cin, cm), 1, "VALID") + p["b1"].reshape(1, 1, 1, -1)
    y = jax.nn.relu(bn(y, p["g1"], p["be1"]))
    y = conv(y, p["w2"], strides, ((1, 1), (1, 1))) + p["b2"].reshape(1, 1, 1, -1)
    y = jax.nn.relu(bn(y, p["g2"], p["be2"]))
    y = conv(y, p["w3"].reshape(1, 1, cm, cout), 1, "VALID") + p["b3"].reshape(1, 1, 1, -1)
    y = bn(y, p["g3"], p["be3"])
    if use_1x1conv:
        x = conv(x, p["w4"].reshape(1, 1, cin, cout), strides, "VALID") \
            + p["b4"].reshape(1, 1, 1, -1)
    return jax.nn.relu(y + x)


# ------------------------------------ main ----------------------------------- #

def _run_case(key, n, h, w, cin, cm, use_1x1conv, strides, tol=4e-2):
    kx, kp = jax.random.split(key)
    x = jax.random.normal(kx, (n, h, w, cin), dtype=jnp.float32)
    p = init_params(kp, cin, cm, use_1x1conv)
    fwd = jax.jit(functools.partial(residual50_forward,
                                    use_1x1conv=use_1x1conv, strides=strides))
    out = jax.block_until_ready(fwd(x, p))
    ref = ref_forward(x, p, use_1x1conv=use_1x1conv, strides=strides)
    # bf16 MXU inputs / bf16 intermediates vs f32 HIGHEST-precision reference.
    np.testing.assert_allclose(np.asarray(out), np.asarray(ref),
                               atol=tol, rtol=tol)


if __name__ == "__main__":
    key = jax.random.PRNGKey(0)
    k1, k2 = jax.random.split(key)

    # Projection-skip config: cin=16, cm=8 -> cout=32, stride 1.
    _run_case(k1, n=2, h=16, w=16, cin=16, cm=8, use_1x1conv=True, strides=1)
    # Identity-skip config: cin == 4*cm == 32, stride 1.
    _run_case(k2, n=2, h=8, w=8, cin=32, cm=8, use_1x1conv=False, strides=1)

    print("KERNEL_OK")
</pallas_src>

<mosaic_0001>
module attributes {stable_mosaic.version = 11 : i64} {
  func.func @_conv1_kernel(%arg0: i32, %arg1: memref<128x16xf32, #tpu.memory_space<vmem>>, %arg2: memref<16x128xbf16, #tpu.memory_space<vmem>>, %arg3: memref<128x128xbf16, #tpu.memory_space<vmem>>, %arg4: memref<1x2x128xf32, #tpu.memory_space<vmem>>) attributes {dimension_semantics = [#tpu.dimension_semantics<parallel>], iteration_bounds = array<i64: 4>, scalar_prefetch = 0 : i64, scratch_operands = 0 : i64, tpu.core_type = #tpu.core_type<tc>, window_params = [{transform_indices = @transform_0, window_bounds = array<i64: 128, 16>}, {pipeline_mode = #tpu.pipeline_mode<synchronous>, transform_indices = @transform_1, window_bounds = array<i64: 16, 128>}, {transform_indices = @transform_2, window_bounds = array<i64: 128, 128>}, {transform_indices = @transform_3, window_bounds = array<i64: 1, 2, 128>}]} {
    %c0 = arith.constant 0 : index
    %c0_0 = arith.constant 0 : index
    %0 = vector.load %arg1[%c0, %c0_0] : memref<128x16xf32, #tpu.memory_space<vmem>>, vector<128x16xf32>
    %1 = arith.truncf %0 : vector<128x16xf32> to vector<128x16xbf16>
    %c0_1 = arith.constant 0 : index
    %c0_2 = arith.constant 0 : index
    %2 = vector.load %arg2[%c0_1, %c0_2] : memref<16x128xbf16, #tpu.memory_space<vmem>>, vector<16x128xbf16>
    %cst = arith.constant dense<0.000000e+00> : vector<128x128xf32>
    %3 = tpu.matmul %1, %2, %cst {dimension_numbers = #tpu.dot_dimension_numbers<[1], [0], [0], [1], [0, 0, 1, 1], [], []>} : vector<128x16xbf16>, vector<16x128xbf16>, vector<128x128xf32> -> vector<128x128xf32>
    %4 = arith.truncf %3 : vector<128x128xf32> to vector<128x128xbf16>
    %c0_3 = arith.constant 0 : index
    %c0_4 = arith.constant 0 : index
    %5 = vector.load %arg3[%c0_3, %c0_4] : memref<128x128xbf16, #tpu.memory_space<vmem>>, vector<128x128xbf16>
    tpu.vector_store %arg3[%c0_3, %c0_4], %4 {strides = array<i32>} : memref<128x128xbf16, #tpu.memory_space<vmem>>, vector<128x128xbf16>,
    %6 = arith.extf %4 : vector<128x128xbf16> to vector<128x128xf32>
    %cst_5 = arith.constant dense<0.000000e+00> : vector<128xf32>
    %7 = vector.multi_reduction <add>, %6, %cst_5 [0] : vector<128x128xf32> to vector<128xf32>
    %8 = vector.shape_cast %7 : vector<128xf32> to vector<1x128xf32>
    %c0_6 = arith.constant 0 : index
    %c0_7 = arith.constant 0 : index
    %c0_8 = arith.constant 0 : index
    %9 = vector.load %arg4[%c0_6, %c0_7, %c0_8] : memref<1x2x128xf32, #tpu.memory_space<vmem>>, vector<1x1x128xf32>
    %10 = vector.shape_cast %9 : vector<1x1x128xf32> to vector<1x128xf32>
    %11 = vector.shape_cast %8 : vector<1x128xf32> to vector<1x1x128xf32>
    tpu.vector_store %arg4[%c0_6, %c0_7, %c0_8], %11 {strides = array<i32>} : memref<1x2x128xf32, #tpu.memory_space<vmem>>, vector<1x1x128xf32>,
    %12 = arith.mulf %6, %6 : vector<128x128xf32>
    %cst_9 = arith.constant dense<0.000000e+00> : vector<128xf32>
    %13 = vector.multi_reduction <add>, %12, %cst_9 [0] : vector<128x128xf32> to vector<128xf32>
    %14 = vector.shape_cast %13 : vector<128xf32> to vector<1x128xf32>
    %c0_10 = arith.constant 0 : index
    %c1 = arith.constant 1 : index
    %c0_11 = arith.constant 0 : index
    %15 = vector.load %arg4[%c0_10, %c1, %c0_11] : memref<1x2x128xf32, #tpu.memory_space<vmem>>, vector<1x1x128xf32>
    %16 = vector.shape_cast %15 : vector<1x1x128xf32> to vector<1x128xf32>
    %17 = vector.shape_cast %14 : vector<1x128xf32> to vector<1x1x128xf32>
    tpu.vector_store %arg4[%c0_10, %c1, %c0_11], %17 {strides = array<i32>} : memref<1x2x128xf32, #tpu.memory_space<vmem>>, vector<1x1x128xf32>,
    return
  }
  func.func @transform_0(%arg0: i32) -> (i32, i32) {
    %c0_i32 = arith.constant 0 : i32
    %c0_i32_0 = arith.constant 0 : i32
    return %arg0, %c0_i32 : i32, i32
  }
  func.func @transform_1(%arg0: i32) -> (i32, i32) {
    %c0_i32 = arith.constant 0 : i32
    %c0_i32_0 = arith.constant 0 : i32
    %c0_i32_1 = arith.constant 0 : i32
    return %c0_i32, %c0_i32_0 : i32, i32
  }
  func.func @transform_2(%arg0: i32) -> (i32, i32) {
    %c0_i32 = arith.constant 0 : i32
    %c0_i32_0 = arith.constant 0 : i32
    return %arg0, %c0_i32 : i32, i32
  }
  func.func @transform_3(%arg0: i32) -> (i32, i32, i32) {
    %c0_i32 = arith.constant 0 : i32
    %c0_i32_0 = arith.constant 0 : i32
    %c0_i32_1 = arith.constant 0 : i32
    return %arg0, %c0_i32, %c0_i32_0 : i32, i32, i32
  }
}

module attributes {stable_mosaic.version = 11 : i64} {
  func.func @_conv3x3_kernel(%arg0: i32, %arg1: i32, %arg2: memref<1x16x16x128xbf16, #tpu.memory_space<vmem>>, %arg3: memref<2x128xf32, #tpu.memory_space<vmem>>, %arg4: memref<1x128xf32, #tpu.memory_space<vmem>>, %arg5: memref<1x128xf32, #tpu.memory_space<vmem>>, %arg6: memref<1152x128xbf16, #tpu.memory_space<vmem>>, %arg7: memref<1x8x16x128xbf16, #tpu.memory_space<vmem>>, %arg8: memref<1x1x2x128xf32, #tpu.memory_space<vmem>>, %arg9: memref<18x18x128xbf16, #tpu.memory_space<vmem>>, %arg10: memref<128x1152xbf16, #tpu.memory_space<vmem>>) attributes {dimension_semantics = [#tpu.dimension_semantics<parallel>, #tpu.dimension_semantics<arbitrary>], iteration_bounds = array<i64: 2, 2>, scalar_prefetch = 0 : i64, scratch_operands = 2 : i64, tpu.core_type = #tpu.core_type<tc>, window_params = [{transform_indices = @transform_0, window_bounds = array<i64: 1, 16, 16, 128>}, {pipeline_mode = #tpu.pipeline_mode<synchronous>, transform_indices = @transform_1, window_bounds = array<i64: 2, 128>}, {pipeline_mode = #tpu.pipeline_mode<synchronous>, transform_indices = @transform_2, window_bounds = array<i64: 1, 128>}, {pipeline_mode = #tpu.pipeline_mode<synchronous>, transform_indices = @transform_3, window_bounds = array<i64: 1, 128>}, {pipeline_mode = #tpu.pipeline_mode<synchronous>, transform_indices = @transform_4, window_bounds = array<i64: 1152, 128>}, {transform_indices = @transform_5, window_bounds = array<i64: 1, 8, 16, 128>}, {transform_indices = @transform_6, window_bounds = array<i64: 1, 1, 2, 128>}]} {
    %c0_i32 = arith.constant 0 : i32
    %0 = arith.cmpi eq, %arg1, %c0_i32 : i32
    %1 = arith.extui %0 : i1 to i32
    %c0_i32_0 = arith.constant 0 : i32
    %2 = arith.cmpi ne, %1, %c0_i32_0 : i32
    scf.if %2 {
      %c0_51 = arith.constant 0 : index
      %c0_52 = arith.constant 0 : index
      %68 = vector.load %arg3[%c0_51, %c0_52] : memref<2x128xf32, #tpu.memory_space<vmem>>, vector<1x128xf32>
      %cst_53 = arith.constant 0.001953125 : f32
      %69 = vector.broadcast %cst_53 : f32 to vector<1x128xf32>
      %70 = arith.mulf %68, %69 : vector<1x128xf32>
      %71 = vector.shape_cast %70 : vector<1x128xf32> to vector<1x1x128xf32>
      %c1_54 = arith.constant 1 : index
      %c0_55 = arith.constant 0 : index
      %72 = vector.load %arg3[%c1_54, %c0_55] : memref<2x128xf32, #tpu.memory_space<vmem>>, vector<1x128xf32>
      %cst_56 = arith.constant 0.001953125 : f32
      %73 = vector.broadcast %cst_56 : f32 to vector<1x128xf32>
      %74 = arith.mulf %72, %73 : vector<1x128xf32>
      %75 = vector.shape_cast %74 : vector<1x128xf32> to vector<1x1x128xf32>
      %76 = arith.mulf %71, %71 : vector<1x1x128xf32>
      %77 = arith.subf %75, %76 : vector<1x1x128xf32>
      %cst_57 = arith.constant 0.000000e+00 : f32
      %78 = vector.broadcast %cst_57 : f32 to vector<1x1x128xf32>
      %79 = arith.maximumf %77, %78 : vector<1x1x128xf32>
      %cst_58 = arith.constant 9.99999974E-6 : f32
      %80 = vector.broadcast %cst_58 : f32 to vector<1x1x128xf32>
      %81 = arith.addf %79, %80 : vector<1x1x128xf32>
      %82 = math.rsqrt %81 : vector<1x1x128xf32>
      %c0_59 = arith.constant 0 : index
      %c0_60 = arith.constant 0 : index
      %83 = vector.load %arg4[%c0_59, %c0_60] : memref<1x128xf32, #tpu.memory_space<vmem>>, vector<1x128xf32>
      %84 = vector.shape_cast %83 : vector<1x128xf32> to vector<1x1x128xf32>
      %85 = arith.mulf %82, %84 : vector<1x1x128xf32>
      %c0_61 = arith.constant 0 : index
      %c0_62 = arith.constant 0 : index
      %86 = vector.load %arg5[%c0_61, %c0_62] : memref<1x128xf32, #tpu.memory_space<vmem>>, vector<1x128xf32>
      %87 = vector.shape_cast %86 : vector<1x128xf32> to vector<1x1x128xf32>
      %88 = arith.mulf %71, %85 : vector<1x1x128xf32>
      %89 = arith.subf %87, %88 : vector<1x1x128xf32>
      %cst_63 = arith.constant 0.000000e+00 : bf16
      %90 = vector.broadcast %cst_63 : bf16 to vector<18x18x128xbf16>
      %c0_64 = arith.constant 0 : index
      %c0_65 = arith.constant 0 : index
      %c0_66 = arith.constant 0 : index
      %91 = vector.load %arg9[%c0_64, %c0_65, %c0_66] : memref<18x18x128xbf16, #tpu.memory_space<vmem>>, vector<18x18x128xbf16>
      tpu.vector_store %arg9[%c0_64, %c0_65, %c0_66], %90 {strides = array<i32>} : memref<18x18x128xbf16, #tpu.memory_space<vmem>>, vector<18x18x128xbf16>,
      %c0_67 = arith.constant 0 : index
      %c0_68 = arith.constant 0 : index
      %c0_69 = arith.constant 0 : index
      %c0_70 = arith.constant 0 : index
      %92 = vector.load %arg2[%c0_67, %c0_68, %c0_69, %c0_70] : memref<1x16x16x128xbf16, #tpu.memory_space<vmem>>, vector<1x8x16x128xbf16>
      %93 = vector.shape_cast %92 : vector<1x8x16x128xbf16> to vector<8x16x128xbf16>
      %94 = arith.extf %93 : vector<8x16x128xbf16> to vector<8x16x128xf32>
      %95 = vector.broadcast %85 : vector<1x1x128xf32> to vector<8x16x128xf32>
      %96 = arith.mulf %94, %95 : vector<8x16x128xf32>
      %97 = vector.broadcast %89 : vector<1x1x128xf32> to vector<8x16x128xf32>
      %98 = arith.addf %96, %97 : vector<8x16x128xf32>
      %cst_71 = arith.constant 0.000000e+00 : f32
      %99 = vector.broadcast %cst_71 : f32 to vector<8x16x128xf32>
      %100 = arith.maximumf %98, %99 : vector<8x16x128xf32>
      %101 = arith.truncf %100 : vector<8x16x128xf32> to vector<8x16x128xbf16>
      %c1_72 = arith.constant 1 : index
      %c1_73 = arith.constant 1 : index
      %c0_74 = arith.constant 0 : index
      %102 = vector.load %arg9[%c1_72, %c1_73, %c0_74] : memref<18x18x128xbf16, #tpu.memory_space<vmem>>, vector<8x16x128xbf16>
      tpu.vector_store %arg9[%c1_72, %c1_73, %c0_74], %101 {strides = array<i32>} : memref<18x18x128xbf16, #tpu.memory_space<vmem>>, vector<8x16x128xbf16>,
      %c0_75 = arith.constant 0 : index
      %c8 = arith.constant 8 : index
      %c0_76 = arith.constant 0 : index
      %c0_77 = arith.constant 0 : index
      %103 = vector.load %arg2[%c0_75, %c8, %c0_76, %c0_77] : memref<1x16x16x128xbf16, #tpu.memory_space<vmem>>, vector<1x8x16x128xbf16>
      %104 = vector.shape_cast %103 : vector<1x8x16x128xbf16> to vector<8x16x128xbf16>
      %105 = arith.extf %104 : vector<8x16x128xbf16> to vector<8x16x128xf32>
      %106 = vector.broadcast %85 : vector<1x1x128xf32> to vector<8x16x128xf32>
      %107 = arith.mulf %105, %106 : vector<8x16x128xf32>
      %108 = vector.broadcast %89 : vector<1x1x128xf32> to vector<8x16x128xf32>
      %109 = arith.addf %107, %108 : vector<8x16x128xf32>
      %cst_78 = arith.constant 0.000000e+00 : f32
      %110 = vector.broadcast %cst_78 : f32 to vector<8x16x128xf32>
      %111 = arith.maximumf %109, %110 : vector<8x16x128xf32>
      %112 = arith.truncf %111 : vector<8x16x128xf32> to vector<8x16x128xbf16>
      %c9 = arith.constant 9 : index
      %c1_79 = arith.constant 1 : index
      %c0_80 = arith.constant 0 : index
      %113 = vector.load %arg9[%c9, %c1_79, %c0_80] : memref<18x18x128xbf16, #tpu.memory_space<vmem>>, vector<8x16x128xbf16>
      tpu.vector_store %arg9[%c9, %c1_79, %c0_80], %112 {strides = array<i32>} : memref<18x18x128xbf16, #tpu.memory_space<vmem>>, vector<8x16x128xbf16>,
    } else {
    }
    %c8_i32 = arith.constant 8 : i32
    %3 = arith.muli %arg1, %c8_i32 : i32
    %4 = tpu.assume_multiple %3, 8 : i32
    %c0_i32_1 = arith.constant 0 : i32
    %5 = arith.addi %4, %c0_i32_1 : i32
    %6 = arith.index_cast %5 : i32 to index
    %c0 = arith.constant 0 : index
    %c0_2 = arith.constant 0 : index
    %7 = vector.load %arg9[%6, %c0, %c0_2] : memref<18x18x128xbf16, #tpu.memory_space<vmem>>, vector<8x16x128xbf16>
    %8 = vector.shape_cast %7 : vector<8x16x128xbf16> to vector<128x128xbf16>
    %c0_3 = arith.constant 0 : index
    %c0_4 = arith.constant 0 : index
    %9 = vector.load %arg10[%c0_3, %c0_4] : memref<128x1152xbf16, #tpu.memory_space<vmem>>, vector<128x128xbf16>
    tpu.vector_store %arg10[%c0_3, %c0_4], %8 {strides = array<i32>} : memref<128x1152xbf16, #tpu.memory_space<vmem>>, vector<128x128xbf16>,
    %c0_i32_5 = arith.constant 0 : i32
    %10 = arith.addi %4, %c0_i32_5 : i32
    %11 = arith.index_cast %10 : i32 to index
    %c1 = arith.constant 1 : index
    %c0_6 = arith.constant 0 : index
    %12 = vector.load %arg9[%11, %c1, %c0_6] : memref<18x18x128xbf16, #tpu.memory_space<vmem>>, vector<8x16x128xbf16>
    %13 = vector.shape_cast %12 : vector<8x16x128xbf16> to vector<128x128xbf16>
    %c0_7 = arith.constant 0 : index
    %c128 = arith.constant 128 : index
    %14 = vector.load %arg10[%c0_7, %c128] : memref<128x1152xbf16, #tpu.memory_space<vmem>>, vector<128x128xbf16>
    tpu.vector_store %arg10[%c0_7, %c128], %13 {strides = array<i32>} : memref<128x1152xbf16, #tpu.memory_space<vmem>>, vector<128x128xbf16>,
    %c0_i32_8 = arith.constant 0 : i32
    %15 = arith.addi %4, %c0_i32_8 : i32
    %16 = arith.index_cast %15 : i32 to index
    %c2 = arith.constant 2 : index
    %c0_9 = arith.constant 0 : index
    %17 = vector.load %arg9[%16, %c2, %c0_9] : memref<18x18x128xbf16, #tpu.memory_space<vmem>>, vector<8x16x128xbf16>
    %18 = vector.shape_cast %17 : vector<8x16x128xbf16> to vector<128x128xbf16>
    %c0_10 = arith.constant 0 : index
    %c256 = arith.constant 256 : index
    %19 = vector.load %arg10[%c0_10, %c256] : memref<128x1152xbf16, #tpu.memory_space<vmem>>, vector<128x128xbf16>
    tpu.vector_store %arg10[%c0_10, %c256], %18 {strides = array<i32>} : memref<128x1152xbf16, #tpu.memory_space<vmem>>, vector<128x128xbf16>,
    %c1_i32 = arith.constant 1 : i32
    %20 = arith.addi %4, %c1_i32 : i32
    %21 = arith.index_cast %20 : i32 to index
    %c0_11 = arith.constant 0 : index
    %c0_12 = arith.constant 0 : index
    %22 = vector.load %arg9[%21, %c0_11, %c0_12] : memref<18x18x128xbf16, #tpu.memory_space<vmem>>, vector<8x16x128xbf16>
    %23 = vector.shape_cast %22 : vector<8x16x128xbf16> to vector<128x128xbf16>
    %c0_13 = arith.constant 0 : index
    %c384 = arith.constant 384 : index
    %24 = vector.load %arg10[%c0_13, %c384] : memref<128x1152xbf16, #tpu.memory_space<vmem>>, vector<128x128xbf16>
    tpu.vector_store %arg10[%c0_13, %c384], %23 {strides = array<i32>} : memref<128x1152xbf16, #tpu.memory_space<vmem>>, vector<128x128xbf16>,
    %c1_i32_14 = arith.constant 1 : i32
    %25 = arith.addi %4, %c1_i32_14 : i32
    %26 = arith.index_cast %25 : i32 to index
    %c1_15 = arith.constant 1 : index
    %c0_16 = arith.constant 0 : index
    %27 = vector.load %arg9[%26, %c1_15, %c0_16] : memref<18x18x128xbf16, #tpu.memory_space<vmem>>, vector<8x16x128xbf16>
    %28 = vector.shape_cast %27 : vector<8x16x128xbf16> to vector<128x128xbf16>
    %c0_17 = arith.constant 0 : index
    %c512 = arith.constant 512 : index
    %29 = vector.load %arg10[%c0_17, %c512] : memref<128x1152xbf16, #tpu.memory_space<vmem>>, vector<128x128xbf16>
    tpu.vector_store %arg10[%c0_17, %c512], %28 {strides = array<i32>} : memref<128x1152xbf16, #tpu.memory_space<vmem>>, vector<128x128xbf16>,
    %c1_i32_18 = arith.constant 1 : i32
    %30 = arith.addi %4, %c1_i32_18 : i32
    %31 = arith.index_cast %30 : i32 to index
    %c2_19 = arith.constant 2 : index
    %c0_20 = arith.constant 0 : index
    %32 = vector.load %arg9[%31, %c2_19, %c0_20] : memref<18x18x128xbf16, #tpu.memory_space<vmem>>, vector<8x16x128xbf16>
    %33 = vector.shape_cast %32 : vector<8x16x128xbf16> to vector<128x128xbf16>
    %c0_21 = arith.constant 0 : index
    %c640 = arith.constant 640 : index
    %34 = vector.load %arg10[%c0_21, %c640] : memref<128x1152xbf16, #tpu.memory_space<vmem>>, vector<128x128xbf16>
    tpu.vector_store %arg10[%c0_21, %c640], %33 {strides = array<i32>} : memref<128x1152xbf16, #tpu.memory_space<vmem>>, vector<128x128xbf16>,
    %c2_i32 = arith.constant 2 : i32
    %35 = arith.addi %4, %c2_i32 : i32
    %36 = arith.index_cast %35 : i32 to index
    %c0_22 = arith.constant 0 : index
    %c0_23 = arith.constant 0 : index
    %37 = vector.load %arg9[%36, %c0_22, %c0_23] : memref<18x18x128xbf16, #tpu.memory_space<vmem>>, vector<8x16x128xbf16>
    %38 = vector.shape_cast %37 : vector<8x16x128xbf16> to vector<128x128xbf16>
    %c0_24 = arith.constant 0 : index
    %c768 = arith.constant 768 : index
    %39 = vector.load %arg10[%c0_24, %c768] : memref<128x1152xbf16, #tpu.memory_space<vmem>>, vector<128x128xbf16>
    tpu.vector_store %arg10[%c0_24, %c768], %38 {strides = array<i32>} : memref<128x1152xbf16, #tpu.memory_space<vmem>>, vector<128x128xbf16>,
    %c2_i32_25 = arith.constant 2 : i32
    %40 = arith.addi %4, %c2_i32_25 : i32
    %41 = arith.index_cast %40 : i32 to index
    %c1_26 = arith.constant 1 : index
    %c0_27 = arith.constant 0 : index
    %42 = vector.load %arg9[%41, %c1_26, %c0_27] : memref<18x18x128xbf16, #tpu.memory_space<vmem>>, vector<8x16x128xbf16>
    %43 = vector.shape_cast %42 : vector<8x16x128xbf16> to vector<128x128xbf16>
    %c0_28 = arith.constant 0 : index
    %c896 = arith.constant 896 : index
    %44 = vector.load %arg10[%c0_28, %c896] : memref<128x1152xbf16, #tpu.memory_space<vmem>>, vector<128x128xbf16>
    tpu.vector_store %arg10[%c0_28, %c896], %43 {strides = array<i32>} : memref<128x1152xbf16, #tpu.memory_space<vmem>>, vector<128x128xbf16>,
    %c2_i32_29 = arith.constant 2 : i32
    %45 = arith.addi %4, %c2_i32_29 : i32
    %46 = arith.index_cast %45 : i32 to index
    %c2_30 = arith.constant 2 : index
    %c0_31 = arith.constant 0 : index
    %47 = vector.load %arg9[%46, %c2_30, %c0_31] : memref<18x18x128xbf16, #tpu.memory_space<vmem>>, vector<8x16x128xbf16>
    %48 = vector.shape_cast %47 : vector<8x16x128xbf16> to vector<128x128xbf16>
    %c0_32 = arith.constant 0 : index
    %c1024 = arith.constant 1024 : index
    %49 = vector.load %arg10[%c0_32, %c1024] : memref<128x1152xbf16, #tpu.memory_space<vmem>>, vector<128x128xbf16>
    tpu.vector_store %arg10[%c0_32, %c1024], %48 {strides = array<i32>} : memref<128x1152xbf16, #tpu.memory_space<vmem>>, vector<128x128xbf16>,
    %c0_33 = arith.constant 0 : index
    %c0_34 = arith.constant 0 : index
    %50 = vector.load %arg10[%c0_33, %c0_34] : memref<128x1152xbf16, #tpu.memory_space<vmem>>, vector<128x1152xbf16>
    %c0_35 = arith.constant 0 : index
    %c0_36 = arith.constant 0 : index
    %51 = vector.load %arg6[%c0_35, %c0_36] : memref<1152x128xbf16, #tpu.memory_space<vmem>>, vector<1152x128xbf16>
    %cst = arith.constant dense<0.000000e+00> : vector<128x128xf32>
    %52 = tpu.matmul %50, %51, %cst {dimension_numbers = #tpu.dot_dimension_numbers<[1], [0], [0], [1], [0, 0, 1, 1], [], []>} : vector<128x1152xbf16>, vector<1152x128xbf16>, vector<128x128xf32> -> vector<128x128xf32>
    %53 = arith.truncf %52 : vector<128x128xf32> to vector<128x128xbf16>
    %54 = vector.shape_cast %53 : vector<128x128xbf16> to vector<1x8x16x128xbf16>
    %c0_37 = arith.constant 0 : index
    %c0_38 = arith.constant 0 : index
    %c0_39 = arith.constant 0 : index
    %c0_40 = arith.constant 0 : index
    %55 = vector.load %arg7[%c0_37, %c0_38, %c0_39, %c0_40] : memref<1x8x16x128xbf16, #tpu.memory_space<vmem>>, vector<1x8x16x128xbf16>
    tpu.vector_store %arg7[%c0_37, %c0_38, %c0_39, %c0_40], %54 {strides = array<i32>} : memref<1x8x16x128xbf16, #tpu.memory_space<vmem>>, vector<1x8x16x128xbf16>,
    %56 = arith.extf %53 : vector<128x128xbf16> to vector<128x128xf32>
    %cst_41 = arith.constant dense<0.000000e+00> : vector<128xf32>
    %57 = vector.multi_reduction <add>, %56, %cst_41 [0] : vector<128x128xf32> to vector<128xf32>
    %58 = vector.shape_cast %57 : vector<128xf32> to vector<1x128xf32>
    %c0_42 = arith.constant 0 : index
    %c0_43 = arith.constant 0 : index
    %c0_44 = arith.constant 0 : index
    %c0_45 = arith.constant 0 : index
    %59 = vector.load %arg8[%c0_42, %c0_43, %c0_44, %c0_45] : memref<1x1x2x128xf32, #tpu.memory_space<vmem>>, vector<1x1x1x128xf32>
    %60 = vector.shape_cast %59 : vector<1x1x1x128xf32> to vector<1x128xf32>
    %61 = vector.shape_cast %58 : vector<1x128xf32> to vector<1x1x1x128xf32>
    tpu.vector_store %arg8[%c0_42, %c0_43, %c0_44, %c0_45], %61 {strides = array<i32>} : memref<1x1x2x128xf32, #tpu.memory_space<vmem>>, vector<1x1x1x128xf32>,
    %62 = arith.mulf %56, %56 : vector<128x128xf32>
    %cst_46 = arith.constant dense<0.000000e+00> : vector<128xf32>
    %63 = vector.multi_reduction <add>, %62, %cst_46 [0] : vector<128x128xf32> to vector<128xf32>
    %64 = vector.shape_cast %63 : vector<128xf32> to vector<1x128xf32>
    %c0_47 = arith.constant 0 : index
    %c0_48 = arith.constant 0 : index
    %c1_49 = arith.constant 1 : index
    %c0_50 = arith.constant 0 : index
    %65 = vector.load %arg8[%c0_47, %c0_48, %c1_49, %c0_50] : memref<1x1x2x128xf32, #tpu.memory_space<vmem>>, vector<1x1x1x128xf32>
    %66 = vector.shape_cast %65 : vector<1x1x1x128xf32> to vector<1x128xf32>
    %67 = vector.shape_cast %64 : vector<1x128xf32> to vector<1x1x1x128xf32>
    tpu.vector_store %arg8[%c0_47, %c0_48, %c1_49, %c0_50], %67 {strides = array<i32>} : memref<1x1x2x128xf32, #tpu.memory_space<vmem>>, vector<1x1x1x128xf32>,
    return
  }
  func.func @transform_0(%arg0: i32, %arg1: i32) -> (i32, i32, i32, i32) {
    %c0_i32 = arith.constant 0 : i32
    %c0_i32_0 = arith.constant 0 : i32
    %c0_i32_1 = arith.constant 0 : i32
    %c0_i32_2 = arith.constant 0 : i32
    return %arg0, %c0_i32, %c0_i32_0, %c0_i32_1 : i32, i32, i32, i32
  }
  func.func @transform_1(%arg0: i32, %arg1: i32) -> (i32, i32) {
    %c0_i32 = arith.constant 0 : i32
    %c0_i32_0 = arith.constant 0 : i32
    %c0_i32_1 = arith.constant 0 : i32
    return %c0_i32, %c0_i32_0 : i32, i32
  }
  func.func @transform_2(%arg0: i32, %arg1: i32) -> (i32, i32) {
    %c0_i32 = arith.constant 0 : i32
    %c0_i32_0 = arith.constant 0 : i32
    %c0_i32_1 = arith.constant 0 : i32
    return %c0_i32, %c0_i32_0 : i32, i32
  }
  func.func @transform_3(%arg0: i32, %arg1: i32) -> (i32, i32) {
    %c0_i32 = arith.constant 0 : i32
    %c0_i32_0 = arith.constant 0 : i32
    %c0_i32_1 = arith.constant 0 : i32
    return %c0_i32, %c0_i32_0 : i32, i32
  }
  func.func @transform_4(%arg0: i32, %arg1: i32) -> (i32, i32) {
    %c0_i32 = arith.constant 0 : i32
    %c0_i32_0 = arith.constant 0 : i32
    %c0_i32_1 = arith.constant 0 : i32
    return %c0_i32, %c0_i32_0 : i32, i32
  }
  func.func @transform_5(%arg0: i32, %arg1: i32) -> (i32, i32, i32, i32) {
    %c0_i32 = arith.constant 0 : i32
    %c0_i32_0 = arith.constant 0 : i32
    %c0_i32_1 = arith.constant 0 : i32
    return %arg0, %arg1, %c0_i32, %c0_i32_0 : i32, i32, i32, i32
  }
  func.func @transform_6(%arg0: i32, %arg1: i32) -> (i32, i32, i32, i32) {
    %c0_i32 = arith.constant 0 : i32
    %c0_i32_0 = arith.constant 0 : i32
    %c0_i32_1 = arith.constant 0 : i32
    return %arg0, %arg1, %c0_i32, %c0_i32_0 : i32, i32, i32, i32
  }
}

module attributes {stable_mosaic.version = 11 : i64} {
  func.func @_conv3_kernel(%arg0: i32, %arg1: memref<128x128xbf16, #tpu.memory_space<vmem>>, %arg2: memref<2x128xf32, #tpu.memory_space<vmem>>, %arg3: memref<1x128xf32, #tpu.memory_space<vmem>>, %arg4: memref<1x128xf32, #tpu.memory_space<vmem>>, %arg5: memref<128x32xbf16, #tpu.memory_space<vmem>>, %arg6: memref<128x32xbf16, #tpu.memory_space<vmem>>, %arg7: memref<1x2x32xf32, #tpu.memory_space<vmem>>) attributes {dimension_semantics = [#tpu.dimension_semantics<parallel>], iteration_bounds = array<i64: 4>, scalar_prefetch = 0 : i64, scratch_operands = 0 : i64, tpu.core_type = #tpu.core_type<tc>, window_params = [{transform_indices = @transform_0, window_bounds = array<i64: 128, 128>}, {pipeline_mode = #tpu.pipeline_mode<synchronous>, transform_indices = @transform_1, window_bounds = array<i64: 2, 128>}, {pipeline_mode = #tpu.pipeline_mode<synchronous>, transform_indices = @transform_2, window_bounds = array<i64: 1, 128>}, {pipeline_mode = #tpu.pipeline_mode<synchronous>, transform_indices = @transform_3, window_bounds = array<i64: 1, 128>}, {pipeline_mode = #tpu.pipeline_mode<synchronous>, transform_indices = @transform_4, window_bounds = array<i64: 128, 32>}, {transform_indices = @transform_5, window_bounds = array<i64: 128, 32>}, {transform_indices = @transform_6, window_bounds = array<i64: 1, 2, 32>}]} {
    %c0 = arith.constant 0 : index
    %c0_0 = arith.constant 0 : index
    %0 = vector.load %arg2[%c0, %c0_0] : memref<2x128xf32, #tpu.memory_space<vmem>>, vector<1x128xf32>
    %cst = arith.constant 0.001953125 : f32
    %1 = vector.broadcast %cst : f32 to vector<1x128xf32>
    %2 = arith.mulf %0, %1 : vector<1x128xf32>
    %c1 = arith.constant 1 : index
    %c0_1 = arith.constant 0 : index
    %3 = vector.load %arg2[%c1, %c0_1] : memref<2x128xf32, #tpu.memory_space<vmem>>, vector<1x128xf32>
    %cst_2 = arith.constant 0.001953125 : f32
    %4 = vector.broadcast %cst_2 : f32 to vector<1x128xf32>
    %5 = arith.mulf %3, %4 : vector<1x128xf32>
    %6 = arith.mulf %2, %2 : vector<1x128xf32>
    %7 = arith.subf %5, %6 : vector<1x128xf32>
    %cst_3 = arith.constant 0.000000e+00 : f32
    %8 = vector.broadcast %cst_3 : f32 to vector<1x128xf32>
    %9 = arith.maximumf %7, %8 : vector<1x128xf32>
    %cst_4 = arith.constant 9.99999974E-6 : f32
    %10 = vector.broadcast %cst_4 : f32 to vector<1x128xf32>
    %11 = arith.addf %9, %10 : vector<1x128xf32>
    %12 = math.rsqrt %11 : vector<1x128xf32>
    %c0_5 = arith.constant 0 : index
    %c0_6 = arith.constant 0 : index
    %13 = vector.load %arg3[%c0_5, %c0_6] : memref<1x128xf32, #tpu.memory_space<vmem>>, vector<1x128xf32>
    %14 = arith.mulf %12, %13 : vector<1x128xf32>
    %c0_7 = arith.constant 0 : index
    %c0_8 = arith.constant 0 : index
    %15 = vector.load %arg1[%c0_7, %c0_8] : memref<128x128xbf16, #tpu.memory_space<vmem>>, vector<128x128xbf16>
    %16 = arith.extf %15 : vector<128x128xbf16> to vector<128x128xf32>
    %17 = vector.broadcast %14 : vector<1x128xf32> to vector<128x128xf32>
    %18 = arith.mulf %16, %17 : vector<128x128xf32>
    %c0_9 = arith.constant 0 : index
    %c0_10 = arith.constant 0 : index
    %19 = vector.load %arg4[%c0_9, %c0_10] : memref<1x128xf32, #tpu.memory_space<vmem>>, vector<1x128xf32>
    %20 = arith.mulf %2, %14 : vector<1x128xf32>
    %21 = arith.subf %19, %20 : vector<1x128xf32>
    %22 = vector.broadcast %21 : vector<1x128xf32> to vector<128x128xf32>
    %23 = arith.addf %18, %22 : vector<128x128xf32>
    %cst_11 = arith.constant 0.000000e+00 : f32
    %24 = vector.broadcast %cst_11 : f32 to vector<128x128xf32>
    %25 = arith.maximumf %23, %24 : vector<128x128xf32>
    %26 = arith.truncf %25 : vector<128x128xf32> to vector<128x128xbf16>
    %c0_12 = arith.constant 0 : index
    %c0_13 = arith.constant 0 : index
    %27 = vector.load %arg5[%c0_12, %c0_13] : memref<128x32xbf16, #tpu.memory_space<vmem>>, vector<128x32xbf16>
    %cst_14 = arith.constant dense<0.000000e+00> : vector<128x32xf32>
    %28 = tpu.matmul %26, %27, %cst_14 {dimension_numbers = #tpu.dot_dimension_numbers<[1], [0], [0], [1], [0, 0, 1, 1], [], []>} : vector<128x128xbf16>, vector<128x32xbf16>, vector<128x32xf32> -> vector<128x32xf32>
    %29 = arith.truncf %28 : vector<128x32xf32> to vector<128x32xbf16>
    %c0_15 = arith.constant 0 : index
    %c0_16 = arith.constant 0 : index
    %30 = vector.load %arg6[%c0_15, %c0_16] : memref<128x32xbf16, #tpu.memory_space<vmem>>, vector<128x32xbf16>
    tpu.vector_store %arg6[%c0_15, %c0_16], %29 {strides = array<i32>} : memref<128x32xbf16, #tpu.memory_space<vmem>>, vector<128x32xbf16>,
    %31 = arith.extf %29 : vector<128x32xbf16> to vector<128x32xf32>
    %cst_17 = arith.constant dense<0.000000e+00> : vector<32xf32>
    %32 = vector.multi_reduction <add>, %31, %cst_17 [0] : vector<128x32xf32> to vector<32xf32>
    %33 = vector.shape_cast %32 : vector<32xf32> to vector<1x32xf32>
    %c0_18 = arith.constant 0 : index
    %c0_19 = arith.constant 0 : index
    %c0_20 = arith.constant 0 : index
    %34 = vector.load %arg7[%c0_18, %c0_19, %c0_20] : memref<1x2x32xf32, #tpu.memory_space<vmem>>, vector<1x1x32xf32>
    %35 = vector.shape_cast %34 : vector<1x1x32xf32> to vector<1x32xf32>
    %36 = vector.shape_cast %33 : vector<1x32xf32> to vector<1x1x32xf32>
    tpu.vector_store %arg7[%c0_18, %c0_19, %c0_20], %36 {strides = array<i32>} : memref<1x2x32xf32, #tpu.memory_space<vmem>>, vector<1x1x32xf32>,
    %37 = arith.mulf %31, %31 : vector<128x32xf32>
    %cst_21 = arith.constant dense<0.000000e+00> : vector<32xf32>
    %38 = vector.multi_reduction <add>, %37, %cst_21 [0] : vector<128x32xf32> to vector<32xf32>
    %39 = vector.shape_cast %38 : vector<32xf32> to vector<1x32xf32>
    %c0_22 = arith.constant 0 : index
    %c1_23 = arith.constant 1 : index
    %c0_24 = arith.constant 0 : index
    %40 = vector.load %arg7[%c0_22, %c1_23, %c0_24] : memref<1x2x32xf32, #tpu.memory_space<vmem>>, vector<1x1x32xf32>
    %41 = vector.shape_cast %40 : vector<1x1x32xf32> to vector<1x32xf32>
    %42 = vector.shape_cast %39 : vector<1x32xf32> to vector<1x1x32xf32>
    tpu.vector_store %arg7[%c0_22, %c1_23, %c0_24], %42 {strides = array<i32>} : memref<1x2x32xf32, #tpu.memory_space<vmem>>, vector<1x1x32xf32>,
    return
  }
  func.func @transform_0(%arg0: i32) -> (i32, i32) {
    %c0_i32 = arith.constant 0 : i32
    %c0_i32_0 = arith.constant 0 : i32
    return %arg0, %c0_i32 : i32, i32
  }
  func.func @transform_1(%arg0: i32) -> (i32, i32) {
    %c0_i32 = arith.constant 0 : i32
    %c0_i32_0 = arith.constant 0 : i32
    %c0_i32_1 = arith.constant 0 : i32
    return %c0_i32, %c0_i32_0 : i32, i32
  }
  func.func @transform_2(%arg0: i32) -> (i32, i32) {
    %c0_i32 = arith.constant 0 : i32
    %c0_i32_0 = arith.constant 0 : i32
    %c0_i32_1 = arith.constant 0 : i32
    return %c0_i32, %c0_i32_0 : i32, i32
  }
  func.func @transform_3(%arg0: i32) -> (i32, i32) {
    %c0_i32 = arith.constant 0 : i32
    %c0_i32_0 = arith.constant 0 : i32
    %c0_i32_1 = arith.constant 0 : i32
    return %c0_i32, %c0_i32_0 : i32, i32
  }
  func.func @transform_4(%arg0: i32) -> (i32, i32) {
    %c0_i32 = arith.constant 0 : i32
    %c0_i32_0 = arith.constant 0 : i32
    %c0_i32_1 = arith.constant 0 : i32
    return %c0_i32, %c0_i32_0 : i32, i32
  }
  func.func @transform_5(%arg0: i32) -> (i32, i32) {
    %c0_i32 = arith.constant 0 : i32
    %c0_i32_0 = arith.constant 0 : i32
    return %arg0, %c0_i32 : i32, i32
  }
  func.func @transform_6(%arg0: i32) -> (i32, i32, i32) {
    %c0_i32 = arith.constant 0 : i32
    %c0_i32_0 = arith.constant 0 : i32
    %c0_i32_1 = arith.constant 0 : i32
    return %arg0, %c0_i32, %c0_i32_0 : i32, i32, i32
  }
}

module attributes {stable_mosaic.version = 11 : i64} {
  func.func @_head_proj_kernel(%arg0: i32, %arg1: memref<128x32xbf16, #tpu.memory_space<vmem>>, %arg2: memref<2x32xf32, #tpu.memory_space<vmem>>, %arg3: memref<1x32xf32, #tpu.memory_space<vmem>>, %arg4: memref<1x32xf32, #tpu.memory_space<vmem>>, %arg5: memref<128x16xf32, #tpu.memory_space<vmem>>, %arg6: memref<16x32xbf16, #tpu.memory_space<vmem>>, %arg7: memref<1x32xf32, #tpu.memory_space<vmem>>, %arg8: memref<128x32xf32, #tpu.memory_space<vmem>>) attributes {dimension_semantics = [#tpu.dimension_semantics<parallel>], iteration_bounds = array<i64: 4>, scalar_prefetch = 0 : i64, scratch_operands = 0 : i64, tpu.core_type = #tpu.core_type<tc>, window_params = [{transform_indices = @transform_0, window_bounds = array<i64: 128, 32>}, {pipeline_mode = #tpu.pipeline_mode<synchronous>, transform_indices = @transform_1, window_bounds = array<i64: 2, 32>}, {pipeline_mode = #tpu.pipeline_mode<synchronous>, transform_indices = @transform_2, window_bounds = array<i64: 1, 32>}, {pipeline_mode = #tpu.pipeline_mode<synchronous>, transform_indices = @transform_3, window_bounds = array<i64: 1, 32>}, {transform_indices = @transform_4, window_bounds = array<i64: 128, 16>}, {pipeline_mode = #tpu.pipeline_mode<synchronous>, transform_indices = @transform_5, window_bounds = array<i64: 16, 32>}, {pipeline_mode = #tpu.pipeline_mode<synchronous>, transform_indices = @transform_6, window_bounds = array<i64: 1, 32>}, {transform_indices = @transform_7, window_bounds = array<i64: 128, 32>}]} {
    %c0 = arith.constant 0 : index
    %c0_0 = arith.constant 0 : index
    %0 = vector.load %arg2[%c0, %c0_0] : memref<2x32xf32, #tpu.memory_space<vmem>>, vector<1x32xf32>
    %cst = arith.constant 0.001953125 : f32
    %1 = vector.broadcast %cst : f32 to vector<1x32xf32>
    %2 = arith.mulf %0, %1 : vector<1x32xf32>
    %c1 = arith.constant 1 : index
    %c0_1 = arith.constant 0 : index
    %3 = vector.load %arg2[%c1, %c0_1] : memref<2x32xf32, #tpu.memory_space<vmem>>, vector<1x32xf32>
    %cst_2 = arith.constant 0.001953125 : f32
    %4 = vector.broadcast %cst_2 : f32 to vector<1x32xf32>
    %5 = arith.mulf %3, %4 : vector<1x32xf32>
    %6 = arith.mulf %2, %2 : vector<1x32xf32>
    %7 = arith.subf %5, %6 : vector<1x32xf32>
    %cst_3 = arith.constant 0.000000e+00 : f32
    %8 = vector.broadcast %cst_3 : f32 to vector<1x32xf32>
    %9 = arith.maximumf %7, %8 : vector<1x32xf32>
    %cst_4 = arith.constant 9.99999974E-6 : f32
    %10 = vector.broadcast %cst_4 : f32 to vector<1x32xf32>
    %11 = arith.addf %9, %10 : vector<1x32xf32>
    %12 = math.rsqrt %11 : vector<1x32xf32>
    %c0_5 = arith.constant 0 : index
    %c0_6 = arith.constant 0 : index
    %13 = vector.load %arg3[%c0_5, %c0_6] : memref<1x32xf32, #tpu.memory_space<vmem>>, vector<1x32xf32>
    %14 = arith.mulf %12, %13 : vector<1x32xf32>
    %c0_7 = arith.constant 0 : index
    %c0_8 = arith.constant 0 : index
    %15 = vector.load %arg1[%c0_7, %c0_8] : memref<128x32xbf16, #tpu.memory_space<vmem>>, vector<128x32xbf16>
    %16 = arith.extf %15 : vector<128x32xbf16> to vector<128x32xf32>
    %17 = vector.broadcast %14 : vector<1x32xf32> to vector<128x32xf32>
    %18 = arith.mulf %16, %17 : vector<128x32xf32>
    %c0_9 = arith.constant 0 : index
    %c0_10 = arith.constant 0 : index
    %19 = vector.load %arg4[%c0_9, %c0_10] : memref<1x32xf32, #tpu.memory_space<vmem>>, vector<1x32xf32>
    %20 = arith.mulf %2, %14 : vector<1x32xf32>
    %21 = arith.subf %19, %20 : vector<1x32xf32>
    %22 = vector.broadcast %21 : vector<1x32xf32> to vector<128x32xf32>
    %23 = arith.addf %18, %22 : vector<128x32xf32>
    %c0_11 = arith.constant 0 : index
    %c0_12 = arith.constant 0 : index
    %24 = vector.load %arg5[%c0_11, %c0_12] : memref<128x16xf32, #tpu.memory_space<vmem>>, vector<128x16xf32>
    %25 = arith.truncf %24 : vector<128x16xf32> to vector<128x16xbf16>
    %c0_13 = arith.constant 0 : index
    %c0_14 = arith.constant 0 : index
    %26 = vector.load %arg6[%c0_13, %c0_14] : memref<16x32xbf16, #tpu.memory_space<vmem>>, vector<16x32xbf16>
    %cst_15 = arith.constant dense<0.000000e+00> : vector<128x32xf32>
    %27 = tpu.matmul %25, %26, %cst_15 {dimension_numbers = #tpu.dot_dimension_numbers<[1], [0], [0], [1], [0, 0, 1, 1], [], []>} : vector<128x16xbf16>, vector<16x32xbf16>, vector<128x32xf32> -> vector<128x32xf32>
    %c0_16 = arith.constant 0 : index
    %c0_17 = arith.constant 0 : index
    %28 = vector.load %arg7[%c0_16, %c0_17] : memref<1x32xf32, #tpu.memory_space<vmem>>, vector<1x32xf32>
    %29 = vector.broadcast %28 : vector<1x32xf32> to vector<128x32xf32>
    %30 = arith.addf %27, %29 : vector<128x32xf32>
    %31 = arith.addf %23, %30 : vector<128x32xf32>
    %cst_18 = arith.constant 0.000000e+00 : f32
    %32 = vector.broadcast %cst_18 : f32 to vector<128x32xf32>
    %33 = arith.maximumf %31, %32 : vector<128x32xf32>
    %c0_19 = arith.constant 0 : index
    %c0_20 = arith.constant 0 : index
    %34 = vector.load %arg8[%c0_19, %c0_20] : memref<128x32xf32, #tpu.memory_space<vmem>>, vector<128x32xf32>
    tpu.vector_store %arg8[%c0_19, %c0_20], %33 {strides = array<i32>} : memref<128x32xf32, #tpu.memory_space<vmem>>, vector<128x32xf32>,
    return
  }
  func.func @transform_0(%arg0: i32) -> (i32, i32) {
    %c0_i32 = arith.constant 0 : i32
    %c0_i32_0 = arith.constant 0 : i32
    return %arg0, %c0_i32 : i32, i32
  }
  func.func @transform_1(%arg0: i32) -> (i32, i32) {
    %c0_i32 = arith.constant 0 : i32
    %c0_i32_0 = arith.constant 0 : i32
    %c0_i32_1 = arith.constant 0 : i32
    return %c0_i32, %c0_i32_0 : i32, i32
  }
  func.func @transform_2(%arg0: i32) -> (i32, i32) {
    %c0_i32 = arith.constant 0 : i32
    %c0_i32_0 = arith.constant 0 : i32
    %c0_i32_1 = arith.constant 0 : i32
    return %c0_i32, %c0_i32_0 : i32, i32
  }
  func.func @transform_3(%arg0: i32) -> (i32, i32) {
    %c0_i32 = arith.constant 0 : i32
    %c0_i32_0 = arith.constant 0 : i32
    %c0_i32_1 = arith.constant 0 : i32
    return %c0_i32, %c0_i32_0 : i32, i32
  }
  func.func @transform_4(%arg0: i32) -> (i32, i32) {
    %c0_i32 = arith.constant 0 : i32
    %c0_i32_0 = arith.constant 0 : i32
    return %arg0, %c0_i32 : i32, i32
  }
  func.func @transform_5(%arg0: i32) -> (i32, i32) {
    %c0_i32 = arith.constant 0 : i32
    %c0_i32_0 = arith.constant 0 : i32
    %c0_i32_1 = arith.constant 0 : i32
    return %c0_i32, %c0_i32_0 : i32, i32
  }
  func.func @transform_6(%arg0: i32) -> (i32, i32) {
    %c0_i32 = arith.constant 0 : i32
    %c0_i32_0 = arith.constant 0 : i32
    %c0_i32_1 = arith.constant 0 : i32
    return %c0_i32, %c0_i32_0 : i32, i32
  }
  func.func @transform_7(%arg0: i32) -> (i32, i32) {
    %c0_i32 = arith.constant 0 : i32
    %c0_i32_0 = arith.constant 0 : i32
    return %arg0, %c0_i32 : i32, i32
  }
}

</mosaic_0001>

<llo_original>
// kernel: residual50_forward.4
$region0: #{residual50_forward.4}
  #allocation0 [shape = 'u32[]', space=smem, size = 0x4, offset = 0x4, fixed_abs, tag = 'smem constant byte address 0x4 - core index']
  #allocation1 [shape = 'u32[144,128]{1,0:T(1,128)}', space=vmem, size = 0x12000, scoped, tag = 'internal scratch']
  %s0 = inlined_call_operand.hbm [shape: f32[512,16], index: 0, kind: input, shape index: {}]
  %s1 = inlined_call_operand.vmem [shape: bf16[16,128], index: 1, kind: input, shape index: {}]
  %s2 = inlined_call_operand.vmem [shape: bf16[512,128], index: 2, kind: output, shape index: {0}]
  %s3 = inlined_call_operand.vmem [shape: f32[4,2,128], index: 3, kind: output, shape index: {1}]
  %4 = xla_tuple %s2, %s3
  %s5 = sld [smem:[#allocation0]]
  $region53: #{residual50_forward.4} parent=0
    _
  %s7 = ssub.s32 1, %s5
  %s8 = scalar_select 0, %s7, %s5
  $region1: #{residual50_forward.4} parent=0
    #allocation2 [shape = 'u8[131072]{0}', space=vmem, size = 0x20000, scoped, tag = 'input window, operand 0']
    #allocation3 [shape = 's32[2]{0}', space=sflag, size = 0x8, scoped, tag = 'scoped memory for residual50_forward.4']
    %9 = vsyncpa [#allocation3], 0
    %s10 = scalar_lea.sflag [#allocation3], 1
    %11 = vsyncpa %s10, 0
    loop: start=0, step=1, limit=6
    $region2: #{residual50_forward.4} parent=1 // loop_pre_header
      _
    $region3: #{residual50_forward.4} parent=1 // loop_header
      %s13 = sphi 0, %s17
      %p14 = scmp.ge.s32.totalorder %s13, 6
      %s23 = sphi 0, %s25
      %s26 = sphi 0, %s23
      %s27 = sphi 0, %s26
      %s43 = sphi 0, %s27
      %s47 = sphi 0, %s47
      %s49 = sphi 0, %s47
      %s50 = sphi 0, %s49
      %s64 = sphi 0, %s50
      %s70 = sphi 0, %s72
      %s73 = sphi 0, %s70
      %s74 = sphi 0, %s73
      %s90 = sphi 0, %s74
      %s96 = sphi 0, %s98
      %s99 = sphi 0, %s96
      %s100 = sphi 0, %s99
      %s116 = sphi 0, %s100
    $region4: #{residual50_forward.4} parent=1 // loop_header_branch
      %16 = sbr.rel (%p14) target = $region8
    $region5: #{residual50_forward.4} parent=1 // loop_body
      %s18 = ssub.s32 %s13, 1
      %s19 = ssub.s32 %s13, 2
      %s20 = sadd.s32 %s13, 1
      %s21 = ssub.s32 %s13, %s20
      %p22 = scmp.eq.s32.totalorder %s21, 0
      %s24 = sadd.s32 %s23, 1
      %s25 = scalar_select %p22, %s23, %s24
      %p28 = pneg %p22
      %p29 = scmp.eq.s32.totalorder %s13, 3
      %p30 = por %p28, %p29
      %p31 = scmp.ne.s32.totalorder %s23, %s26
      %p32 = scmp.eq.s32.totalorder %s13, 0
      %p33 = por %p31, %p32
      %p34 = scmp.ne.s32.totalorder %s23, %s26
      %p35 = scmp.eq.s32.totalorder %s18, 3
      %p36 = por %p34, %p35
      %p37 = scmp.ne.s32.totalorder %s26, %s27
      %p38 = scmp.eq.s32.totalorder %s18, 0
      %p39 = por %p37, %p38
      %p40 = scmp.ne.s32.totalorder %s26, %s27
      %p41 = scmp.eq.s32.totalorder %s19, 3
      %p42 = por %p40, %p41
      %p44 = scmp.ne.s32.totalorder %s27, %s43
      %p45 = scmp.eq.s32.totalorder %s19, 0
      %p46 = por %p44, %p45
      %s48 = sadd.s32 %s47, 1
      %p51 = scmp.eq.s32.totalorder %s13, 3
      %p52 = scmp.ne.s32.totalorder %s47, %s49
      %p53 = scmp.eq.s32.totalorder %s13, 0
      %p54 = por %p52, %p53
      %p55 = scmp.ne.s32.totalorder %s47, %s49
      %p56 = scmp.eq.s32.totalorder %s18, 3
      %p57 = por %p55, %p56
      %p58 = scmp.ne.s32.totalorder %s49, %s50
      %p59 = scmp.eq.s32.totalorder %s18, 0
      %p60 = por %p58, %p59
      %p61 = scmp.ne.s32.totalorder %s49, %s50
      %p62 = scmp.eq.s32.totalorder %s19, 3
      %p63 = por %p61, %p62
      %p65 = scmp.ne.s32.totalorder %s50, %s64
      %p66 = scmp.eq.s32.totalorder %s19, 0
      %p67 = por %p65, %p66
      %s68 = ssub.s32 %s13, %s20
      %p69 = scmp.eq.s32.totalorder %s68, 0
      %s71 = sadd.s32 %s70, 1
      %s72 = scalar_select %p69, %s70, %s71
      %p75 = pneg %p69
      %p76 = scmp.eq.s32.totalorder %s13, 3
      %p77 = por %p75, %p76
      %p78 = scmp.ne.s32.totalorder %s70, %s73
      %p79 = scmp.eq.s32.totalorder %s13, 0
      %p80 = por %p78, %p79
      %p81 = scmp.ne.s32.totalorder %s70, %s73
      %p82 = scmp.eq.s32.totalorder %s18, 3
      %p83 = por %p81, %p82
      %p84 = scmp.ne.s32.totalorder %s73, %s74
      %p85 = scmp.eq.s32.totalorder %s18, 0
      %p86 = por %p84, %p85
      %p87 = scmp.ne.s32.totalorder %s73, %s74
      %p88 = scmp.eq.s32.totalorder %s19, 3
      %p89 = por %p87, %p88
      %p91 = scmp.ne.s32.totalorder %s74, %s90
      %p92 = scmp.eq.s32.totalorder %s19, 0
      %p93 = por %p91, %p92
      %s94 = ssub.s32 %s13, %s20
      %p95 = scmp.eq.s32.totalorder %s94, 0
      %s97 = sadd.s32 %s96, 1
      %s98 = scalar_select %p95, %s96, %s97
      %p101 = pneg %p95
      %p102 = scmp.eq.s32.totalorder %s13, 3
      %p103 = por %p101, %p102
      %p104 = scmp.ne.s32.totalorder %s96, %s99
      %p105 = scmp.eq.s32.totalorder %s13, 0
      %p106 = por %p104, %p105
      %p107 = scmp.ne.s32.totalorder %s96, %s99
      %p108 = scmp.eq.s32.totalorder %s18, 3
      %p109 = por %p107, %p108
      %p110 = scmp.ne.s32.totalorder %s99, %s100
      %p111 = scmp.eq.s32.totalorder %s18, 0
      %p112 = por %p110, %p111
      %p113 = scmp.ne.s32.totalorder %s99, %s100
      %p114 = scmp.eq.s32.totalorder %s19, 3
      %p115 = por %p113, %p114
      %p117 = scmp.ne.s32.totalorder %s100, %s116
      %p118 = scmp.eq.s32.totalorder %s19, 0
      %p119 = por %p117, %p118
      %p120 = scmp.le.s32.totalorder 1, %s13
      %p121 = scmp.lt.s32.totalorder %s13, 5
      %p122 = pnand %p120, %p121
      %p123 = pneg %p122
      // Predicated region
      $region9: #{residual50_forward.4} parent=5 // pred_check
        _
      $region10: #{residual50_forward.4} parent=5 // pred_check_branch
        %125 = sbr.rel (%p122) target = $region12
      $region11: #{residual50_forward.4} parent=5 // pred_region
        %s126 = ssub.s32 %s13, 1
        // Predicated region
        $region13: #{residual50_forward.4} parent=11 // pred_check
          %p127 = pneg %p60
        $region14: #{residual50_forward.4} parent=11 // pred_check_branch
          %129 = sbr.rel (%p127) target = $region16
        $region15: #{residual50_forward.4} parent=11 // pred_region
          _
        $region16: #{residual50_forward.4} parent=11 // pred_fallthru
          _
      $region12: #{residual50_forward.4} parent=5 // pred_fallthru
        _
      %p130 = scmp.lt.s32.totalorder %s13, 4
      // Predicated region
      $region17: #{residual50_forward.4} parent=5 // pred_check
        %p131 = pneg %p130
      $region18: #{residual50_forward.4} parent=5 // pred_check_branch
        %133 = sbr.rel (%p131) target = $region20
      $region19: #{residual50_forward.4} parent=5 // pred_region
        // Predicated region
        $region21: #{residual50_forward.4} parent=19 // pred_check
          %p134 = pneg %p33
        $region22: #{residual50_forward.4} parent=19 // pred_check_branch
          %136 = sbr.rel (%p134) target = $region24
        $region23: #{residual50_forward.4} parent=19 // pred_region
          %s137 = sand.u32 %s23, 1
          %s138 = scalar_lea.sflag [#allocation3], %s137
          %s139 = sand.u32 %s23, 1
          %s140 = smul.addr %s139, 128
          %s141 = scalar_lea.vmem [#allocation2], %s140
          %s142 = smul.u32 16, %s13
          %s144 = ssub.s32 2048, 2048
          %145 = vsyncadd %s138, %s144
          %s146 = smul.addr %s142, 128
          %s147 = scalar_lea.hbm %s0, %s146
          %s148 = sshll.u32 %s141, 4
          %s149 = int_to_ptr.vmem [resolvable:$true] %s148
          %154 = dma.hbm_to_vmem [thread:$0]  %s147, 2048, %s149, %s138, 128, 128, 8
        $region24: #{residual50_forward.4} parent=19 // pred_fallthru
          _
      $region20: #{residual50_forward.4} parent=5 // pred_fallthru
        _
      %p155 = scmp.le.s32.totalorder 1, %s13
      %p156 = scmp.lt.s32.totalorder %s13, 5
      %p157 = pnand %p155, %p156
      %p158 = pneg %p157
      // Predicated region
      $region25: #{residual50_forward.4} parent=5 // pred_check
        _
      $region26: #{residual50_forward.4} parent=5 // pred_check_branch
        %160 = sbr.rel (%p157) target = $region28
      $region27: #{residual50_forward.4} parent=5 // pred_region
        %s161 = ssub.s32 %s13, 1
        %s162 = sand.u32 %s26, 1
        %s163 = scalar_lea.sflag [#allocation3], %s162
        %s164 = sand.u32 %s26, 1
        %s165 = smul.addr %s164, 128
        %s166 = scalar_lea.vmem [#allocation2], %s165
        // Predicated region
        $region29: #{residual50_forward.4} parent=27 // pred_check
          %p167 = pneg %p39
        $region30: #{residual50_forward.4} parent=27 // pred_check_branch
          %169 = sbr.rel (%p167) target = $region32
        $region31: #{residual50_forward.4} parent=27 // pred_region
          %170 = dma.done %s163, 2048
        $region32: #{residual50_forward.4} parent=27 // pred_fallthru
          _
        %s171 = sand.u32 %s26, 1
        %s172 = scalar_lea.sflag [#allocation3], %s171
        %s173 = sand.u32 %s26, 1
        %s174 = smul.addr %s173, 128
        %s175 = scalar_lea.vmem [#allocation2], %s174
        %p176 = pneg %p39
        %p177 = pneg %p36
        %p178 = pneg %p60
        %p179 = pneg %p57
        %p180 = pneg %p86
        %p181 = pneg %p83
        %s182 = smul.u32 16, %s18
        %p183 = scmp.lt.s32.totalorder %s182, 63
        %s184 = scalar_select %p183, %s182, 63
        %s185 = smul.addr %s184, 4
        %s186 = scalar_lea.vmem %s2, %s185
        %p187 = pneg %p112
        %p188 = pneg %p109
        %p189 = scmp.lt.s32.totalorder %s18, 3
        %s190 = scalar_select %p189, %s18, 3
        %s191 = smul.addr %s190, 2
        %s192 = scalar_lea.vmem %s3, %s191
        %s193 = smul.u32 16, %s18
        %s194 = smul.u32 16, %s18
        %p195 = scmp.lt.s32.totalorder %s194, 63
        %s196 = scalar_select %p195, %s194, 63
        %s197 = smul.addr %s196, 4
        %s198 = scalar_lea.vmem %s2, %s197
        %s199 = smul.u32 16, %s18
        %p200 = scmp.lt.s32.totalorder %s18, 3
        %s201 = scalar_select %p200, %s18, 3
        %s202 = smul.addr %s201, 2
        %s203 = scalar_lea.vmem %s3, %s202
        %v205 = vld [vmem:[%s166] sm:$0xff]
        %v206 = vld [vmem:[%s166 + $0x8] sm:$0xff]
        %v207 = vld [vmem:[%s166 + $0x10] sm:$0xff]
        %v208 = vld [vmem:[%s166 + $0x18] sm:$0xff]
        %v209 = vld [vmem:[%s166 + $0x20] sm:$0xff]
        %v210 = vld [vmem:[%s166 + $0x28] sm:$0xff]
        %v211 = vld [vmem:[%s166 + $0x30] sm:$0xff]
        %v212 = vld [vmem:[%s166 + $0x38] sm:$0xff]
        %v213 = vld [vmem:[%s166 + $0x40] sm:$0xff]
        %v214 = vld [vmem:[%s166 + $0x48] sm:$0xff]
        %v215 = vld [vmem:[%s166 + $0x50] sm:$0xff]
        %v216 = vld [vmem:[%s166 + $0x58] sm:$0xff]
        %v217 = vld [vmem:[%s166 + $0x60] sm:$0xff]
        %v218 = vld [vmem:[%s166 + $0x68] sm:$0xff]
        %v219 = vld [vmem:[%s166 + $0x70] sm:$0xff]
        %v220 = vld [vmem:[%s166 + $0x78] sm:$0xff]
        %v221 = vpack.c.bf16 %v206, %v205
        %v222 = vpack.c.bf16 %v208, %v207
        %v223 = vpack.c.bf16 %v210, %v209
        %v224 = vpack.c.bf16 %v212, %v211
        %v225 = vpack.c.bf16 %v214, %v213
        %v226 = vpack.c.bf16 %v216, %v215
        %v227 = vpack.c.bf16 %v218, %v217
        %v228 = vpack.c.bf16 %v220, %v219
        %v229 = vld [vmem:[%s1] sm:$0xf]
        %v230 = vld [vmem:[%s1 + $0x4] sm:$0xf]
        %v233 = vunpack.c.l.b16 %v229
        %v234 = vunpack.c.l.b16 %v230
        %v235 = vpack.c.b16 %v234, %v233
        %vm237 = vcmask 130048
        %v239 = vsel %vm237, %v221, 0
        %v242 = vsel %vm237, %v222, 0
        %v245 = vsel %vm237, %v223, 0
        %v248 = vsel %vm237, %v224, 0
        %v251 = vsel %vm237, %v225, 0
        %v254 = vsel %vm237, %v226, 0
        %v257 = vsel %vm237, %v227, 0
        %v260 = vsel %vm237, %v228, 0
        %262 = vmatprep.subr.bf16.mxu0 0
        %263 = vmatpush1.bf16.msra.mxu0 %v235
        %264 = vmatprep.subr.bf16.mxu0 0
        %265 = vmatpush1.bf16.msra.mxu0 0
        %266 = vmatprep.subr.bf16.mxu0 0
        %267 = vmatpush1.bf16.msra.mxu0 0
        %268 = vmatprep.subr.bf16.mxu0 0
        %269 = vmatpush1.bf16.msra.mxu0 0
        %270 = vmatprep.subr.bf16.mxu0 0
        %271 = vmatpush1.bf16.msra.mxu0 0
        %272 = vmatprep.subr.bf16.mxu0 0
        %273 = vmatpush1.bf16.msra.mxu0 0
        %274 = vmatprep.subr.bf16.mxu0 0
        %275 = vmatpush1.bf16.msra.mxu0 0
        %276 = vmatprep.subr.bf16.mxu0 0
        %277 = vmatpush1.bf16.msra.mxu0 0
        %278 = vmatprep.subr.bf16.mxu0 0
        %279 = vmatpush1.bf16.msra.mxu0 0
        %280 = vmatprep.subr.bf16.mxu0 0
        %281 = vmatpush1.bf16.msra.mxu0 0
        %282 = vmatprep.subr.bf16.mxu0 0
        %283 = vmatpush1.bf16.msra.mxu0 0
        %284 = vmatprep.subr.bf16.mxu0 0
        %285 = vmatpush1.bf16.msra.mxu0 0
        %286 = vmatprep.subr.bf16.mxu0 0
        %287 = vmatpush1.bf16.msra.mxu0 0
        %288 = vmatprep.subr.bf16.mxu0 0
        %289 = vmatpush1.bf16.msra.mxu0 0
        %290 = vmatprep.subr.bf16.mxu0 0
        %291 = vmatpush1.bf16.msra.mxu0 0
        %292 = vmatprep.subr.bf16.mxu0 0
        %293 = vmatpush1.bf16.msra.mxu0 0
        %294 = vmatprep.mubr.bf16.mxu0 0
        %295 = vmatmul.mubr.bf16.gmra.mrb[0].mxu0 %v239
        %v296 = vpop.f32.mrb[0].mxu0
        %v297 = vadd.f32 0.0, %v296
        %v298 = vpop.f32.mrb[0].mxu0
        %v299 = vpop.f32.mrb[0].mxu0
        %v300 = vadd.f32 0.0, %v299
        %v301 = vpop.f32.mrb[0].mxu0
        %302 = vmatprep.mubr.bf16.mxu0 0
        %303 = vmatmul.mubr.bf16.gmra.mrb[0].mxu0 %v242
        %v304 = vpop.f32.mrb[0].mxu0
        %v305 = vadd.f32 0.0, %v304
        %v306 = vpop.f32.mrb[0].mxu0
        %v307 = vpop.f32.mrb[0].mxu0
        %v308 = vadd.f32 0.0, %v307
        %v309 = vpop.f32.mrb[0].mxu0
        %310 = vmatprep.mubr.bf16.mxu0 0
        %311 = vmatmul.mubr.bf16.gmra.mrb[0].mxu0 %v245
        %v312 = vpop.f32.mrb[0].mxu0
        %v313 = vadd.f32 0.0, %v312
        %v314 = vpop.f32.mrb[0].mxu0
        %v315 = vpop.f32.mrb[0].mxu0
        %v316 = vadd.f32 0.0, %v315
        %v317 = vpop.f32.mrb[0].mxu0
        %318 = vmatprep.mubr.bf16.mxu0 0
        %319 = vmatmul.mubr.bf16.gmra.mrb[0].mxu0 %v248
        %v320 = vpop.f32.mrb[0].mxu0
        %v321 = vadd.f32 0.0, %v320
        %v322 = vpop.f32.mrb[0].mxu0
        %v323 = vpop.f32.mrb[0].mxu0
        %v324 = vadd.f32 0.0, %v323
        %v325 = vpop.f32.mrb[0].mxu0
        %326 = vmatprep.mubr.bf16.mxu0 0
        %327 = vmatmul.mubr.bf16.gmra.mrb[0].mxu0 %v251
        %v328 = vpop.f32.mrb[0].mxu0
        %v329 = vadd.f32 0.0, %v328
        %v330 = vpop.f32.mrb[0].mxu0
        %v331 = vpop.f32.mrb[0].mxu0
        %v332 = vadd.f32 0.0, %v331
        %v333 = vpop.f32.mrb[0].mxu0
        %334 = vmatprep.mubr.bf16.mxu0 0
        %335 = vmatmul.mubr.bf16.gmra.mrb[0].mxu0 %v254
        %v336 = vpop.f32.mrb[0].mxu0
        %v337 = vadd.f32 0.0, %v336
        %v338 = vpop.f32.mrb[0].mxu0
        %v339 = vpop.f32.mrb[0].mxu0
        %v340 = vadd.f32 0.0, %v339
        %v341 = vpop.f32.mrb[0].mxu0
        %342 = vmatprep.mubr.bf16.mxu0 0
        %343 = vmatmul.mubr.bf16.gmra.mrb[0].mxu0 %v257
        %v344 = vpop.f32.mrb[0].mxu0
        %v345 = vadd.f32 0.0, %v344
        %v346 = vpop.f32.mrb[0].mxu0
        %v347 = vpop.f32.mrb[0].mxu0
        %v348 = vadd.f32 0.0, %v347
        %v349 = vpop.f32.mrb[0].mxu0
        %350 = vmatprep.mubr.bf16.mxu0 0
        %351 = vmatmul.mubr.bf16.gmra.mrb[0].mxu0 %v260
        %v352 = vpop.f32.mrb[0].mxu0
        %v353 = vadd.f32 0.0, %v352
        %v354 = vpop.f32.mrb[0].mxu0
        %v355 = vpop.f32.mrb[0].mxu0
        %v356 = vadd.f32 0.0, %v355
        %v357 = vpop.f32.mrb[0].mxu0
        %358 = vdwg.mxu0
        %v359 = vpack.c.bf16 %v300, %v297
        %v360 = vpack.c.bf16 %v308, %v305
        %v361 = vpack.c.bf16 %v316, %v313
        %v362 = vpack.c.bf16 %v324, %v321
        %v363 = vpack.c.bf16 %v332, %v329
        %v364 = vpack.c.bf16 %v340, %v337
        %v365 = vpack.c.bf16 %v348, %v345
        %v366 = vpack.c.bf16 %v356, %v353
        %v375 = vunpack.c.l.b16 %v359
        %v376 = vunpack.c.h.b16 %v359
        %v377 = vunpack.c.l.b16 %v360
        %v378 = vunpack.c.h.b16 %v360
        %v379 = vunpack.c.l.b16 %v361
        %v380 = vunpack.c.h.b16 %v361
        %v381 = vunpack.c.l.b16 %v362
        %v382 = vunpack.c.h.b16 %v362
        %v383 = vunpack.c.l.b16 %v363
        %v384 = vunpack.c.h.b16 %v363
        %v385 = vunpack.c.l.b16 %v364
        %v386 = vunpack.c.h.b16 %v364
        %v387 = vunpack.c.l.b16 %v365
        %v388 = vunpack.c.h.b16 %v365
        %v389 = vunpack.c.l.b16 %v366
        %v390 = vunpack.c.h.b16 %v366
        %v391 = vpack.c.b16 %v375, %v375
        %v392 = vpack.c.b16 %v376, %v376
        %v393 = vpack.c.b16 %v377, %v377
        %v394 = vpack.c.b16 %v378, %v378
        %v395 = vpack.c.b16 %v379, %v379
        %v396 = vpack.c.b16 %v380, %v380
        %v397 = vpack.c.b16 %v381, %v381
        %v398 = vpack.c.b16 %v382, %v382
        %v399 = vpack.c.b16 %v383, %v383
        %v400 = vpack.c.b16 %v384, %v384
        %v401 = vpack.c.b16 %v385, %v385
        %v402 = vpack.c.b16 %v386, %v386
        %v403 = vpack.c.b16 %v387, %v387
        %v404 = vpack.c.b16 %v388, %v388
        %v405 = vpack.c.b16 %v389, %v389
        %v406 = vpack.c.b16 %v390, %v390
        %423 = vst [vmem:[%s198] sm:$0xf] %v391
        %424 = vst [vmem:[%s198 + $0x4] sm:$0xf] %v392
        %425 = vst [vmem:[%s198 + $0x8] sm:$0xf] %v393
        %426 = vst [vmem:[%s198 + $0xc] sm:$0xf] %v394
        %427 = vst [vmem:[%s198 + $0x10] sm:$0xf] %v395
        %428 = vst [vmem:[%s198 + $0x14] sm:$0xf] %v396
        %429 = vst [vmem:[%s198 + $0x18] sm:$0xf] %v397
        %430 = vst [vmem:[%s198 + $0x1c] sm:$0xf] %v398
        %431 = vst [vmem:[%s198 + $0x20] sm:$0xf] %v399
        %432 = vst [vmem:[%s198 + $0x24] sm:$0xf] %v400
        %433 = vst [vmem:[%s198 + $0x28] sm:$0xf] %v401
        %434 = vst [vmem:[%s198 + $0x2c] sm:$0xf] %v402
        %435 = vst [vmem:[%s198 + $0x30] sm:$0xf] %v403
        %436 = vst [vmem:[%s198 + $0x34] sm:$0xf] %v404
        %437 = vst [vmem:[%s198 + $0x38] sm:$0xf] %v405
        %438 = vst [vmem:[%s198 + $0x3c] sm:$0xf] %v406
        %v439 = vunpack.c.l.bf16 %v359
        %v440 = vunpack.c.h.bf16 %v359
        %v441 = vunpack.c.l.bf16 %v360
        %v442 = vunpack.c.h.bf16 %v360
        %v443 = vunpack.c.l.bf16 %v361
        %v444 = vunpack.c.h.bf16 %v361
        %v445 = vunpack.c.l.bf16 %v362
        %v446 = vunpack.c.h.bf16 %v362
        %v447 = vunpack.c.l.bf16 %v363
        %v448 = vunpack.c.h.bf16 %v363
        %v449 = vunpack.c.l.bf16 %v364
        %v450 = vunpack.c.h.bf16 %v364
        %v451 = vunpack.c.l.bf16 %v365
        %v452 = vunpack.c.h.bf16 %v365
        %v453 = vunpack.c.l.bf16 %v366
        %v454 = vunpack.c.h.bf16 %v366
        %v455 = vadd.f32 %v439, %v440
        %v456 = vadd.f32 %v455, %v441
        %v457 = vadd.f32 %v456, %v442
        %v458 = vadd.f32 %v457, %v443
        %v459 = vadd.f32 %v458, %v444
        %v460 = vadd.f32 %v459, %v445
        %v461 = vadd.f32 %v460, %v446
        %v462 = vadd.f32 %v461, %v447
        %v463 = vadd.f32 %v462, %v448
        %v464 = vadd.f32 %v463, %v449
        %v465 = vadd.f32 %v464, %v450
        %v466 = vadd.f32 %v465, %v451
        %v467 = vadd.f32 %v466, %v452
        %v468 = vadd.f32 %v467, %v453
        %v469 = vadd.f32 %v468, %v454
        %v470 = vrot.slane %v469, 4
        %v471 = vadd.f32 %v469, %v470
        %v472 = vrot.slane %v471, 2
        %v473 = vadd.f32 %v471, %v472
        %v474 = vrot.slane %v473, 1
        %v475 = vadd.f32 %v473, %v474
        %476 = vst [vmem:[%s203] sm:$0x1] %v475
        %v477 = vmul.f32 %v439, %v439
        %v478 = vmul.f32 %v440, %v440
        %v479 = vmul.f32 %v441, %v441
        %v480 = vmul.f32 %v442, %v442
        %v481 = vmul.f32 %v443, %v443
        %v482 = vmul.f32 %v444, %v444
        %v483 = vmul.f32 %v445, %v445
        %v484 = vmul.f32 %v446, %v446
        %v485 = vmul.f32 %v447, %v447
        %v486 = vmul.f32 %v448, %v448
        %v487 = vmul.f32 %v449, %v449
        %v488 = vmul.f32 %v450, %v450
        %v489 = vmul.f32 %v451, %v451
        %v490 = vmul.f32 %v452, %v452
        %v491 = vmul.f32 %v453, %v453
        %v492 = vmul.f32 %v454, %v454
        %v493 = vadd.f32 %v477, %v478
        %v494 = vadd.f32 %v493, %v479
        %v495 = vadd.f32 %v494, %v480
        %v496 = vadd.f32 %v495, %v481
        %v497 = vadd.f32 %v496, %v482
        %v498 = vadd.f32 %v497, %v483
        %v499 = vadd.f32 %v498, %v484
        %v500 = vadd.f32 %v499, %v485
        %v501 = vadd.f32 %v500, %v486
        %v502 = vadd.f32 %v501, %v487
        %v503 = vadd.f32 %v502, %v488
        %v504 = vadd.f32 %v503, %v489
        %v505 = vadd.f32 %v504, %v490
        %v506 = vadd.f32 %v505, %v491
        %v507 = vadd.f32 %v506, %v492
        %v508 = vrot.slane %v507, 4
        %v509 = vadd.f32 %v507, %v508
        %v510 = vrot.slane %v509, 2
        %v511 = vadd.f32 %v509, %v510
        %v512 = vrot.slane %v511, 1
        %v513 = vadd.f32 %v511, %v512
        %514 = vst [vmem:[%s203 + $0x1] sm:$0x1] %v513
        %s515 = smul.u32 16, %s18
        %p516 = scmp.lt.s32.totalorder %s515, 63
        %s517 = scalar_select %p516, %s515, 63
        %s518 = smul.addr %s517, 4
        %s519 = scalar_lea.vmem %s2, %s518
        %p520 = scmp.lt.s32.totalorder %s18, 3
        %s521 = scalar_select %p520, %s18, 3
        %s522 = smul.addr %s521, 2
        %s523 = scalar_lea.vmem %s3, %s522
        // Predicated region
        $region33: #{residual50_forward.4} parent=27 // pred_check
          %p524 = pneg %p83
        $region34: #{residual50_forward.4} parent=27 // pred_check_branch
          %526 = sbr.rel (%p524) target = $region36
        $region35: #{residual50_forward.4} parent=27 // pred_region
          %s527 = smul.u32 16, %s18
        $region36: #{residual50_forward.4} parent=27 // pred_fallthru
          _
        // Predicated region
        $region37: #{residual50_forward.4} parent=27 // pred_check
          %p528 = pneg %p109
        $region38: #{residual50_forward.4} parent=27 // pred_check_branch
          %530 = sbr.rel (%p528) target = $region40
        $region39: #{residual50_forward.4} parent=27 // pred_region
          _
        $region40: #{residual50_forward.4} parent=27 // pred_fallthru
          _
      $region28: #{residual50_forward.4} parent=5 // pred_fallthru
        _
      %p531 = scmp.le.s32.totalorder 2, %s13
      // Predicated region
      $region41: #{residual50_forward.4} parent=5 // pred_check
        %p532 = pneg %p531
      $region42: #{residual50_forward.4} parent=5 // pred_check_branch
        %534 = sbr.rel (%p532) target = $region44
      $region43: #{residual50_forward.4} parent=5 // pred_region
        %s535 = ssub.s32 %s13, 2
        // Predicated region
        $region45: #{residual50_forward.4} parent=43 // pred_check
          %p536 = pneg %p89
        $region46: #{residual50_forward.4} parent=43 // pred_check_branch
          %538 = sbr.rel (%p536) target = $region48
        $region47: #{residual50_forward.4} parent=43 // pred_region
          %s539 = smul.u32 16, %s19
          %p540 = scmp.lt.s32.totalorder %s539, 63
          %s541 = scalar_select %p540, %s539, 63
          %s542 = smul.addr %s541, 4
          %s543 = scalar_lea.vmem %s2, %s542
        $region48: #{residual50_forward.4} parent=43 // pred_fallthru
          _
        // Predicated region
        $region49: #{residual50_forward.4} parent=43 // pred_check
          %p544 = pneg %p115
        $region50: #{residual50_forward.4} parent=43 // pred_check_branch
          %546 = sbr.rel (%p544) target = $region52
        $region51: #{residual50_forward.4} parent=43 // pred_region
          %p547 = scmp.lt.s32.totalorder %s19, 3
          %s548 = scalar_select %p547, %s19, 3
          %s549 = smul.addr %s548, 2
          %s550 = scalar_lea.vmem %s3, %s549
        $region52: #{residual50_forward.4} parent=43 // pred_fallthru
          _
      $region44: #{residual50_forward.4} parent=5 // pred_fallthru
        _
    $region6: #{residual50_forward.4} parent=1 // loop_footer
      %s17 = sadd.s32 1, %s13
    $region7: #{residual50_forward.4} parent=1 // loop_footer_branch
      %12 = sbr.rel target = $region3
    $region8: #{residual50_forward.4} parent=1 // loop_exit
      _
    %551 = vsyncpa [#allocation3], 1
    %s552 = scalar_lea.sflag [#allocation3], 1
    %553 = vsyncpa %s552, 1

// kernel: residual50_forward.6
$region0: #{residual50_forward.6}
  #allocation0 [shape = 'u32[]', space=smem, size = 0x4, offset = 0x4, fixed_abs, tag = 'smem constant byte address 0x4 - core index']
  #allocation1 [shape = 'u32[144,128]{1,0:T(1,128)}', space=vmem, size = 0x12000, scoped, tag = 'internal scratch']
  %s0 = inlined_call_operand.vmem [shape: bf16[512,128], index: 0, kind: input, shape index: {}]
  %s1 = inlined_call_operand.vmem [shape: f32[2,128], index: 1, kind: input, shape index: {}]
  %s2 = inlined_call_operand.vmem [shape: f32[1,128], index: 2, kind: input, shape index: {}]
  %s3 = inlined_call_operand.vmem [shape: f32[1,128], index: 3, kind: input, shape index: {}]
  %s4 = inlined_call_operand.vmem [shape: bf16[128,32], index: 4, kind: input, shape index: {}]
  %s5 = inlined_call_operand.vmem [shape: bf16[512,32], index: 5, kind: output, shape index: {0}]
  %s6 = inlined_call_operand.vmem [shape: f32[4,2,32], index: 6, kind: output, shape index: {1}]
  %7 = xla_tuple %s5, %s6
  %s8 = sld [smem:[#allocation0]]
  $region61: #{residual50_forward.6} parent=0
    _
  %s10 = ssub.s32 1, %s8
  %s11 = scalar_select 0, %s10, %s8
  loop: start=0, step=1, limit=6
  $region2: #{residual50_forward.6} parent=0 // loop_pre_header
    _
  $region3: #{residual50_forward.6} parent=0 // loop_header
    %s13 = sphi 0, %s17
    %p14 = scmp.ge.s32.totalorder %s13, 6
    %s23 = sphi 0, %s25
    %s26 = sphi 0, %s23
    %s27 = sphi 0, %s26
    %s43 = sphi 0, %s27
    %s47 = sphi 0, %s47
    %s49 = sphi 0, %s47
    %s50 = sphi 0, %s49
    %s64 = sphi 0, %s50
    %s68 = sphi 0, %s68
    %s70 = sphi 0, %s68
    %s71 = sphi 0, %s70
    %s85 = sphi 0, %s71
    %s89 = sphi 0, %s89
    %s91 = sphi 0, %s89
    %s92 = sphi 0, %s91
    %s106 = sphi 0, %s92
    %s110 = sphi 0, %s110
    %s112 = sphi 0, %s110
    %s113 = sphi 0, %s112
    %s127 = sphi 0, %s113
    %s133 = sphi 0, %s135
    %s136 = sphi 0, %s133
    %s137 = sphi 0, %s136
    %s153 = sphi 0, %s137
    %s159 = sphi 0, %s161
    %s162 = sphi 0, %s159
    %s163 = sphi 0, %s162
    %s179 = sphi 0, %s163
  $region4: #{residual50_forward.6} parent=0 // loop_header_branch
    %16 = sbr.rel (%p14) target = $region8
  $region5: #{residual50_forward.6} parent=0 // loop_body
    %s18 = ssub.s32 %s13, 1
    %s19 = ssub.s32 %s13, 2
    %s20 = sadd.s32 %s13, 1
    %s21 = ssub.s32 %s13, %s20
    %p22 = scmp.eq.s32.totalorder %s21, 0
    %s24 = sadd.s32 %s23, 1
    %s25 = scalar_select %p22, %s23, %s24
    %p28 = pneg %p22
    %p29 = scmp.eq.s32.totalorder %s13, 3
    %p30 = por %p28, %p29
    %p31 = scmp.ne.s32.totalorder %s23, %s26
    %p32 = scmp.eq.s32.totalorder %s13, 0
    %p33 = por %p31, %p32
    %p34 = scmp.ne.s32.totalorder %s23, %s26
    %p35 = scmp.eq.s32.totalorder %s18, 3
    %p36 = por %p34, %p35
    %p37 = scmp.ne.s32.totalorder %s26, %s27
    %p38 = scmp.eq.s32.totalorder %s18, 0
    %p39 = por %p37, %p38
    %p40 = scmp.ne.s32.totalorder %s26, %s27
    %p41 = scmp.eq.s32.totalorder %s19, 3
    %p42 = por %p40, %p41
    %p44 = scmp.ne.s32.totalorder %s27, %s43
    %p45 = scmp.eq.s32.totalorder %s19, 0
    %p46 = por %p44, %p45
    %s48 = sadd.s32 %s47, 1
    %p51 = scmp.eq.s32.totalorder %s13, 3
    %p52 = scmp.ne.s32.totalorder %s47, %s49
    %p53 = scmp.eq.s32.totalorder %s13, 0
    %p54 = por %p52, %p53
    %p55 = scmp.ne.s32.totalorder %s47, %s49
    %p56 = scmp.eq.s32.totalorder %s18, 3
    %p57 = por %p55, %p56
    %p58 = scmp.ne.s32.totalorder %s49, %s50
    %p59 = scmp.eq.s32.totalorder %s18, 0
    %p60 = por %p58, %p59
    %p61 = scmp.ne.s32.totalorder %s49, %s50
    %p62 = scmp.eq.s32.totalorder %s19, 3
    %p63 = por %p61, %p62
    %p65 = scmp.ne.s32.totalorder %s50, %s64
    %p66 = scmp.eq.s32.totalorder %s19, 0
    %p67 = por %p65, %p66
    %s69 = sadd.s32 %s68, 1
    %p72 = scmp.eq.s32.totalorder %s13, 3
    %p73 = scmp.ne.s32.totalorder %s68, %s70
    %p74 = scmp.eq.s32.totalorder %s13, 0
    %p75 = por %p73, %p74
    %p76 = scmp.ne.s32.totalorder %s68, %s70
    %p77 = scmp.eq.s32.totalorder %s18, 3
    %p78 = por %p76, %p77
    %p79 = scmp.ne.s32.totalorder %s70, %s71
    %p80 = scmp.eq.s32.totalorder %s18, 0
    %p81 = por %p79, %p80
    %p82 = scmp.ne.s32.totalorder %s70, %s71
    %p83 = scmp.eq.s32.totalorder %s19, 3
    %p84 = por %p82, %p83
    %p86 = scmp.ne.s32.totalorder %s71, %s85
    %p87 = scmp.eq.s32.totalorder %s19, 0
    %p88 = por %p86, %p87
    %s90 = sadd.s32 %s89, 1
    %p93 = scmp.eq.s32.totalorder %s13, 3
    %p94 = scmp.ne.s32.totalorder %s89, %s91
    %p95 = scmp.eq.s32.totalorder %s13, 0
    %p96 = por %p94, %p95
    %p97 = scmp.ne.s32.totalorder %s89, %s91
    %p98 = scmp.eq.s32.totalorder %s18, 3
    %p99 = por %p97, %p98
    %p100 = scmp.ne.s32.totalorder %s91, %s92
    %p101 = scmp.eq.s32.totalorder %s18, 0
    %p102 = por %p100, %p101
    %p103 = scmp.ne.s32.totalorder %s91, %s92
    %p104 = scmp.eq.s32.totalorder %s19, 3
    %p105 = por %p103, %p104
    %p107 = scmp.ne.s32.totalorder %s92, %s106
    %p108 = scmp.eq.s32.totalorder %s19, 0
    %p109 = por %p107, %p108
    %s111 = sadd.s32 %s110, 1
    %p114 = scmp.eq.s32.totalorder %s13, 3
    %p115 = scmp.ne.s32.totalorder %s110, %s112
    %p116 = scmp.eq.s32.totalorder %s13, 0
    %p117 = por %p115, %p116
    %p118 = scmp.ne.s32.totalorder %s110, %s112
    %p119 = scmp.eq.s32.totalorder %s18, 3
    %p120 = por %p118, %p119
    %p121 = scmp.ne.s32.totalorder %s112, %s113
    %p122 = scmp.eq.s32.totalorder %s18, 0
    %p123 = por %p121, %p122
    %p124 = scmp.ne.s32.totalorder %s112, %s113
    %p125 = scmp.eq.s32.totalorder %s19, 3
    %p126 = por %p124, %p125
    %p128 = scmp.ne.s32.totalorder %s113, %s127
    %p129 = scmp.eq.s32.totalorder %s19, 0
    %p130 = por %p128, %p129
    %s131 = ssub.s32 %s13, %s20
    %p132 = scmp.eq.s32.totalorder %s131, 0
    %s134 = sadd.s32 %s133, 1
    %s135 = scalar_select %p132, %s133, %s134
    %p138 = pneg %p132
    %p139 = scmp.eq.s32.totalorder %s13, 3
    %p140 = por %p138, %p139
    %p141 = scmp.ne.s32.totalorder %s133, %s136
    %p142 = scmp.eq.s32.totalorder %s13, 0
    %p143 = por %p141, %p142
    %p144 = scmp.ne.s32.totalorder %s133, %s136
    %p145 = scmp.eq.s32.totalorder %s18, 3
    %p146 = por %p144, %p145
    %p147 = scmp.ne.s32.totalorder %s136, %s137
    %p148 = scmp.eq.s32.totalorder %s18, 0
    %p149 = por %p147, %p148
    %p150 = scmp.ne.s32.totalorder %s136, %s137
    %p151 = scmp.eq.s32.totalorder %s19, 3
    %p152 = por %p150, %p151
    %p154 = scmp.ne.s32.totalorder %s137, %s153
    %p155 = scmp.eq.s32.totalorder %s19, 0
    %p156 = por %p154, %p155
    %s157 = ssub.s32 %s13, %s20
    %p158 = scmp.eq.s32.totalorder %s157, 0
    %s160 = sadd.s32 %s159, 1
    %s161 = scalar_select %p158, %s159, %s160
    %p164 = pneg %p158
    %p165 = scmp.eq.s32.totalorder %s13, 3
    %p166 = por %p164, %p165
    %p167 = scmp.ne.s32.totalorder %s159, %s162
    %p168 = scmp.eq.s32.totalorder %s13, 0
    %p169 = por %p167, %p168
    %p170 = scmp.ne.s32.totalorder %s159, %s162
    %p171 = scmp.eq.s32.totalorder %s18, 3
    %p172 = por %p170, %p171
    %p173 = scmp.ne.s32.totalorder %s162, %s163
    %p174 = scmp.eq.s32.totalorder %s18, 0
    %p175 = por %p173, %p174
    %p176 = scmp.ne.s32.totalorder %s162, %s163
    %p177 = scmp.eq.s32.totalorder %s19, 3
    %p178 = por %p176, %p177
    %p180 = scmp.ne.s32.totalorder %s163, %s179
    %p181 = scmp.eq.s32.totalorder %s19, 0
    %p182 = por %p180, %p181
    %p183 = scmp.le.s32.totalorder 1, %s13
    %p184 = scmp.lt.s32.totalorder %s13, 5
    %p185 = pnand %p183, %p184
    %p186 = pneg %p185
    // Predicated region
    $region9: #{residual50_forward.6} parent=5 // pred_check
      _
    $region10: #{residual50_forward.6} parent=5 // pred_check_branch
      %188 = sbr.rel (%p185) target = $region12
    $region11: #{residual50_forward.6} parent=5 // pred_region
      %s189 = ssub.s32 %s13, 1
      // Predicated region
      $region13: #{residual50_forward.6} parent=11 // pred_check
        %p190 = pneg %p60
      $region14: #{residual50_forward.6} parent=11 // pred_check_branch
        %192 = sbr.rel (%p190) target = $region16
      $region15: #{residual50_forward.6} parent=11 // pred_region
        _
      $region16: #{residual50_forward.6} parent=11 // pred_fallthru
        _
      // Predicated region
      $region17: #{residual50_forward.6} parent=11 // pred_check
        %p193 = pneg %p81
      $region18: #{residual50_forward.6} parent=11 // pred_check_branch
        %195 = sbr.rel (%p193) target = $region20
      $region19: #{residual50_forward.6} parent=11 // pred_region
        _
      $region20: #{residual50_forward.6} parent=11 // pred_fallthru
        _
      // Predicated region
      $region21: #{residual50_forward.6} parent=11 // pred_check
        %p196 = pneg %p102
      $region22: #{residual50_forward.6} parent=11 // pred_check_branch
        %198 = sbr.rel (%p196) target = $region24
      $region23: #{residual50_forward.6} parent=11 // pred_region
        _
      $region24: #{residual50_forward.6} parent=11 // pred_fallthru
        _
      // Predicated region
      $region25: #{residual50_forward.6} parent=11 // pred_check
        %p199 = pneg %p123
      $region26: #{residual50_forward.6} parent=11 // pred_check_branch
        %201 = sbr.rel (%p199) target = $region28
      $region27: #{residual50_forward.6} parent=11 // pred_region
        _
      $region28: #{residual50_forward.6} parent=11 // pred_fallthru
        _
    $region12: #{residual50_forward.6} parent=5 // pred_fallthru
      _
    %p202 = scmp.lt.s32.totalorder %s13, 4
    // Predicated region
    $region29: #{residual50_forward.6} parent=5 // pred_check
      %p203 = pneg %p202
    $region30: #{residual50_forward.6} parent=5 // pred_check_branch
      %205 = sbr.rel (%p203) target = $region32
    $region31: #{residual50_forward.6} parent=5 // pred_region
      // Predicated region
      $region33: #{residual50_forward.6} parent=31 // pred_check
        %p206 = pneg %p33
      $region34: #{residual50_forward.6} parent=31 // pred_check_branch
        %208 = sbr.rel (%p206) target = $region36
      $region35: #{residual50_forward.6} parent=31 // pred_region
        %s209 = smul.u32 16, %s13
        %p210 = scmp.lt.s32.totalorder %s209, 63
        %s211 = scalar_select %p210, %s209, 63
        %s212 = smul.addr %s211, 4
        %s213 = scalar_lea.vmem %s0, %s212
        %s214 = smul.u32 16, %s13
      $region36: #{residual50_forward.6} parent=31 // pred_fallthru
        _
    $region32: #{residual50_forward.6} parent=5 // pred_fallthru
      _
    %p215 = scmp.le.s32.totalorder 1, %s13
    %p216 = scmp.lt.s32.totalorder %s13, 5
    %p217 = pnand %p215, %p216
    %p218 = pneg %p217
    // Predicated region
    $region37: #{residual50_forward.6} parent=5 // pred_check
      _
    $region38: #{residual50_forward.6} parent=5 // pred_check_branch
      %220 = sbr.rel (%p217) target = $region40
    $region39: #{residual50_forward.6} parent=5 // pred_region
      %s221 = ssub.s32 %s13, 1
      %s222 = smul.u32 16, %s18
      %p223 = scmp.lt.s32.totalorder %s222, 63
      %s224 = scalar_select %p223, %s222, 63
      %s225 = smul.addr %s224, 4
      %s226 = scalar_lea.vmem %s0, %s225
      %p227 = pneg %p39
      %p228 = pneg %p36
      %p229 = pneg %p60
      %p230 = pneg %p57
      %p231 = pneg %p81
      %p232 = pneg %p78
      %p233 = pneg %p102
      %p234 = pneg %p99
      %p235 = pneg %p123
      %p236 = pneg %p120
      %p237 = pneg %p149
      %p238 = pneg %p146
      %s239 = smul.u32 16, %s18
      %p240 = scmp.lt.s32.totalorder %s239, 63
      %s241 = scalar_select %p240, %s239, 63
      %s242 = smul.addr %s241, 4
      %s243 = scalar_lea.vmem %s5, %s242
      %p244 = pneg %p175
      %p245 = pneg %p172
      %p246 = scmp.lt.s32.totalorder %s18, 3
      %s247 = scalar_select %p246, %s18, 3
      %s248 = smul.addr %s247, 2
      %s249 = scalar_lea.vmem %s6, %s248
      %s250 = smul.u32 16, %s18
      %p251 = scmp.lt.s32.totalorder %s250, 63
      %s252 = scalar_select %p251, %s250, 63
      %s253 = smul.addr %s252, 4
      %s254 = scalar_lea.vmem %s0, %s253
      %s255 = smul.u32 16, %s18
      %s256 = smul.u32 16, %s18
      %p257 = scmp.lt.s32.totalorder %s256, 63
      %s258 = scalar_select %p257, %s256, 63
      %s259 = smul.addr %s258, 4
      %s260 = scalar_lea.vmem %s5, %s259
      %s261 = smul.u32 16, %s18
      %p262 = scmp.lt.s32.totalorder %s18, 3
      %s263 = scalar_select %p262, %s18, 3
      %s264 = smul.addr %s263, 2
      %s265 = scalar_lea.vmem %s6, %s264
      %v267 = vld [vmem:[%s1] sm:$0x1]
      %v268 = vmul.f32 %v267, 0.001953125
      %v269 = vld [vmem:[%s1 + $0x1] sm:$0x1]
      %v270 = vmul.f32 %v269, 0.001953125
      %v271 = vmul.f32 %v268, %v268
      %v272 = vsub.f32 %v270, %v271
      %v273 = vmax.f32 %v272, 0.0
      %v274 = vadd.f32 %v273, 1e-05
      %v275 = vrsqrt.pop %v274
      %v276 = vld [vmem:[%s2] sm:$0x1]
      %v277 = vmul.f32 %v275, %v276
      %v278 = vld [vmem:[%s254] sm:$0xf]
      %v279 = vld [vmem:[%s254 + $0x4] sm:$0xf]
      %v280 = vld [vmem:[%s254 + $0x8] sm:$0xf]
      %v281 = vld [vmem:[%s254 + $0xc] sm:$0xf]
      %v282 = vld [vmem:[%s254 + $0x10] sm:$0xf]
      %v283 = vld [vmem:[%s254 + $0x14] sm:$0xf]
      %v284 = vld [vmem:[%s254 + $0x18] sm:$0xf]
      %v285 = vld [vmem:[%s254 + $0x1c] sm:$0xf]
      %v286 = vld [vmem:[%s254 + $0x20] sm:$0xf]
      %v287 = vld [vmem:[%s254 + $0x24] sm:$0xf]
      %v288 = vld [vmem:[%s254 + $0x28] sm:$0xf]
      %v289 = vld [vmem:[%s254 + $0x2c] sm:$0xf]
      %v290 = vld [vmem:[%s254 + $0x30] sm:$0xf]
      %v291 = vld [vmem:[%s254 + $0x34] sm:$0xf]
      %v292 = vld [vmem:[%s254 + $0x38] sm:$0xf]
      %v293 = vld [vmem:[%s254 + $0x3c] sm:$0xf]
      %v294 = vunpack.c.l.bf16 %v278
      %v295 = vunpack.c.l.bf16 %v279
      %v296 = vunpack.c.l.bf16 %v280
      %v297 = vunpack.c.l.bf16 %v281
      %v298 = vunpack.c.l.bf16 %v282
      %v299 = vunpack.c.l.bf16 %v283
      %v300 = vunpack.c.l.bf16 %v284
      %v301 = vunpack.c.l.bf16 %v285
      %v302 = vunpack.c.l.bf16 %v286
      %v303 = vunpack.c.l.bf16 %v287
      %v304 = vunpack.c.l.bf16 %v288
      %v305 = vunpack.c.l.bf16 %v289
      %v306 = vunpack.c.l.bf16 %v290
      %v307 = vunpack.c.l.bf16 %v291
      %v308 = vunpack.c.l.bf16 %v292
      %v309 = vunpack.c.l.bf16 %v293
      %v310 = vlaneseq
      %v311 = vshrl.u32 %v310, 7
      %v312 = vsub.s32 0, %v311
      %v313 = vrot.slane %v277, %v312
      %v314 = vmul.f32 %v294, %v313
      %v315 = vmul.f32 %v295, %v313
      %v316 = vmul.f32 %v296, %v313
      %v317 = vmul.f32 %v297, %v313
      %v318 = vmul.f32 %v298, %v313
      %v319 = vmul.f32 %v299, %v313
      %v320 = vmul.f32 %v300, %v313
      %v321 = vmul.f32 %v301, %v313
      %v322 = vmul.f32 %v302, %v313
      %v323 = vmul.f32 %v303, %v313
      %v324 = vmul.f32 %v304, %v313
      %v325 = vmul.f32 %v305, %v313
      %v326 = vmul.f32 %v306, %v313
      %v327 = vmul.f32 %v307, %v313
      %v328 = vmul.f32 %v308, %v313
      %v329 = vmul.f32 %v309, %v313
      %v330 = vld [vmem:[%s3] sm:$0x1]
      %v331 = vmul.f32 %v268, %v277
      %v332 = vsub.f32 %v330, %v331
      %v334 = vlaneseq
      %v335 = vshrl.u32 %v334, 7
      %v336 = vsub.s32 0, %v335
      %v337 = vrot.slane %v332, %v336
      %v339 = vadd.f32 %v314, %v337
      %v340 = vadd.f32 %v315, %v337
      %v341 = vadd.f32 %v316, %v337
      %v342 = vadd.f32 %v317, %v337
      %v343 = vadd.f32 %v318, %v337
      %v344 = vadd.f32 %v319, %v337
      %v345 = vadd.f32 %v320, %v337
      %v346 = vadd.f32 %v321, %v337
      %v347 = vadd.f32 %v322, %v337
      %v348 = vadd.f32 %v323, %v337
      %v349 = vadd.f32 %v324, %v337
      %v350 = vadd.f32 %v325, %v337
      %v351 = vadd.f32 %v326, %v337
      %v352 = vadd.f32 %v327, %v337
      %v353 = vadd.f32 %v328, %v337
      %v354 = vadd.f32 %v329, %v337
      %v355 = vmax.f32 %v339, 0.0
      %v356 = vmax.f32 %v340, 0.0
      %v357 = vmax.f32 %v341, 0.0
      %v358 = vmax.f32 %v342, 0.0
      %v359 = vmax.f32 %v343, 0.0
      %v360 = vmax.f32 %v344, 0.0
      %v361 = vmax.f32 %v345, 0.0
      %v362 = vmax.f32 %v346, 0.0
      %v363 = vmax.f32 %v347, 0.0
      %v364 = vmax.f32 %v348, 0.0
      %v365 = vmax.f32 %v349, 0.0
      %v366 = vmax.f32 %v350, 0.0
      %v367 = vmax.f32 %v351, 0.0
      %v368 = vmax.f32 %v352, 0.0
      %v369 = vmax.f32 %v353, 0.0
      %v370 = vmax.f32 %v354, 0.0
      %v371 = vpack.c.bf16 %v356, %v355
      %v372 = vpack.c.bf16 %v358, %v357
      %v373 = vpack.c.bf16 %v360, %v359
      %v374 = vpack.c.bf16 %v362, %v361
      %v375 = vpack.c.bf16 %v364, %v363
      %v376 = vpack.c.bf16 %v366, %v365
      %v377 = vpack.c.bf16 %v368, %v367
      %v378 = vpack.c.bf16 %v370, %v369
      %v379 = vld [vmem:[%s4] sm:$0xf]
      %v380 = vld [vmem:[%s4 + $0x4] sm:$0xf]
      %v381 = vld [vmem:[%s4 + $0x8] sm:$0xf]
      %v382 = vld [vmem:[%s4 + $0xc] sm:$0xf]
      %v383 = vld [vmem:[%s4 + $0x10] sm:$0xf]
      %v384 = vld [vmem:[%s4 + $0x14] sm:$0xf]
      %v385 = vld [vmem:[%s4 + $0x18] sm:$0xf]
      %v386 = vld [vmem:[%s4 + $0x1c] sm:$0xf]
      %v387 = vld [vmem:[%s4 + $0x20] sm:$0xf]
      %v388 = vld [vmem:[%s4 + $0x24] sm:$0xf]
      %v389 = vld [vmem:[%s4 + $0x28] sm:$0xf]
      %v390 = vld [vmem:[%s4 + $0x2c] sm:$0xf]
      %v391 = vld [vmem:[%s4 + $0x30] sm:$0xf]
      %v392 = vld [vmem:[%s4 + $0x34] sm:$0xf]
      %v393 = vld [vmem:[%s4 + $0x38] sm:$0xf]
      %v394 = vld [vmem:[%s4 + $0x3c] sm:$0xf]
      %v411 = vunpack.c.l.b16 %v379
      %v412 = vunpack.c.l.b16 %v380
      %v413 = vunpack.c.l.b16 %v381
      %v414 = vunpack.c.l.b16 %v382
      %v415 = vunpack.c.l.b16 %v383
      %v416 = vunpack.c.l.b16 %v384
      %v417 = vunpack.c.l.b16 %v385
      %v418 = vunpack.c.l.b16 %v386
      %v419 = vunpack.c.l.b16 %v387
      %v420 = vunpack.c.l.b16 %v388
      %v421 = vunpack.c.l.b16 %v389
      %v422 = vunpack.c.l.b16 %v390
      %v423 = vunpack.c.l.b16 %v391
      %v424 = vunpack.c.l.b16 %v392
      %v425 = vunpack.c.l.b16 %v393
      %v426 = vunpack.c.l.b16 %v394
      %v427 = vpack.c.b16 %v412, %v411
      %v428 = vpack.c.b16 %v414, %v413
      %v429 = vpack.c.b16 %v416, %v415
      %v430 = vpack.c.b16 %v418, %v417
      %v431 = vpack.c.b16 %v420, %v419
      %v432 = vpack.c.b16 %v422, %v421
      %v433 = vpack.c.b16 %v424, %v423
      %v434 = vpack.c.b16 %v426, %v425
      %443 = vmatprep.subr.bf16.mxu0 0
      %444 = vmatpush1.bf16.msra.mxu0 %v427
      %445 = vmatprep.subr.bf16.mxu0 0
      %446 = vmatpush1.bf16.msra.mxu0 %v428
      %447 = vmatprep.subr.bf16.mxu0 0
      %448 = vmatpush1.bf16.msra.mxu0 %v429
      %449 = vmatprep.subr.bf16.mxu0 0
      %450 = vmatpush1.bf16.msra.mxu0 %v430
      %451 = vmatprep.subr.bf16.mxu0 0
      %452 = vmatpush1.bf16.msra.mxu0 %v431
      %453 = vmatprep.subr.bf16.mxu0 0
      %454 = vmatpush1.bf16.msra.mxu0 %v432
      %455 = vmatprep.subr.bf16.mxu0 0
      %456 = vmatpush1.bf16.msra.mxu0 %v433
      %457 = vmatprep.subr.bf16.mxu0 0
      %458 = vmatpush1.bf16.msra.mxu0 %v434
      %459 = vmatprep.subr.bf16.mxu0 0
      %460 = vmatpush1.bf16.msra.mxu0 0
      %461 = vmatprep.subr.bf16.mxu0 0
      %462 = vmatpush1.bf16.msra.mxu0 0
      %463 = vmatprep.subr.bf16.mxu0 0
      %464 = vmatpush1.bf16.msra.mxu0 0
      %465 = vmatprep.subr.bf16.mxu0 0
      %466 = vmatpush1.bf16.msra.mxu0 0
      %467 = vmatprep.subr.bf16.mxu0 0
      %468 = vmatpush1.bf16.msra.mxu0 0
      %469 = vmatprep.subr.bf16.mxu0 0
      %470 = vmatpush1.bf16.msra.mxu0 0
      %471 = vmatprep.subr.bf16.mxu0 0
      %472 = vmatpush1.bf16.msra.mxu0 0
      %473 = vmatprep.subr.bf16.mxu0 0
      %474 = vmatpush1.bf16.msra.mxu0 0
      %475 = vmatprep.mubr.bf16.mxu0 0
      %476 = vmatmul.mubr.bf16.gmra.mrb[0].mxu0 %v371
      %v477 = vpop.f32.mrb[0].mxu0
      %v478 = vadd.f32 0.0, %v477
      %v479 = vpop.f32.mrb[0].mxu0
      %v480 = vpop.f32.mrb[0].mxu0
      %v481 = vadd.f32 0.0, %v480
      %v482 = vpop.f32.mrb[0].mxu0
      %483 = vmatprep.mubr.bf16.mxu0 0
      %484 = vmatmul.mubr.bf16.gmra.mrb[0].mxu0 %v372
      %v485 = vpop.f32.mrb[0].mxu0
      %v486 = vadd.f32 0.0, %v485
      %v487 = vpop.f32.mrb[0].mxu0
      %v488 = vpop.f32.mrb[0].mxu0
      %v489 = vadd.f32 0.0, %v488
      %v490 = vpop.f32.mrb[0].mxu0
      %491 = vmatprep.mubr.bf16.mxu0 0
      %492 = vmatmul.mubr.bf16.gmra.mrb[0].mxu0 %v373
      %v493 = vpop.f32.mrb[0].mxu0
      %v494 = vadd.f32 0.0, %v493
      %v495 = vpop.f32.mrb[0].mxu0
      %v496 = vpop.f32.mrb[0].mxu0
      %v497 = vadd.f32 0.0, %v496
      %v498 = vpop.f32.mrb[0].mxu0
      %499 = vmatprep.mubr.bf16.mxu0 0
      %500 = vmatmul.mubr.bf16.gmra.mrb[0].mxu0 %v374
      %v501 = vpop.f32.mrb[0].mxu0
      %v502 = vadd.f32 0.0, %v501
      %v503 = vpop.f32.mrb[0].mxu0
      %v504 = vpop.f32.mrb[0].mxu0
      %v505 = vadd.f32 0.0, %v504
      %v506 = vpop.f32.mrb[0].mxu0
      %507 = vmatprep.mubr.bf16.mxu0 0
      %508 = vmatmul.mubr.bf16.gmra.mrb[0].mxu0 %v375
      %v509 = vpop.f32.mrb[0].mxu0
      %v510 = vadd.f32 0.0, %v509
      %v511 = vpop.f32.mrb[0].mxu0
      %v512 = vpop.f32.mrb[0].mxu0
      %v513 = vadd.f32 0.0, %v512
      %v514 = vpop.f32.mrb[0].mxu0
      %515 = vmatprep.mubr.bf16.mxu0 0
      %516 = vmatmul.mubr.bf16.gmra.mrb[0].mxu0 %v376
      %v517 = vpop.f32.mrb[0].mxu0
      %v518 = vadd.f32 0.0, %v517
      %v519 = vpop.f32.mrb[0].mxu0
      %v520 = vpop.f32.mrb[0].mxu0
      %v521 = vadd.f32 0.0, %v520
      %v522 = vpop.f32.mrb[0].mxu0
      %523 = vmatprep.mubr.bf16.mxu0 0
      %524 = vmatmul.mubr.bf16.gmra.mrb[0].mxu0 %v377
      %v525 = vpop.f32.mrb[0].mxu0
      %v526 = vadd.f32 0.0, %v525
      %v527 = vpop.f32.mrb[0].mxu0
      %v528 = vpop.f32.mrb[0].mxu0
      %v529 = vadd.f32 0.0, %v528
      %v530 = vpop.f32.mrb[0].mxu0
      %531 = vmatprep.mubr.bf16.mxu0 0
      %532 = vmatmul.mubr.bf16.gmra.mrb[0].mxu0 %v378
      %v533 = vpop.f32.mrb[0].mxu0
      %v534 = vadd.f32 0.0, %v533
      %v535 = vpop.f32.mrb[0].mxu0
      %v536 = vpop.f32.mrb[0].mxu0
      %v537 = vadd.f32 0.0, %v536
      %v538 = vpop.f32.mrb[0].mxu0
      %539 = vdwg.mxu0
      %v540 = vpack.c.bf16 %v481, %v478
      %v541 = vpack.c.bf16 %v489, %v486
      %v542 = vpack.c.bf16 %v497, %v494
      %v543 = vpack.c.bf16 %v505, %v502
      %v544 = vpack.c.bf16 %v513, %v510
      %v545 = vpack.c.bf16 %v521, %v518
      %v546 = vpack.c.bf16 %v529, %v526
      %v547 = vpack.c.bf16 %v537, %v534
      %v556 = vunpack.c.l.b16 %v540
      %v557 = vunpack.c.h.b16 %v540
      %v558 = vunpack.c.l.b16 %v541
      %v559 = vunpack.c.h.b16 %v541
      %v560 = vunpack.c.l.b16 %v542
      %v561 = vunpack.c.h.b16 %v542
      %v562 = vunpack.c.l.b16 %v543
      %v563 = vunpack.c.h.b16 %v543
      %v564 = vunpack.c.l.b16 %v544
      %v565 = vunpack.c.h.b16 %v544
      %v566 = vunpack.c.l.b16 %v545
      %v567 = vunpack.c.h.b16 %v545
      %v568 = vunpack.c.l.b16 %v546
      %v569 = vunpack.c.h.b16 %v546
      %v570 = vunpack.c.l.b16 %v547
      %v571 = vunpack.c.h.b16 %v547
      %v572 = vpack.c.b16 %v556, %v556
      %v573 = vpack.c.b16 %v557, %v557
      %v574 = vpack.c.b16 %v558, %v558
      %v575 = vpack.c.b16 %v559, %v559
      %v576 = vpack.c.b16 %v560, %v560
      %v577 = vpack.c.b16 %v561, %v561
      %v578 = vpack.c.b16 %v562, %v562
      %v579 = vpack.c.b16 %v563, %v563
      %v580 = vpack.c.b16 %v564, %v564
      %v581 = vpack.c.b16 %v565, %v565
      %v582 = vpack.c.b16 %v566, %v566
      %v583 = vpack.c.b16 %v567, %v567
      %v584 = vpack.c.b16 %v568, %v568
      %v585 = vpack.c.b16 %v569, %v569
      %v586 = vpack.c.b16 %v570, %v570
      %v587 = vpack.c.b16 %v571, %v571
      %vm604 = vcmask 257024
      %605 = vst.msk [vmem:[%s260] sm:$0xf] %vm604, %v572
      %606 = vst.msk [vmem:[%s260 + $0x4] sm:$0xf] %vm604, %v573
      %607 = vst.msk [vmem:[%s260 + $0x8] sm:$0xf] %vm604, %v574
      %608 = vst.msk [vmem:[%s260 + $0xc] sm:$0xf] %vm604, %v575
      %609 = vst.msk [vmem:[%s260 + $0x10] sm:$0xf] %vm604, %v576
      %610 = vst.msk [vmem:[%s260 + $0x14] sm:$0xf] %vm604, %v577
      %611 = vst.msk [vmem:[%s260 + $0x18] sm:$0xf] %vm604, %v578
      %612 = vst.msk [vmem:[%s260 + $0x1c] sm:$0xf] %vm604, %v579
      %613 = vst.msk [vmem:[%s260 + $0x20] sm:$0xf] %vm604, %v580
      %614 = vst.msk [vmem:[%s260 + $0x24] sm:$0xf] %vm604, %v581
      %615 = vst.msk [vmem:[%s260 + $0x28] sm:$0xf] %vm604, %v582
      %616 = vst.msk [vmem:[%s260 + $0x2c] sm:$0xf] %vm604, %v583
      %617 = vst.msk [vmem:[%s260 + $0x30] sm:$0xf] %vm604, %v584
      %618 = vst.msk [vmem:[%s260 + $0x34] sm:$0xf] %vm604, %v585
      %619 = vst.msk [vmem:[%s260 + $0x38] sm:$0xf] %vm604, %v586
      %620 = vst.msk [vmem:[%s260 + $0x3c] sm:$0xf] %vm604, %v587
      %v621 = vunpack.c.l.bf16 %v540
      %v622 = vunpack.c.h.bf16 %v540
      %v623 = vunpack.c.l.bf16 %v541
      %v624 = vunpack.c.h.bf16 %v541
      %v625 = vunpack.c.l.bf16 %v542
      %v626 = vunpack.c.h.bf16 %v542
      %v627 = vunpack.c.l.bf16 %v543
      %v628 = vunpack.c.h.bf16 %v543
      %v629 = vunpack.c.l.bf16 %v544
      %v630 = vunpack.c.h.bf16 %v544
      %v631 = vunpack.c.l.bf16 %v545
      %v632 = vunpack.c.h.bf16 %v545
      %v633 = vunpack.c.l.bf16 %v546
      %v634 = vunpack.c.h.bf16 %v546
      %v635 = vunpack.c.l.bf16 %v547
      %v636 = vunpack.c.h.bf16 %v547
      %vm637 = vcmask 261120
      %v638 = vsel %vm637, %v621, 0.0
      %v639 = vsel %vm637, %v622, 0.0
      %v640 = vadd.f32 %v638, %v639
      %v641 = vsel %vm637, %v623, 0.0
      %v642 = vadd.f32 %v640, %v641
      %v643 = vsel %vm637, %v624, 0.0
      %v644 = vadd.f32 %v642, %v643
      %v645 = vsel %vm637, %v625, 0.0
      %v646 = vadd.f32 %v644, %v645
      %v647 = vsel %vm637, %v626, 0.0
      %v648 = vadd.f32 %v646, %v647
      %v649 = vsel %vm637, %v627, 0.0
      %v650 = vadd.f32 %v648, %v649
      %v651 = vsel %vm637, %v628, 0.0
      %v652 = vadd.f32 %v650, %v651
      %v653 = vsel %vm637, %v629, 0.0
      %v654 = vadd.f32 %v652, %v653
      %v655 = vsel %vm637, %v630, 0.0
      %v656 = vadd.f32 %v654, %v655
      %v657 = vsel %vm637, %v631, 0.0
      %v658 = vadd.f32 %v656, %v657
      %v659 = vsel %vm637, %v632, 0.0
      %v660 = vadd.f32 %v658, %v659
      %v661 = vsel %vm637, %v633, 0.0
      %v662 = vadd.f32 %v660, %v661
      %v663 = vsel %vm637, %v634, 0.0
      %v664 = vadd.f32 %v662, %v663
      %v665 = vsel %vm637, %v635, 0.0
      %v666 = vadd.f32 %v664, %v665
      %v667 = vsel %vm637, %v636, 0.0
      %v668 = vadd.f32 %v666, %v667
      %v669 = vrot.slane %v668, 4
      %v670 = vadd.f32 %v668, %v669
      %v671 = vrot.slane %v670, 2
      %v672 = vadd.f32 %v670, %v671
      %v673 = vrot.slane %v672, 1
      %v674 = vadd.f32 %v672, %v673
      %vm675 = vcmask 253952
      %676 = vst.msk [vmem:[%s265] sm:$0x1] %vm675, %v674
      %v677 = vmul.f32 %v621, %v621
      %v678 = vmul.f32 %v622, %v622
      %v679 = vmul.f32 %v623, %v623
      %v680 = vmul.f32 %v624, %v624
      %v681 = vmul.f32 %v625, %v625
      %v682 = vmul.f32 %v626, %v626
      %v683 = vmul.f32 %v627, %v627
      %v684 = vmul.f32 %v628, %v628
      %v685 = vmul.f32 %v629, %v629
      %v686 = vmul.f32 %v630, %v630
      %v687 = vmul.f32 %v631, %v631
      %v688 = vmul.f32 %v632, %v632
      %v689 = vmul.f32 %v633, %v633
      %v690 = vmul.f32 %v634, %v634
      %v691 = vmul.f32 %v635, %v635
      %v692 = vmul.f32 %v636, %v636
      %v693 = vsel %vm637, %v677, 0.0
      %v694 = vsel %vm637, %v678, 0.0
      %v695 = vadd.f32 %v693, %v694
      %v696 = vsel %vm637, %v679, 0.0
      %v697 = vadd.f32 %v695, %v696
      %v698 = vsel %vm637, %v680, 0.0
      %v699 = vadd.f32 %v697, %v698
      %v700 = vsel %vm637, %v681, 0.0
      %v701 = vadd.f32 %v699, %v700
      %v702 = vsel %vm637, %v682, 0.0
      %v703 = vadd.f32 %v701, %v702
      %v704 = vsel %vm637, %v683, 0.0
      %v705 = vadd.f32 %v703, %v704
      %v706 = vsel %vm637, %v684, 0.0
      %v707 = vadd.f32 %v705, %v706
      %v708 = vsel %vm637, %v685, 0.0
      %v709 = vadd.f32 %v707, %v708
      %v710 = vsel %vm637, %v686, 0.0
      %v711 = vadd.f32 %v709, %v710
      %v712 = vsel %vm637, %v687, 0.0
      %v713 = vadd.f32 %v711, %v712
      %v714 = vsel %vm637, %v688, 0.0
      %v715 = vadd.f32 %v713, %v714
      %v716 = vsel %vm637, %v689, 0.0
      %v717 = vadd.f32 %v715, %v716
      %v718 = vsel %vm637, %v690, 0.0
      %v719 = vadd.f32 %v717, %v718
      %v720 = vsel %vm637, %v691, 0.0
      %v721 = vadd.f32 %v719, %v720
      %v722 = vsel %vm637, %v692, 0.0
      %v723 = vadd.f32 %v721, %v722
      %v724 = vrot.slane %v723, 4
      %v725 = vadd.f32 %v723, %v724
      %v726 = vrot.slane %v725, 2
      %v727 = vadd.f32 %v725, %v726
      %v728 = vrot.slane %v727, 1
      %v729 = vadd.f32 %v727, %v728
      %730 = vst.msk [vmem:[%s265 + $0x1] sm:$0x1] %vm675, %v729
      %s731 = smul.u32 16, %s18
      %p732 = scmp.lt.s32.totalorder %s731, 63
      %s733 = scalar_select %p732, %s731, 63
      %s734 = smul.addr %s733, 4
      %s735 = scalar_lea.vmem %s5, %s734
      %p736 = scmp.lt.s32.totalorder %s18, 3
      %s737 = scalar_select %p736, %s18, 3
      %s738 = smul.addr %s737, 2
      %s739 = scalar_lea.vmem %s6, %s738
      // Predicated region
      $region41: #{residual50_forward.6} parent=39 // pred_check
        %p740 = pneg %p146
      $region42: #{residual50_forward.6} parent=39 // pred_check_branch
        %742 = sbr.rel (%p740) target = $region44
      $region43: #{residual50_forward.6} parent=39 // pred_region
        %s743 = smul.u32 16, %s18
      $region44: #{residual50_forward.6} parent=39 // pred_fallthru
        _
      // Predicated region
      $region45: #{residual50_forward.6} parent=39 // pred_check
        %p744 = pneg %p172
      $region46: #{residual50_forward.6} parent=39 // pred_check_branch
        %746 = sbr.rel (%p744) target = $region48
      $region47: #{residual50_forward.6} parent=39 // pred_region
        _
      $region48: #{residual50_forward.6} parent=39 // pred_fallthru
        _
    $region40: #{residual50_forward.6} parent=5 // pred_fallthru
      _
    %p747 = scmp.le.s32.totalorder 2, %s13
    // Predicated region
    $region49: #{residual50_forward.6} parent=5 // pred_check
      %p748 = pneg %p747
    $region50: #{residual50_forward.6} parent=5 // pred_check_branch
      %750 = sbr.rel (%p748) target = $region52
    $region51: #{residual50_forward.6} parent=5 // pred_region
      %s751 = ssub.s32 %s13, 2
      // Predicated region
      $region53: #{residual50_forward.6} parent=51 // pred_check
        %p752 = pneg %p152
      $region54: #{residual50_forward.6} parent=51 // pred_check_branch
        %754 = sbr.rel (%p752) target = $region56
      $region55: #{residual50_forward.6} parent=51 // pred_region
        %s755 = smul.u32 16, %s19
        %p756 = scmp.lt.s32.totalorder %s755, 63
        %s757 = scalar_select %p756, %s755, 63
        %s758 = smul.addr %s757, 4
        %s759 = scalar_lea.vmem %s5, %s758
      $region56: #{residual50_forward.6} parent=51 // pred_fallthru
        _
      // Predicated region
      $region57: #{residual50_forward.6} parent=51 // pred_check
        %p760 = pneg %p178
      $region58: #{residual50_forward.6} parent=51 // pred_check_branch
        %762 = sbr.rel (%p760) target = $region60
      $region59: #{residual50_forward.6} parent=51 // pred_region
        %p763 = scmp.lt.s32.totalorder %s19, 3
        %s764 = scalar_select %p763, %s19, 3
        %s765 = smul.addr %s764, 2
        %s766 = scalar_lea.vmem %s6, %s765
      $region60: #{residual50_forward.6} parent=51 // pred_fallthru
        _
    $region52: #{residual50_forward.6} parent=5 // pred_fallthru
      _
  $region6: #{residual50_forward.6} parent=0 // loop_footer
    %s17 = sadd.s32 1, %s13
  $region7: #{residual50_forward.6} parent=0 // loop_footer_branch
    %12 = sbr.rel target = $region3
  $region8: #{residual50_forward.6} parent=0 // loop_exit
    _

// kernel: residual50_forward.7
$region0: #{residual50_forward.7}
  #allocation0 [shape = 'u32[]', space=smem, size = 0x4, offset = 0x4, fixed_abs, tag = 'smem constant byte address 0x4 - core index']
  #allocation1 [shape = 'u32[144,128]{1,0:T(1,128)}', space=vmem, size = 0x12000, scoped, tag = 'internal scratch']
  %s0 = inlined_call_operand.vmem [shape: bf16[512,32], index: 0, kind: input, shape index: {}]
  %s1 = inlined_call_operand.vmem [shape: f32[2,32], index: 1, kind: input, shape index: {}]
  %s2 = inlined_call_operand.vmem [shape: f32[1,32], index: 2, kind: input, shape index: {}]
  %s3 = inlined_call_operand.vmem [shape: f32[1,32], index: 3, kind: input, shape index: {}]
  %s4 = inlined_call_operand.vmem [shape: f32[512,16], index: 4, kind: input, shape index: {}]
  %s5 = inlined_call_operand.vmem [shape: bf16[16,32], index: 5, kind: input, shape index: {}]
  %s6 = inlined_call_operand.vmem [shape: f32[1,32], index: 6, kind: input, shape index: {}]
  %s7 = inlined_call_operand.hbm [shape: f32[512,32], index: 7, kind: output, shape index: {}]
  %s8 = sld [smem:[#allocation0]]
  $region61: #{residual50_forward.7} parent=0
    _
  %s10 = ssub.s32 1, %s8
  %s11 = scalar_select 0, %s10, %s8
  $region1: #{residual50_forward.7} parent=0
    #allocation2 [shape = 'u8[131072]{0}', space=vmem, size = 0x20000, scoped, tag = 'output window, operand 0']
    #allocation3 [shape = 's32[2]{0}', space=sflag, size = 0x8, scoped, tag = 'scoped memory for residual50_forward.7']
    %12 = vsyncpa [#allocation3], 0
    %s13 = scalar_lea.sflag [#allocation3], 1
    %14 = vsyncpa %s13, 0
    loop: start=0, step=1, limit=6
    $region2: #{residual50_forward.7} parent=1 // loop_pre_header
      _
    $region3: #{residual50_forward.7} parent=1 // loop_header
      %s16 = sphi 0, %s20
      %p17 = scmp.ge.s32.totalorder %s16, 6
      %s26 = sphi 0, %s28
      %s29 = sphi 0, %s26
      %s30 = sphi 0, %s29
      %s46 = sphi 0, %s30
      %s50 = sphi 0, %s50
      %s52 = sphi 0, %s50
      %s53 = sphi 0, %s52
      %s67 = sphi 0, %s53
      %s71 = sphi 0, %s71
      %s73 = sphi 0, %s71
      %s74 = sphi 0, %s73
      %s88 = sphi 0, %s74
      %s92 = sphi 0, %s92
      %s94 = sphi 0, %s92
      %s95 = sphi 0, %s94
      %s109 = sphi 0, %s95
      %s115 = sphi 0, %s117
      %s118 = sphi 0, %s115
      %s119 = sphi 0, %s118
      %s135 = sphi 0, %s119
      %s139 = sphi 0, %s139
      %s141 = sphi 0, %s139
      %s142 = sphi 0, %s141
      %s156 = sphi 0, %s142
      %s160 = sphi 0, %s160
      %s162 = sphi 0, %s160
      %s163 = sphi 0, %s162
      %s177 = sphi 0, %s163
      %s183 = sphi 0, %s185
      %s186 = sphi 0, %s183
      %s187 = sphi 0, %s186
      %s203 = sphi 0, %s187
    $region4: #{residual50_forward.7} parent=1 // loop_header_branch
      %19 = sbr.rel (%p17) target = $region8
    $region5: #{residual50_forward.7} parent=1 // loop_body
      %s21 = ssub.s32 %s16, 1
      %s22 = ssub.s32 %s16, 2
      %s23 = sadd.s32 %s16, 1
      %s24 = ssub.s32 %s16, %s23
      %p25 = scmp.eq.s32.totalorder %s24, 0
      %s27 = sadd.s32 %s26, 1
      %s28 = scalar_select %p25, %s26, %s27
      %p31 = pneg %p25
      %p32 = scmp.eq.s32.totalorder %s16, 3
      %p33 = por %p31, %p32
      %p34 = scmp.ne.s32.totalorder %s26, %s29
      %p35 = scmp.eq.s32.totalorder %s16, 0
      %p36 = por %p34, %p35
      %p37 = scmp.ne.s32.totalorder %s26, %s29
      %p38 = scmp.eq.s32.totalorder %s21, 3
      %p39 = por %p37, %p38
      %p40 = scmp.ne.s32.totalorder %s29, %s30
      %p41 = scmp.eq.s32.totalorder %s21, 0
      %p42 = por %p40, %p41
      %p43 = scmp.ne.s32.totalorder %s29, %s30
      %p44 = scmp.eq.s32.totalorder %s22, 3
      %p45 = por %p43, %p44
      %p47 = scmp.ne.s32.totalorder %s30, %s46
      %p48 = scmp.eq.s32.totalorder %s22, 0
      %p49 = por %p47, %p48
      %s51 = sadd.s32 %s50, 1
      %p54 = scmp.eq.s32.totalorder %s16, 3
      %p55 = scmp.ne.s32.totalorder %s50, %s52
      %p56 = scmp.eq.s32.totalorder %s16, 0
      %p57 = por %p55, %p56
      %p58 = scmp.ne.s32.totalorder %s50, %s52
      %p59 = scmp.eq.s32.totalorder %s21, 3
      %p60 = por %p58, %p59
      %p61 = scmp.ne.s32.totalorder %s52, %s53
      %p62 = scmp.eq.s32.totalorder %s21, 0
      %p63 = por %p61, %p62
      %p64 = scmp.ne.s32.totalorder %s52, %s53
      %p65 = scmp.eq.s32.totalorder %s22, 3
      %p66 = por %p64, %p65
      %p68 = scmp.ne.s32.totalorder %s53, %s67
      %p69 = scmp.eq.s32.totalorder %s22, 0
      %p70 = por %p68, %p69
      %s72 = sadd.s32 %s71, 1
      %p75 = scmp.eq.s32.totalorder %s16, 3
      %p76 = scmp.ne.s32.totalorder %s71, %s73
      %p77 = scmp.eq.s32.totalorder %s16, 0
      %p78 = por %p76, %p77
      %p79 = scmp.ne.s32.totalorder %s71, %s73
      %p80 = scmp.eq.s32.totalorder %s21, 3
      %p81 = por %p79, %p80
      %p82 = scmp.ne.s32.totalorder %s73, %s74
      %p83 = scmp.eq.s32.totalorder %s21, 0
      %p84 = por %p82, %p83
      %p85 = scmp.ne.s32.totalorder %s73, %s74
      %p86 = scmp.eq.s32.totalorder %s22, 3
      %p87 = por %p85, %p86
      %p89 = scmp.ne.s32.totalorder %s74, %s88
      %p90 = scmp.eq.s32.totalorder %s22, 0
      %p91 = por %p89, %p90
      %s93 = sadd.s32 %s92, 1
      %p96 = scmp.eq.s32.totalorder %s16, 3
      %p97 = scmp.ne.s32.totalorder %s92, %s94
      %p98 = scmp.eq.s32.totalorder %s16, 0
      %p99 = por %p97, %p98
      %p100 = scmp.ne.s32.totalorder %s92, %s94
      %p101 = scmp.eq.s32.totalorder %s21, 3
      %p102 = por %p100, %p101
      %p103 = scmp.ne.s32.totalorder %s94, %s95
      %p104 = scmp.eq.s32.totalorder %s21, 0
      %p105 = por %p103, %p104
      %p106 = scmp.ne.s32.totalorder %s94, %s95
      %p107 = scmp.eq.s32.totalorder %s22, 3
      %p108 = por %p106, %p107
      %p110 = scmp.ne.s32.totalorder %s95, %s109
      %p111 = scmp.eq.s32.totalorder %s22, 0
      %p112 = por %p110, %p111
      %s113 = ssub.s32 %s16, %s23
      %p114 = scmp.eq.s32.totalorder %s113, 0
      %s116 = sadd.s32 %s115, 1
      %s117 = scalar_select %p114, %s115, %s116
      %p120 = pneg %p114
      %p121 = scmp.eq.s32.totalorder %s16, 3
      %p122 = por %p120, %p121
      %p123 = scmp.ne.s32.totalorder %s115, %s118
      %p124 = scmp.eq.s32.totalorder %s16, 0
      %p125 = por %p123, %p124
      %p126 = scmp.ne.s32.totalorder %s115, %s118
      %p127 = scmp.eq.s32.totalorder %s21, 3
      %p128 = por %p126, %p127
      %p129 = scmp.ne.s32.totalorder %s118, %s119
      %p130 = scmp.eq.s32.totalorder %s21, 0
      %p131 = por %p129, %p130
      %p132 = scmp.ne.s32.totalorder %s118, %s119
      %p133 = scmp.eq.s32.totalorder %s22, 3
      %p134 = por %p132, %p133
      %p136 = scmp.ne.s32.totalorder %s119, %s135
      %p137 = scmp.eq.s32.totalorder %s22, 0
      %p138 = por %p136, %p137
      %s140 = sadd.s32 %s139, 1
      %p143 = scmp.eq.s32.totalorder %s16, 3
      %p144 = scmp.ne.s32.totalorder %s139, %s141
      %p145 = scmp.eq.s32.totalorder %s16, 0
      %p146 = por %p144, %p145
      %p147 = scmp.ne.s32.totalorder %s139, %s141
      %p148 = scmp.eq.s32.totalorder %s21, 3
      %p149 = por %p147, %p148
      %p150 = scmp.ne.s32.totalorder %s141, %s142
      %p151 = scmp.eq.s32.totalorder %s21, 0
      %p152 = por %p150, %p151
      %p153 = scmp.ne.s32.totalorder %s141, %s142
      %p154 = scmp.eq.s32.totalorder %s22, 3
      %p155 = por %p153, %p154
      %p157 = scmp.ne.s32.totalorder %s142, %s156
      %p158 = scmp.eq.s32.totalorder %s22, 0
      %p159 = por %p157, %p158
      %s161 = sadd.s32 %s160, 1
      %p164 = scmp.eq.s32.totalorder %s16, 3
      %p165 = scmp.ne.s32.totalorder %s160, %s162
      %p166 = scmp.eq.s32.totalorder %s16, 0
      %p167 = por %p165, %p166
      %p168 = scmp.ne.s32.totalorder %s160, %s162
      %p169 = scmp.eq.s32.totalorder %s21, 3
      %p170 = por %p168, %p169
      %p171 = scmp.ne.s32.totalorder %s162, %s163
      %p172 = scmp.eq.s32.totalorder %s21, 0
      %p173 = por %p171, %p172
      %p174 = scmp.ne.s32.totalorder %s162, %s163
      %p175 = scmp.eq.s32.totalorder %s22, 3
      %p176 = por %p174, %p175
      %p178 = scmp.ne.s32.totalorder %s163, %s177
      %p179 = scmp.eq.s32.totalorder %s22, 0
      %p180 = por %p178, %p179
      %s181 = ssub.s32 %s16, %s23
      %p182 = scmp.eq.s32.totalorder %s181, 0
      %s184 = sadd.s32 %s183, 1
      %s185 = scalar_select %p182, %s183, %s184
      %p188 = pneg %p182
      %p189 = scmp.eq.s32.totalorder %s16, 3
      %p190 = por %p188, %p189
      %p191 = scmp.ne.s32.totalorder %s183, %s186
      %p192 = scmp.eq.s32.totalorder %s16, 0
      %p193 = por %p191, %p192
      %p194 = scmp.ne.s32.totalorder %s183, %s186
      %p195 = scmp.eq.s32.totalorder %s21, 3
      %p196 = por %p194, %p195
      %p197 = scmp.ne.s32.totalorder %s186, %s187
      %p198 = scmp.eq.s32.totalorder %s21, 0
      %p199 = por %p197, %p198
      %p200 = scmp.ne.s32.totalorder %s186, %s187
      %p201 = scmp.eq.s32.totalorder %s22, 3
      %p202 = por %p200, %p201
      %p204 = scmp.ne.s32.totalorder %s187, %s203
      %p205 = scmp.eq.s32.totalorder %s22, 0
      %p206 = por %p204, %p205
      %p207 = scmp.le.s32.totalorder 1, %s16
      %p208 = scmp.lt.s32.totalorder %s16, 5
      %p209 = pnand %p207, %p208
      %p210 = pneg %p209
      // Predicated region
      $region9: #{residual50_forward.7} parent=5 // pred_check
        _
      $region10: #{residual50_forward.7} parent=5 // pred_check_branch
        %212 = sbr.rel (%p209) target = $region12
      $region11: #{residual50_forward.7} parent=5 // pred_region
        %s213 = ssub.s32 %s16, 1
        // Predicated region
        $region13: #{residual50_forward.7} parent=11 // pred_check
          %p214 = pneg %p63
        $region14: #{residual50_forward.7} parent=11 // pred_check_branch
          %216 = sbr.rel (%p214) target = $region16
        $region15: #{residual50_forward.7} parent=11 // pred_region
          _
        $region16: #{residual50_forward.7} parent=11 // pred_fallthru
          _
        // Predicated region
        $region17: #{residual50_forward.7} parent=11 // pred_check
          %p217 = pneg %p84
        $region18: #{residual50_forward.7} parent=11 // pred_check_branch
          %219 = sbr.rel (%p217) target = $region20
        $region19: #{residual50_forward.7} parent=11 // pred_region
          _
        $region20: #{residual50_forward.7} parent=11 // pred_fallthru
          _
        // Predicated region
        $region21: #{residual50_forward.7} parent=11 // pred_check
          %p220 = pneg %p105
        $region22: #{residual50_forward.7} parent=11 // pred_check_branch
          %222 = sbr.rel (%p220) target = $region24
        $region23: #{residual50_forward.7} parent=11 // pred_region
          _
        $region24: #{residual50_forward.7} parent=11 // pred_fallthru
          _
        // Predicated region
        $region25: #{residual50_forward.7} parent=11 // pred_check
          %p223 = pneg %p152
        $region26: #{residual50_forward.7} parent=11 // pred_check_branch
          %225 = sbr.rel (%p223) target = $region28
        $region27: #{residual50_forward.7} parent=11 // pred_region
          _
        $region28: #{residual50_forward.7} parent=11 // pred_fallthru
          _
        // Predicated region
        $region29: #{residual50_forward.7} parent=11 // pred_check
          %p226 = pneg %p173
        $region30: #{residual50_forward.7} parent=11 // pred_check_branch
          %228 = sbr.rel (%p226) target = $region32
        $region31: #{residual50_forward.7} parent=11 // pred_region
          _
        $region32: #{residual50_forward.7} parent=11 // pred_fallthru
          _
      $region12: #{residual50_forward.7} parent=5 // pred_fallthru
        _
      %p229 = scmp.lt.s32.totalorder %s16, 4
      // Predicated region
      $region33: #{residual50_forward.7} parent=5 // pred_check
        %p230 = pneg %p229
      $region34: #{residual50_forward.7} parent=5 // pred_check_branch
        %232 = sbr.rel (%p230) target = $region36
      $region35: #{residual50_forward.7} parent=5 // pred_region
        // Predicated region
        $region37: #{residual50_forward.7} parent=35 // pred_check
          %p233 = pneg %p36
        $region38: #{residual50_forward.7} parent=35 // pred_check_branch
          %235 = sbr.rel (%p233) target = $region40
        $region39: #{residual50_forward.7} parent=35 // pred_region
          %s236 = smul.u32 16, %s16
          %p237 = scmp.lt.s32.totalorder %s236, 63
          %s238 = scalar_select %p237, %s236, 63
          %s239 = smul.addr %s238, 4
          %s240 = scalar_lea.vmem %s0, %s239
          %s241 = smul.u32 16, %s16
        $region40: #{residual50_forward.7} parent=35 // pred_fallthru
          _
        // Predicated region
        $region41: #{residual50_forward.7} parent=35 // pred_check
          %p242 = pneg %p125
        $region42: #{residual50_forward.7} parent=35 // pred_check_branch
          %244 = sbr.rel (%p242) target = $region44
        $region43: #{residual50_forward.7} parent=35 // pred_region
          %s245 = smul.u32 16, %s16
          %p246 = scmp.lt.s32.totalorder %s245, 63
          %s247 = scalar_select %p246, %s245, 63
          %s248 = smul.addr %s247, 8
          %s249 = scalar_lea.vmem %s4, %s248
          %s250 = smul.u32 16, %s16
        $region44: #{residual50_forward.7} parent=35 // pred_fallthru
          _
      $region36: #{residual50_forward.7} parent=5 // pred_fallthru
        _
      %p251 = scmp.le.s32.totalorder 1, %s16
      %p252 = scmp.lt.s32.totalorder %s16, 5
      %p253 = pnand %p251, %p252
      %p254 = pneg %p253
      // Predicated region
      $region45: #{residual50_forward.7} parent=5 // pred_check
        _
      $region46: #{residual50_forward.7} parent=5 // pred_check_branch
        %256 = sbr.rel (%p253) target = $region48
      $region47: #{residual50_forward.7} parent=5 // pred_region
        %s257 = ssub.s32 %s16, 1
        %s258 = smul.u32 16, %s21
        %p259 = scmp.lt.s32.totalorder %s258, 63
        %s260 = scalar_select %p259, %s258, 63
        %s261 = smul.addr %s260, 4
        %s262 = scalar_lea.vmem %s0, %s261
        %p263 = pneg %p42
        %p264 = pneg %p39
        %p265 = pneg %p63
        %p266 = pneg %p60
        %p267 = pneg %p84
        %p268 = pneg %p81
        %p269 = pneg %p105
        %p270 = pneg %p102
        %s271 = smul.u32 16, %s21
        %p272 = scmp.lt.s32.totalorder %s271, 63
        %s273 = scalar_select %p272, %s271, 63
        %s274 = smul.addr %s273, 8
        %s275 = scalar_lea.vmem %s4, %s274
        %p276 = pneg %p131
        %p277 = pneg %p128
        %p278 = pneg %p152
        %p279 = pneg %p149
        %p280 = pneg %p173
        %p281 = pneg %p170
        %p282 = pneg %p199
        %p283 = pneg %p196
        %s284 = sand.u32 %s186, 1
        %s285 = scalar_lea.sflag [#allocation3], %s284
        %s286 = sand.u32 %s186, 1
        %s287 = smul.addr %s286, 128
        %s288 = scalar_lea.vmem [#allocation2], %s287
        %s289 = smul.u32 16, %s21
        %p290 = scmp.lt.s32.totalorder %s289, 63
        %s291 = scalar_select %p290, %s289, 63
        %s292 = smul.addr %s291, 4
        %s293 = scalar_lea.vmem %s0, %s292
        %s294 = smul.u32 16, %s21
        %s295 = smul.u32 16, %s21
        %p296 = scmp.lt.s32.totalorder %s295, 63
        %s297 = scalar_select %p296, %s295, 63
        %s298 = smul.addr %s297, 8
        %s299 = scalar_lea.vmem %s4, %s298
        %s300 = smul.u32 16, %s21
        %s301 = smul.u32 16, %s21
        %v303 = vld [vmem:[%s1] sm:$0x1]
        %v304 = vmul.f32 %v303, 0.001953125
        %v305 = vld [vmem:[%s1 + $0x1] sm:$0x1]
        %v306 = vmul.f32 %v305, 0.001953125
        %v307 = vmul.f32 %v304, %v304
        %v308 = vsub.f32 %v306, %v307
        %v309 = vmax.f32 %v308, 0.0
        %v310 = vadd.f32 %v309, 1e-05
        %v311 = vrsqrt.pop %v310
        %v312 = vld [vmem:[%s2] sm:$0x1]
        %v313 = vmul.f32 %v311, %v312
        %v314 = vld [vmem:[%s293] sm:$0xf]
        %v315 = vld [vmem:[%s293 + $0x4] sm:$0xf]
        %v316 = vld [vmem:[%s293 + $0x8] sm:$0xf]
        %v317 = vld [vmem:[%s293 + $0xc] sm:$0xf]
        %v318 = vld [vmem:[%s293 + $0x10] sm:$0xf]
        %v319 = vld [vmem:[%s293 + $0x14] sm:$0xf]
        %v320 = vld [vmem:[%s293 + $0x18] sm:$0xf]
        %v321 = vld [vmem:[%s293 + $0x1c] sm:$0xf]
        %v322 = vld [vmem:[%s293 + $0x20] sm:$0xf]
        %v323 = vld [vmem:[%s293 + $0x24] sm:$0xf]
        %v324 = vld [vmem:[%s293 + $0x28] sm:$0xf]
        %v325 = vld [vmem:[%s293 + $0x2c] sm:$0xf]
        %v326 = vld [vmem:[%s293 + $0x30] sm:$0xf]
        %v327 = vld [vmem:[%s293 + $0x34] sm:$0xf]
        %v328 = vld [vmem:[%s293 + $0x38] sm:$0xf]
        %v329 = vld [vmem:[%s293 + $0x3c] sm:$0xf]
        %v330 = vunpack.c.l.bf16 %v314
        %v331 = vunpack.c.l.bf16 %v315
        %v332 = vunpack.c.l.bf16 %v316
        %v333 = vunpack.c.l.bf16 %v317
        %v334 = vunpack.c.l.bf16 %v318
        %v335 = vunpack.c.l.bf16 %v319
        %v336 = vunpack.c.l.bf16 %v320
        %v337 = vunpack.c.l.bf16 %v321
        %v338 = vunpack.c.l.bf16 %v322
        %v339 = vunpack.c.l.bf16 %v323
        %v340 = vunpack.c.l.bf16 %v324
        %v341 = vunpack.c.l.bf16 %v325
        %v342 = vunpack.c.l.bf16 %v326
        %v343 = vunpack.c.l.bf16 %v327
        %v344 = vunpack.c.l.bf16 %v328
        %v345 = vunpack.c.l.bf16 %v329
        %v346 = vlaneseq
        %v347 = vshrl.u32 %v346, 7
        %v348 = vsub.s32 0, %v347
        %v349 = vrot.slane %v313, %v348
        %v350 = vmul.f32 %v330, %v349
        %v351 = vmul.f32 %v331, %v349
        %v352 = vmul.f32 %v332, %v349
        %v353 = vmul.f32 %v333, %v349
        %v354 = vmul.f32 %v334, %v349
        %v355 = vmul.f32 %v335, %v349
        %v356 = vmul.f32 %v336, %v349
        %v357 = vmul.f32 %v337, %v349
        %v358 = vmul.f32 %v338, %v349
        %v359 = vmul.f32 %v339, %v349
        %v360 = vmul.f32 %v340, %v349
        %v361 = vmul.f32 %v341, %v349
        %v362 = vmul.f32 %v342, %v349
        %v363 = vmul.f32 %v343, %v349
        %v364 = vmul.f32 %v344, %v349
        %v365 = vmul.f32 %v345, %v349
        %v366 = vld [vmem:[%s3] sm:$0x1]
        %v367 = vmul.f32 %v304, %v313
        %v368 = vsub.f32 %v366, %v367
        %v370 = vlaneseq
        %v371 = vshrl.u32 %v370, 7
        %v372 = vsub.s32 0, %v371
        %v373 = vrot.slane %v368, %v372
        %v375 = vadd.f32 %v350, %v373
        %v376 = vadd.f32 %v351, %v373
        %v377 = vadd.f32 %v352, %v373
        %v378 = vadd.f32 %v353, %v373
        %v379 = vadd.f32 %v354, %v373
        %v380 = vadd.f32 %v355, %v373
        %v381 = vadd.f32 %v356, %v373
        %v382 = vadd.f32 %v357, %v373
        %v383 = vadd.f32 %v358, %v373
        %v384 = vadd.f32 %v359, %v373
        %v385 = vadd.f32 %v360, %v373
        %v386 = vadd.f32 %v361, %v373
        %v387 = vadd.f32 %v362, %v373
        %v388 = vadd.f32 %v363, %v373
        %v389 = vadd.f32 %v364, %v373
        %v390 = vadd.f32 %v365, %v373
        %v391 = vld [vmem:[%s299] sm:$0xff]
        %v392 = vld [vmem:[%s299 + $0x8] sm:$0xff]
        %v393 = vld [vmem:[%s299 + $0x10] sm:$0xff]
        %v394 = vld [vmem:[%s299 + $0x18] sm:$0xff]
        %v395 = vld [vmem:[%s299 + $0x20] sm:$0xff]
        %v396 = vld [vmem:[%s299 + $0x28] sm:$0xff]
        %v397 = vld [vmem:[%s299 + $0x30] sm:$0xff]
        %v398 = vld [vmem:[%s299 + $0x38] sm:$0xff]
        %v399 = vld [vmem:[%s299 + $0x40] sm:$0xff]
        %v400 = vld [vmem:[%s299 + $0x48] sm:$0xff]
        %v401 = vld [vmem:[%s299 + $0x50] sm:$0xff]
        %v402 = vld [vmem:[%s299 + $0x58] sm:$0xff]
        %v403 = vld [vmem:[%s299 + $0x60] sm:$0xff]
        %v404 = vld [vmem:[%s299 + $0x68] sm:$0xff]
        %v405 = vld [vmem:[%s299 + $0x70] sm:$0xff]
        %v406 = vld [vmem:[%s299 + $0x78] sm:$0xff]
        %v407 = vpack.c.bf16 %v392, %v391
        %v408 = vpack.c.bf16 %v394, %v393
        %v409 = vpack.c.bf16 %v396, %v395
        %v410 = vpack.c.bf16 %v398, %v397
        %v411 = vpack.c.bf16 %v400, %v399
        %v412 = vpack.c.bf16 %v402, %v401
        %v413 = vpack.c.bf16 %v404, %v403
        %v414 = vpack.c.bf16 %v406, %v405
        %v415 = vld [vmem:[%s5] sm:$0xf]
        %v416 = vld [vmem:[%s5 + $0x4] sm:$0xf]
        %v417 = vld [vmem:[%s6] sm:$0x1]
        %v419 = vlaneseq
        %v420 = vshrl.u32 %v419, 7
        %v421 = vsub.s32 0, %v420
        %v422 = vrot.slane %v417, %v421
        %v426 = vunpack.c.l.b16 %v415
        %v427 = vunpack.c.l.b16 %v416
        %v428 = vpack.c.b16 %v427, %v426
        %vm430 = vcmask 130048
        %v432 = vsel %vm430, %v407, 0
        %v435 = vsel %vm430, %v408, 0
        %v438 = vsel %vm430, %v409, 0
        %v441 = vsel %vm430, %v410, 0
        %v444 = vsel %vm430, %v411, 0
        %v447 = vsel %vm430, %v412, 0
        %v450 = vsel %vm430, %v413, 0
        %v453 = vsel %vm430, %v414, 0
        %455 = vmatprep.subr.bf16.mxu0 0
        %456 = vmatpush1.bf16.msra.mxu0 %v428
        %457 = vmatprep.subr.bf16.mxu0 0
        %458 = vmatpush1.bf16.msra.mxu0 0
        %459 = vmatprep.subr.bf16.mxu0 0
        %460 = vmatpush1.bf16.msra.mxu0 0
        %461 = vmatprep.subr.bf16.mxu0 0
        %462 = vmatpush1.bf16.msra.mxu0 0
        %463 = vmatprep.subr.bf16.mxu0 0
        %464 = vmatpush1.bf16.msra.mxu0 0
        %465 = vmatprep.subr.bf16.mxu0 0
        %466 = vmatpush1.bf16.msra.mxu0 0
        %467 = vmatprep.subr.bf16.mxu0 0
        %468 = vmatpush1.bf16.msra.mxu0 0
        %469 = vmatprep.subr.bf16.mxu0 0
        %470 = vmatpush1.bf16.msra.mxu0 0
        %471 = vmatprep.subr.bf16.mxu0 0
        %472 = vmatpush1.bf16.msra.mxu0 0
        %473 = vmatprep.subr.bf16.mxu0 0
        %474 = vmatpush1.bf16.msra.mxu0 0
        %475 = vmatprep.subr.bf16.mxu0 0
        %476 = vmatpush1.bf16.msra.mxu0 0
        %477 = vmatprep.subr.bf16.mxu0 0
        %478 = vmatpush1.bf16.msra.mxu0 0
        %479 = vmatprep.subr.bf16.mxu0 0
        %480 = vmatpush1.bf16.msra.mxu0 0
        %481 = vmatprep.subr.bf16.mxu0 0
        %482 = vmatpush1.bf16.msra.mxu0 0
        %483 = vmatprep.subr.bf16.mxu0 0
        %484 = vmatpush1.bf16.msra.mxu0 0
        %485 = vmatprep.subr.bf16.mxu0 0
        %486 = vmatpush1.bf16.msra.mxu0 0
        %487 = vmatprep.mubr.bf16.mxu0 0
        %488 = vmatmul.mubr.bf16.gmra.mrb[0].mxu0 %v432
        %v489 = vpop.f32.mrb[0].mxu0
        %v490 = vadd.f32 %v422, %v489
        %v491 = vpop.f32.mrb[0].mxu0
        %v492 = vpop.f32.mrb[0].mxu0
        %v493 = vadd.f32 %v422, %v492
        %v494 = vpop.f32.mrb[0].mxu0
        %495 = vmatprep.mubr.bf16.mxu0 0
        %496 = vmatmul.mubr.bf16.gmra.mrb[0].mxu0 %v435
        %v497 = vpop.f32.mrb[0].mxu0
        %v498 = vadd.f32 %v422, %v497
        %v499 = vpop.f32.mrb[0].mxu0
        %v500 = vpop.f32.mrb[0].mxu0
        %v501 = vadd.f32 %v422, %v500
        %v502 = vpop.f32.mrb[0].mxu0
        %503 = vmatprep.mubr.bf16.mxu0 0
        %504 = vmatmul.mubr.bf16.gmra.mrb[0].mxu0 %v438
        %v505 = vpop.f32.mrb[0].mxu0
        %v506 = vadd.f32 %v422, %v505
        %v507 = vpop.f32.mrb[0].mxu0
        %v508 = vpop.f32.mrb[0].mxu0
        %v509 = vadd.f32 %v422, %v508
        %v510 = vpop.f32.mrb[0].mxu0
        %511 = vmatprep.mubr.bf16.mxu0 0
        %512 = vmatmul.mubr.bf16.gmra.mrb[0].mxu0 %v441
        %v513 = vpop.f32.mrb[0].mxu0
        %v514 = vadd.f32 %v422, %v513
        %v515 = vpop.f32.mrb[0].mxu0
        %v516 = vpop.f32.mrb[0].mxu0
        %v517 = vadd.f32 %v422, %v516
        %v518 = vpop.f32.mrb[0].mxu0
        %519 = vmatprep.mubr.bf16.mxu0 0
        %520 = vmatmul.mubr.bf16.gmra.mrb[0].mxu0 %v444
        %v521 = vpop.f32.mrb[0].mxu0
        %v522 = vadd.f32 %v422, %v521
        %v523 = vpop.f32.mrb[0].mxu0
        %v524 = vpop.f32.mrb[0].mxu0
        %v525 = vadd.f32 %v422, %v524
        %v526 = vpop.f32.mrb[0].mxu0
        %527 = vmatprep.mubr.bf16.mxu0 0
        %528 = vmatmul.mubr.bf16.gmra.mrb[0].mxu0 %v447
        %v529 = vpop.f32.mrb[0].mxu0
        %v530 = vadd.f32 %v422, %v529
        %v531 = vpop.f32.mrb[0].mxu0
        %v532 = vpop.f32.mrb[0].mxu0
        %v533 = vadd.f32 %v422, %v532
        %v534 = vpop.f32.mrb[0].mxu0
        %535 = vmatprep.mubr.bf16.mxu0 0
        %536 = vmatmul.mubr.bf16.gmra.mrb[0].mxu0 %v450
        %v537 = vpop.f32.mrb[0].mxu0
        %v538 = vadd.f32 %v422, %v537
        %v539 = vpop.f32.mrb[0].mxu0
        %v540 = vpop.f32.mrb[0].mxu0
        %v541 = vadd.f32 %v422, %v540
        %v542 = vpop.f32.mrb[0].mxu0
        %543 = vmatprep.mubr.bf16.mxu0 0
        %544 = vmatmul.mubr.bf16.gmra.mrb[0].mxu0 %v453
        %v545 = vpop.f32.mrb[0].mxu0
        %v546 = vadd.f32 %v422, %v545
        %v547 = vpop.f32.mrb[0].mxu0
        %v548 = vpop.f32.mrb[0].mxu0
        %v549 = vadd.f32 %v422, %v548
        %v550 = vpop.f32.mrb[0].mxu0
        %551 = vdwg.mxu0
        %v552 = vadd.f32 %v375, %v490
        %v553 = vadd.f32 %v376, %v493
        %v554 = vadd.f32 %v377, %v498
        %v555 = vadd.f32 %v378, %v501
        %v556 = vadd.f32 %v379, %v506
        %v557 = vadd.f32 %v380, %v509
        %v558 = vadd.f32 %v381, %v514
        %v559 = vadd.f32 %v382, %v517
        %v560 = vadd.f32 %v383, %v522
        %v561 = vadd.f32 %v384, %v525
        %v562 = vadd.f32 %v385, %v530
        %v563 = vadd.f32 %v386, %v533
        %v564 = vadd.f32 %v387, %v538
        %v565 = vadd.f32 %v388, %v541
        %v566 = vadd.f32 %v389, %v546
        %v567 = vadd.f32 %v390, %v549
        %v568 = vmax.f32 %v552, 0.0
        %v569 = vmax.f32 %v553, 0.0
        %v570 = vmax.f32 %v554, 0.0
        %v571 = vmax.f32 %v555, 0.0
        %v572 = vmax.f32 %v556, 0.0
        %v573 = vmax.f32 %v557, 0.0
        %v574 = vmax.f32 %v558, 0.0
        %v575 = vmax.f32 %v559, 0.0
        %v576 = vmax.f32 %v560, 0.0
        %v577 = vmax.f32 %v561, 0.0
        %v578 = vmax.f32 %v562, 0.0
        %v579 = vmax.f32 %v563, 0.0
        %v580 = vmax.f32 %v564, 0.0
        %v581 = vmax.f32 %v565, 0.0
        %v582 = vmax.f32 %v566, 0.0
        %v583 = vmax.f32 %v567, 0.0
        %vm584 = vcmask 261120
        %585 = vst.msk [vmem:[%s288] sm:$0xff] %vm584, %v568
        %586 = vst.msk [vmem:[%s288 + $0x8] sm:$0xff] %vm584, %v569
        %587 = vst.msk [vmem:[%s288 + $0x10] sm:$0xff] %vm584, %v570
        %588 = vst.msk [vmem:[%s288 + $0x18] sm:$0xff] %vm584, %v571
        %589 = vst.msk [vmem:[%s288 + $0x20] sm:$0xff] %vm584, %v572
        %590 = vst.msk [vmem:[%s288 + $0x28] sm:$0xff] %vm584, %v573
        %591 = vst.msk [vmem:[%s288 + $0x30] sm:$0xff] %vm584, %v574
        %592 = vst.msk [vmem:[%s288 + $0x38] sm:$0xff] %vm584, %v575
        %593 = vst.msk [vmem:[%s288 + $0x40] sm:$0xff] %vm584, %v576
        %594 = vst.msk [vmem:[%s288 + $0x48] sm:$0xff] %vm584, %v577
        %595 = vst.msk [vmem:[%s288 + $0x50] sm:$0xff] %vm584, %v578
        %596 = vst.msk [vmem:[%s288 + $0x58] sm:$0xff] %vm584, %v579
        %597 = vst.msk [vmem:[%s288 + $0x60] sm:$0xff] %vm584, %v580
        %598 = vst.msk [vmem:[%s288 + $0x68] sm:$0xff] %vm584, %v581
        %599 = vst.msk [vmem:[%s288 + $0x70] sm:$0xff] %vm584, %v582
        %600 = vst.msk [vmem:[%s288 + $0x78] sm:$0xff] %vm584, %v583
        %s601 = sand.u32 %s186, 1
        %s602 = scalar_lea.sflag [#allocation3], %s601
        %s603 = sand.u32 %s186, 1
        %s604 = smul.addr %s603, 128
        %s605 = scalar_lea.vmem [#allocation2], %s604
        // Predicated region
        $region49: #{residual50_forward.7} parent=47 // pred_check
          %p606 = pneg %p196
        $region50: #{residual50_forward.7} parent=47 // pred_check_branch
          %608 = sbr.rel (%p606) target = $region52
        $region51: #{residual50_forward.7} parent=47 // pred_region
          %s609 = smul.u32 16, %s21
          %s611 = ssub.s32 2048, 2048
          %612 = vsyncadd %s602, %s611
          %s613 = smul.addr %s609, 128
          %s614 = scalar_lea.hbm %s7, %s613
          %s615 = sshll.u32 %s605, 4
          %s616 = int_to_ptr.vmem [resolvable:$true] %s615
          %621 = dma.vmem_to_hbm [thread:$0]  %s616, 2048, %s614, %s602, 128, 128, 8
        $region52: #{residual50_forward.7} parent=47 // pred_fallthru
          _
      $region48: #{residual50_forward.7} parent=5 // pred_fallthru
        _
      %p622 = scmp.le.s32.totalorder 2, %s16
      // Predicated region
      $region53: #{residual50_forward.7} parent=5 // pred_check
        %p623 = pneg %p622
      $region54: #{residual50_forward.7} parent=5 // pred_check_branch
        %625 = sbr.rel (%p623) target = $region56
      $region55: #{residual50_forward.7} parent=5 // pred_region
        %s626 = ssub.s32 %s16, 2
        // Predicated region
        $region57: #{residual50_forward.7} parent=55 // pred_check
          %p627 = pneg %p202
        $region58: #{residual50_forward.7} parent=55 // pred_check_branch
          %629 = sbr.rel (%p627) target = $region60
        $region59: #{residual50_forward.7} parent=55 // pred_region
          %s630 = sand.u32 %s187, 1
          %s631 = scalar_lea.sflag [#allocation3], %s630
          %s632 = sand.u32 %s187, 1
          %s633 = smul.addr %s632, 128
          %s634 = scalar_lea.vmem [#allocation2], %s633
          %635 = dma.done %s631, 2048
        $region60: #{residual50_forward.7} parent=55 // pred_fallthru
          _
      $region56: #{residual50_forward.7} parent=5 // pred_fallthru
        _
    $region6: #{residual50_forward.7} parent=1 // loop_footer
      %s20 = sadd.s32 1, %s16
    $region7: #{residual50_forward.7} parent=1 // loop_footer_branch
      %15 = sbr.rel target = $region3
    $region8: #{residual50_forward.7} parent=1 // loop_exit
      _
    %636 = vsyncpa [#allocation3], 1
    %s637 = scalar_lea.sflag [#allocation3], 1
    %638 = vsyncpa %s637, 1

// kernel: residual50_forward.5
$region0: #{residual50_forward.5}
  #allocation0 [shape = 'u32[]', space=smem, size = 0x4, offset = 0x4, fixed_abs, tag = 'smem constant byte address 0x4 - core index']
  #allocation1 [shape = 'u32[144,128]{1,0:T(1,128)}', space=vmem, size = 0x12000, scoped, tag = 'internal scratch']
  #allocation2 [shape = 'bf16[18,18,128]{2,1,0:T(8,128)(2,1)}', space=vmem, size = 0x1b000, scoped, tag = 'scratch operand']
  #allocation3 [shape = 'bf16[128,1152]{1,0:T(16,128)(2,1)}', space=vmem, size = 0x48000, scoped, tag = 'scratch operand']
  %s0 = inlined_call_operand.vmem [shape: bf16[2,16,16,128], index: 0, kind: input, shape index: {}]
  %s1 = inlined_call_operand.vmem [shape: f32[2,128], index: 1, kind: input, shape index: {}]
  %s2 = inlined_call_operand.vmem [shape: f32[1,128], index: 2, kind: input, shape index: {}]
  %s3 = inlined_call_operand.vmem [shape: f32[1,128], index: 3, kind: input, shape index: {}]
  %s4 = inlined_call_operand.vmem [shape: bf16[1152,128], index: 4, kind: input, shape index: {}]
  %s5 = inlined_call_operand.vmem [shape: bf16[2,16,16,128], index: 5, kind: output, shape index: {0}]
  %s6 = inlined_call_operand.vmem [shape: f32[2,2,2,128], index: 6, kind: output, shape index: {1}]
  %7 = xla_tuple %s5, %s6
  %s8 = sld [smem:[#allocation0]]
  $region65: #{residual50_forward.5} parent=0
    _
  %s10 = ssub.s32 1, %s8
  %s11 = scalar_select 0, %s10, %s8
  loop: start=0, step=1, limit=6
  $region2: #{residual50_forward.5} parent=0 // loop_pre_header
    _
  $region3: #{residual50_forward.5} parent=0 // loop_header
    %s13 = sphi 0, %s17
    %p14 = scmp.ge.s32.totalorder %s13, 6
    %s20 = sphi 0, %s32
    %s21 = sphi 0, %s28
    %s22 = sphi 0, %s20
    %s23 = sphi 0, %s21
    %s24 = sphi 0, %s22
    %s25 = sphi 0, %s23
    %s35 = sphi 0, %s37
    %s38 = sphi 0, %s35
    %s39 = sphi 0, %s38
    %s55 = sphi 0, %s39
    %s59 = sphi 0, %s59
    %s61 = sphi 0, %s59
    %s62 = sphi 0, %s61
    %s76 = sphi 0, %s62
    %s80 = sphi 0, %s80
    %s82 = sphi 0, %s80
    %s83 = sphi 0, %s82
    %s97 = sphi 0, %s83
    %s101 = sphi 0, %s101
    %s103 = sphi 0, %s101
    %s104 = sphi 0, %s103
    %s118 = sphi 0, %s104
    %s122 = sphi 0, %s122
    %s124 = sphi 0, %s122
    %s125 = sphi 0, %s124
    %s139 = sphi 0, %s125
    %s147 = sphi 0, %s149
    %s150 = sphi 0, %s147
    %s151 = sphi 0, %s150
    %s167 = sphi 0, %s151
    %s175 = sphi 0, %s177
    %s178 = sphi 0, %s175
    %s179 = sphi 0, %s178
    %s195 = sphi 0, %s179
  $region4: #{residual50_forward.5} parent=0 // loop_header_branch
    %16 = sbr.rel (%p14) target = $region8
  $region5: #{residual50_forward.5} parent=0 // loop_body
    %s18 = ssub.s32 %s13, 1
    %s19 = ssub.s32 %s13, 2
    %s26 = sadd.s32 1, %s21
    %p27 = scmp.ge.s32.totalorder %s26, 2
    %s28 = scalar_select %p27, 0, %s26
    %s29 = sadd.s32 1, %s20
    %s30 = scalar_select %p27, %s29, %s20
    %p31 = scmp.ge.s32.totalorder %s30, 2
    %s32 = scalar_select %p31, 0, %s30
    %s33 = ssub.s32 %s20, %s32
    %p34 = scmp.eq.s32.totalorder %s33, 0
    %s36 = sadd.s32 %s35, 1
    %s37 = scalar_select %p34, %s35, %s36
    %p40 = pneg %p34
    %p41 = scmp.eq.s32.totalorder %s13, 3
    %p42 = por %p40, %p41
    %p43 = scmp.ne.s32.totalorder %s35, %s38
    %p44 = scmp.eq.s32.totalorder %s13, 0
    %p45 = por %p43, %p44
    %p46 = scmp.ne.s32.totalorder %s35, %s38
    %p47 = scmp.eq.s32.totalorder %s18, 3
    %p48 = por %p46, %p47
    %p49 = scmp.ne.s32.totalorder %s38, %s39
    %p50 = scmp.eq.s32.totalorder %s18, 0
    %p51 = por %p49, %p50
    %p52 = scmp.ne.s32.totalorder %s38, %s39
    %p53 = scmp.eq.s32.totalorder %s19, 3
    %p54 = por %p52, %p53
    %p56 = scmp.ne.s32.totalorder %s39, %s55
    %p57 = scmp.eq.s32.totalorder %s19, 0
    %p58 = por %p56, %p57
    %s60 = sadd.s32 %s59, 1
    %p63 = scmp.eq.s32.totalorder %s13, 3
    %p64 = scmp.ne.s32.totalorder %s59, %s61
    %p65 = scmp.eq.s32.totalorder %s13, 0
    %p66 = por %p64, %p65
    %p67 = scmp.ne.s32.totalorder %s59, %s61
    %p68 = scmp.eq.s32.totalorder %s18, 3
    %p69 = por %p67, %p68
    %p70 = scmp.ne.s32.totalorder %s61, %s62
    %p71 = scmp.eq.s32.totalorder %s18, 0
    %p72 = por %p70, %p71
    %p73 = scmp.ne.s32.totalorder %s61, %s62
    %p74 = scmp.eq.s32.totalorder %s19, 3
    %p75 = por %p73, %p74
    %p77 = scmp.ne.s32.totalorder %s62, %s76
    %p78 = scmp.eq.s32.totalorder %s19, 0
    %p79 = por %p77, %p78
    %s81 = sadd.s32 %s80, 1
    %p84 = scmp.eq.s32.totalorder %s13, 3
    %p85 = scmp.ne.s32.totalorder %s80, %s82
    %p86 = scmp.eq.s32.totalorder %s13, 0
    %p87 = por %p85, %p86
    %p88 = scmp.ne.s32.totalorder %s80, %s82
    %p89 = scmp.eq.s32.totalorder %s18, 3
    %p90 = por %p88, %p89
    %p91 = scmp.ne.s32.totalorder %s82, %s83
    %p92 = scmp.eq.s32.totalorder %s18, 0
    %p93 = por %p91, %p92
    %p94 = scmp.ne.s32.totalorder %s82, %s83
    %p95 = scmp.eq.s32.totalorder %s19, 3
    %p96 = por %p94, %p95
    %p98 = scmp.ne.s32.totalorder %s83, %s97
    %p99 = scmp.eq.s32.totalorder %s19, 0
    %p100 = por %p98, %p99
    %s102 = sadd.s32 %s101, 1
    %p105 = scmp.eq.s32.totalorder %s13, 3
    %p106 = scmp.ne.s32.totalorder %s101, %s103
    %p107 = scmp.eq.s32.totalorder %s13, 0
    %p108 = por %p106, %p107
    %p109 = scmp.ne.s32.totalorder %s101, %s103
    %p110 = scmp.eq.s32.totalorder %s18, 3
    %p111 = por %p109, %p110
    %p112 = scmp.ne.s32.totalorder %s103, %s104
    %p113 = scmp.eq.s32.totalorder %s18, 0
    %p114 = por %p112, %p113
    %p115 = scmp.ne.s32.totalorder %s103, %s104
    %p116 = scmp.eq.s32.totalorder %s19, 3
    %p117 = por %p115, %p116
    %p119 = scmp.ne.s32.totalorder %s104, %s118
    %p120 = scmp.eq.s32.totalorder %s19, 0
    %p121 = por %p119, %p120
    %s123 = sadd.s32 %s122, 1
    %p126 = scmp.eq.s32.totalorder %s13, 3
    %p127 = scmp.ne.s32.totalorder %s122, %s124
    %p128 = scmp.eq.s32.totalorder %s13, 0
    %p129 = por %p127, %p128
    %p130 = scmp.ne.s32.totalorder %s122, %s124
    %p131 = scmp.eq.s32.totalorder %s18, 3
    %p132 = por %p130, %p131
    %p133 = scmp.ne.s32.totalorder %s124, %s125
    %p134 = scmp.eq.s32.totalorder %s18, 0
    %p135 = por %p133, %p134
    %p136 = scmp.ne.s32.totalorder %s124, %s125
    %p137 = scmp.eq.s32.totalorder %s19, 3
    %p138 = por %p136, %p137
    %p140 = scmp.ne.s32.totalorder %s125, %s139
    %p141 = scmp.eq.s32.totalorder %s19, 0
    %p142 = por %p140, %p141
    %s143 = ssub.s32 %s20, %s32
    %s144 = ssub.s32 %s21, %s28
    %s145 = sor.u32 %s143, %s144
    %p146 = scmp.eq.s32.totalorder %s145, 0
    %s148 = sadd.s32 %s147, 1
    %s149 = scalar_select %p146, %s147, %s148
    %p152 = pneg %p146
    %p153 = scmp.eq.s32.totalorder %s13, 3
    %p154 = por %p152, %p153
    %p155 = scmp.ne.s32.totalorder %s147, %s150
    %p156 = scmp.eq.s32.totalorder %s13, 0
    %p157 = por %p155, %p156
    %p158 = scmp.ne.s32.totalorder %s147, %s150
    %p159 = scmp.eq.s32.totalorder %s18, 3
    %p160 = por %p158, %p159
    %p161 = scmp.ne.s32.totalorder %s150, %s151
    %p162 = scmp.eq.s32.totalorder %s18, 0
    %p163 = por %p161, %p162
    %p164 = scmp.ne.s32.totalorder %s150, %s151
    %p165 = scmp.eq.s32.totalorder %s19, 3
    %p166 = por %p164, %p165
    %p168 = scmp.ne.s32.totalorder %s151, %s167
    %p169 = scmp.eq.s32.totalorder %s19, 0
    %p170 = por %p168, %p169
    %s171 = ssub.s32 %s20, %s32
    %s172 = ssub.s32 %s21, %s28
    %s173 = sor.u32 %s171, %s172
    %p174 = scmp.eq.s32.totalorder %s173, 0
    %s176 = sadd.s32 %s175, 1
    %s177 = scalar_select %p174, %s175, %s176
    %p180 = pneg %p174
    %p181 = scmp.eq.s32.totalorder %s13, 3
    %p182 = por %p180, %p181
    %p183 = scmp.ne.s32.totalorder %s175, %s178
    %p184 = scmp.eq.s32.totalorder %s13, 0
    %p185 = por %p183, %p184
    %p186 = scmp.ne.s32.totalorder %s175, %s178
    %p187 = scmp.eq.s32.totalorder %s18, 3
    %p188 = por %p186, %p187
    %p189 = scmp.ne.s32.totalorder %s178, %s179
    %p190 = scmp.eq.s32.totalorder %s18, 0
    %p191 = por %p189, %p190
    %p192 = scmp.ne.s32.totalorder %s178, %s179
    %p193 = scmp.eq.s32.totalorder %s19, 3
    %p194 = por %p192, %p193
    %p196 = scmp.ne.s32.totalorder %s179, %s195
    %p197 = scmp.eq.s32.totalorder %s19, 0
    %p198 = por %p196, %p197
    %p199 = scmp.le.s32.totalorder 1, %s13
    %p200 = scmp.lt.s32.totalorder %s13, 5
    %p201 = pnand %p199, %p200
    %p202 = pneg %p201
    // Predicated region
    $region9: #{residual50_forward.5} parent=5 // pred_check
      _
    $region10: #{residual50_forward.5} parent=5 // pred_check_branch
      %204 = sbr.rel (%p201) target = $region12
    $region11: #{residual50_forward.5} parent=5 // pred_region
      %s205 = ssub.s32 %s13, 1
      // Predicated region
      $region13: #{residual50_forward.5} parent=11 // pred_check
        %p206 = pneg %p72
      $region14: #{residual50_forward.5} parent=11 // pred_check_branch
        %208 = sbr.rel (%p206) target = $region16
      $region15: #{residual50_forward.5} parent=11 // pred_region
        _
      $region16: #{residual50_forward.5} parent=11 // pred_fallthru
        _
      // Predicated region
      $region17: #{residual50_forward.5} parent=11 // pred_check
        %p209 = pneg %p93
      $region18: #{residual50_forward.5} parent=11 // pred_check_branch
        %211 = sbr.rel (%p209) target = $region20
      $region19: #{residual50_forward.5} parent=11 // pred_region
        _
      $region20: #{residual50_forward.5} parent=11 // pred_fallthru
        _
      // Predicated region
      $region21: #{residual50_forward.5} parent=11 // pred_check
        %p212 = pneg %p114
      $region22: #{residual50_forward.5} parent=11 // pred_check_branch
        %214 = sbr.rel (%p212) target = $region24
      $region23: #{residual50_forward.5} parent=11 // pred_region
        _
      $region24: #{residual50_forward.5} parent=11 // pred_fallthru
        _
      // Predicated region
      $region25: #{residual50_forward.5} parent=11 // pred_check
        %p215 = pneg %p135
      $region26: #{residual50_forward.5} parent=11 // pred_check_branch
        %217 = sbr.rel (%p215) target = $region28
      $region27: #{residual50_forward.5} parent=11 // pred_region
        _
      $region28: #{residual50_forward.5} parent=11 // pred_fallthru
        _
    $region12: #{residual50_forward.5} parent=5 // pred_fallthru
      _
    %p218 = scmp.lt.s32.totalorder %s13, 4
    // Predicated region
    $region29: #{residual50_forward.5} parent=5 // pred_check
      %p219 = pneg %p218
    $region30: #{residual50_forward.5} parent=5 // pred_check_branch
      %221 = sbr.rel (%p219) target = $region32
    $region31: #{residual50_forward.5} parent=5 // pred_region
      // Predicated region
      $region33: #{residual50_forward.5} parent=31 // pred_check
        %p222 = pneg %p45
      $region34: #{residual50_forward.5} parent=31 // pred_check_branch
        %224 = sbr.rel (%p222) target = $region36
      $region35: #{residual50_forward.5} parent=31 // pred_region
        %p225 = scmp.lt.s32.totalorder %s20, 1
        %s226 = scalar_select %p225, %s20, 1
        %s227 = smul.addr %s226, 32
        %s228 = smul.addr %s227, 4
        %s229 = scalar_lea.vmem %s0, %s228
      $region36: #{residual50_forward.5} parent=31 // pred_fallthru
        _
    $region32: #{residual50_forward.5} parent=5 // pred_fallthru
      _
    %p230 = scmp.le.s32.totalorder 1, %s13
    %p231 = scmp.lt.s32.totalorder %s13, 5
    %p232 = pnand %p230, %p231
    %p233 = pneg %p232
    // Predicated region
    $region37: #{residual50_forward.5} parent=5 // pred_check
      _
    $region38: #{residual50_forward.5} parent=5 // pred_check_branch
      %235 = sbr.rel (%p232) target = $region40
    $region39: #{residual50_forward.5} parent=5 // pred_region
      %s236 = ssub.s32 %s13, 1
      %p237 = scmp.lt.s32.totalorder %s22, 1
      %s238 = scalar_select %p237, %s22, 1
      %s239 = smul.addr %s238, 32
      %s240 = smul.addr %s239, 4
      %s241 = scalar_lea.vmem %s0, %s240
      %p242 = pneg %p51
      %p243 = pneg %p48
      %p244 = pneg %p72
      %p245 = pneg %p69
      %p246 = pneg %p93
      %p247 = pneg %p90
      %p248 = pneg %p114
      %p249 = pneg %p111
      %p250 = pneg %p135
      %p251 = pneg %p132
      %p252 = pneg %p163
      %p253 = pneg %p160
      %s254 = smul.u32 8, %s23
      %p255 = scmp.lt.s32.totalorder %s22, 1
      %s256 = scalar_select %p255, %s22, 1
      %p257 = scmp.lt.s32.totalorder %s254, 15
      %s258 = scalar_select %p257, %s254, 15
      %s259 = smul.addr %s258, 2
      %s260 = smul.addr %s256, 32
      %s261 = sadd.s32 %s259, %s260
      %s262 = smul.addr %s261, 4
      %s263 = scalar_lea.vmem %s5, %s262
      %p264 = pneg %p191
      %p265 = pneg %p188
      %p266 = scmp.lt.s32.totalorder %s22, 1
      %s267 = scalar_select %p266, %s22, 1
      %p268 = scmp.lt.s32.totalorder %s23, 1
      %s269 = scalar_select %p268, %s23, 1
      %s270 = smul.addr %s267, 2
      %s271 = sadd.s32 %s269, %s270
      %s272 = smul.addr %s271, 2
      %s273 = scalar_lea.vmem %s6, %s272
      %p274 = scmp.lt.s32.totalorder %s22, 1
      %s275 = scalar_select %p274, %s22, 1
      %s276 = smul.addr %s275, 32
      %s277 = smul.addr %s276, 4
      %s278 = scalar_lea.vmem %s0, %s277
      %s279 = smul.u32 8, %s23
      %p280 = scmp.lt.s32.totalorder %s22, 1
      %s281 = scalar_select %p280, %s22, 1
      %p282 = scmp.lt.s32.totalorder %s279, 15
      %s283 = scalar_select %p282, %s279, 15
      %s284 = smul.addr %s283, 2
      %s285 = smul.addr %s281, 32
      %s286 = sadd.s32 %s284, %s285
      %s287 = smul.addr %s286, 4
      %s288 = scalar_lea.vmem %s5, %s287
      %s289 = smul.u32 8, %s23
      %p290 = scmp.lt.s32.totalorder %s22, 1
      %s291 = scalar_select %p290, %s22, 1
      %p292 = scmp.lt.s32.totalorder %s23, 1
      %s293 = scalar_select %p292, %s23, 1
      %s294 = smul.addr %s291, 2
      %s295 = sadd.s32 %s293, %s294
      %s296 = smul.addr %s295, 2
      %s297 = scalar_lea.vmem %s6, %s296
      %p299 = scmp.eq.s32.totalorder %s23, 0
      // Predicated region
      $region41: #{residual50_forward.5} parent=39 // pred_check
        %p300 = pneg %p299
      $region42: #{residual50_forward.5} parent=39 // pred_check_branch
        %302 = sbr.rel (%p300) target = $region44
      $region43: #{residual50_forward.5} parent=39 // pred_region
        %v303 = vld [vmem:[%s1] sm:$0x1]
        %v304 = vmul.f32 %v303, 0.001953125
        %v305 = vld [vmem:[%s1 + $0x1] sm:$0x1]
        %v306 = vmul.f32 %v305, 0.001953125
        %v307 = vmul.f32 %v304, %v304
        %v308 = vsub.f32 %v306, %v307
        %v309 = vmax.f32 %v308, 0.0
        %v310 = vadd.f32 %v309, 1e-05
        %v311 = vrsqrt.pop %v310
        %v312 = vld [vmem:[%s2] sm:$0x1]
        %v313 = vmul.f32 %v311, %v312
        %v314 = vld [vmem:[%s3] sm:$0x1]
        %v315 = vmul.f32 %v304, %v313
        %v316 = vsub.f32 %v314, %v315
        %317 = vst [vmem:[#allocation2] sm:$0xf] 0
        %318 = vst [vmem:[#allocation2 + $0x4] sm:$0xf] 0
        %319 = vst [vmem:[#allocation2 + $0x8] sm:$0x1] 0
        %320 = vst [vmem:[#allocation2 + $0xc] sm:$0xf] 0
        %321 = vst [vmem:[#allocation2 + $0x10] sm:$0xf] 0
        %322 = vst [vmem:[#allocation2 + $0x14] sm:$0x1] 0
        %323 = vst [vmem:[#allocation2 + $0x18] sm:$0xf] 0
        %324 = vst [vmem:[#allocation2 + $0x1c] sm:$0xf] 0
        %325 = vst [vmem:[#allocation2 + $0x20] sm:$0x1] 0
        %326 = vst [vmem:[#allocation2 + $0x24] sm:$0xf] 0
        %327 = vst [vmem:[#allocation2 + $0x28] sm:$0xf] 0
        %328 = vst [vmem:[#allocation2 + $0x2c] sm:$0x1] 0
        %329 = vst [vmem:[#allocation2 + $0x30] sm:$0xf] 0
        %330 = vst [vmem:[#allocation2 + $0x34] sm:$0xf] 0
        %331 = vst [vmem:[#allocation2 + $0x38] sm:$0x1] 0
        %332 = vst [vmem:[#allocation2 + $0x3c] sm:$0xf] 0
        %333 = vst [vmem:[#allocation2 + $0x40] sm:$0xf] 0
        %334 = vst [vmem:[#allocation2 + $0x44] sm:$0x1] 0
        %335 = vst [vmem:[#allocation2 + $0x48] sm:$0xf] 0
        %336 = vst [vmem:[#allocation2 + $0x4c] sm:$0xf] 0
        %337 = vst [vmem:[#allocation2 + $0x50] sm:$0x1] 0
        %338 = vst [vmem:[#allocation2 + $0x54] sm:$0xf] 0
        %339 = vst [vmem:[#allocation2 + $0x58] sm:$0xf] 0
        %340 = vst [vmem:[#allocation2 + $0x5c] sm:$0x1] 0
        %341 = vst [vmem:[#allocation2 + $0x60] sm:$0xf] 0
        %342 = vst [vmem:[#allocation2 + $0x64] sm:$0xf] 0
        %343 = vst [vmem:[#allocation2 + $0x68] sm:$0x1] 0
        %344 = vst [vmem:[#allocation2 + $0x6c] sm:$0xf] 0
        %345 = vst [vmem:[#allocation2 + $0x70] sm:$0xf] 0
        %346 = vst [vmem:[#allocation2 + $0x74] sm:$0x1] 0
        %347 = vst [vmem:[#allocation2 + $0x78] sm:$0xf] 0
        %348 = vst [vmem:[#allocation2 + $0x7c] sm:$0xf] 0
        %349 = vst [vmem:[#allocation2 + $0x80] sm:$0x1] 0
        %350 = vst [vmem:[#allocation2 + $0x84] sm:$0xf] 0
        %351 = vst [vmem:[#allocation2 + $0x88] sm:$0xf] 0
        %352 = vst [vmem:[#allocation2 + $0x8c] sm:$0x1] 0
        %353 = vst [vmem:[#allocation2 + $0x90] sm:$0xf] 0
        %354 = vst [vmem:[#allocation2 + $0x94] sm:$0xf] 0
        %355 = vst [vmem:[#allocation2 + $0x98] sm:$0x1] 0
        %356 = vst [vmem:[#allocation2 + $0x9c] sm:$0xf] 0
        %357 = vst [vmem:[#allocation2 + $0xa0] sm:$0xf] 0
        %358 = vst [vmem:[#allocation2 + $0xa4] sm:$0x1] 0
        %359 = vst [vmem:[#allocation2 + $0xa8] sm:$0xf] 0
        %360 = vst [vmem:[#allocation2 + $0xac] sm:$0xf] 0
        %361 = vst [vmem:[#allocation2 + $0xb0] sm:$0x1] 0
        %362 = vst [vmem:[#allocation2 + $0xb4] sm:$0xf] 0
        %363 = vst [vmem:[#allocation2 + $0xb8] sm:$0xf] 0
        %364 = vst [vmem:[#allocation2 + $0xbc] sm:$0x1] 0
        %365 = vst [vmem:[#allocation2 + $0xc0] sm:$0xf] 0
        %366 = vst [vmem:[#allocation2 + $0xc4] sm:$0xf] 0
        %367 = vst [vmem:[#allocation2 + $0xc8] sm:$0x1] 0
        %368 = vst [vmem:[#allocation2 + $0xcc] sm:$0xf] 0
        %369 = vst [vmem:[#allocation2 + $0xd0] sm:$0xf] 0
        %370 = vst [vmem:[#allocation2 + $0xd4] sm:$0x1] 0
        %v371 = vld [vmem:[%s278] sm:$0xf]
        %v372 = vld [vmem:[%s278 + $0x4] sm:$0xf]
        %v373 = vld [vmem:[%s278 + $0x8] sm:$0xf]
        %v374 = vld [vmem:[%s278 + $0xc] sm:$0xf]
        %v375 = vld [vmem:[%s278 + $0x10] sm:$0xf]
        %v376 = vld [vmem:[%s278 + $0x14] sm:$0xf]
        %v377 = vld [vmem:[%s278 + $0x18] sm:$0xf]
        %v378 = vld [vmem:[%s278 + $0x1c] sm:$0xf]
        %v379 = vld [vmem:[%s278 + $0x20] sm:$0xf]
        %v380 = vld [vmem:[%s278 + $0x24] sm:$0xf]
        %v381 = vld [vmem:[%s278 + $0x28] sm:$0xf]
        %v382 = vld [vmem:[%s278 + $0x2c] sm:$0xf]
        %v383 = vld [vmem:[%s278 + $0x30] sm:$0xf]
        %v384 = vld [vmem:[%s278 + $0x34] sm:$0xf]
        %v385 = vld [vmem:[%s278 + $0x38] sm:$0xf]
        %v386 = vld [vmem:[%s278 + $0x3c] sm:$0xf]
        %v387 = vunpack.c.l.bf16 %v371
        %v388 = vunpack.c.l.bf16 %v372
        %v389 = vunpack.c.l.bf16 %v373
        %v390 = vunpack.c.l.bf16 %v374
        %v391 = vunpack.c.l.bf16 %v375
        %v392 = vunpack.c.l.bf16 %v376
        %v393 = vunpack.c.l.bf16 %v377
        %v394 = vunpack.c.l.bf16 %v378
        %v395 = vunpack.c.l.bf16 %v379
        %v396 = vunpack.c.l.bf16 %v380
        %v397 = vunpack.c.l.bf16 %v381
        %v398 = vunpack.c.l.bf16 %v382
        %v399 = vunpack.c.l.bf16 %v383
        %v400 = vunpack.c.l.bf16 %v384
        %v401 = vunpack.c.l.bf16 %v385
        %v402 = vunpack.c.l.bf16 %v386
        %v403 = vlaneseq
        %v404 = vshrl.u32 %v403, 7
        %v405 = vsub.s32 0, %v404
        %v406 = vrot.slane %v313, %v405
        %v407 = vmul.f32 %v387, %v406
        %v408 = vmul.f32 %v388, %v406
        %v409 = vmul.f32 %v389, %v406
        %v410 = vmul.f32 %v390, %v406
        %v411 = vmul.f32 %v391, %v406
        %v412 = vmul.f32 %v392, %v406
        %v413 = vmul.f32 %v393, %v406
        %v414 = vmul.f32 %v394, %v406
        %v415 = vmul.f32 %v395, %v406
        %v416 = vmul.f32 %v396, %v406
        %v417 = vmul.f32 %v397, %v406
        %v418 = vmul.f32 %v398, %v406
        %v419 = vmul.f32 %v399, %v406
        %v420 = vmul.f32 %v400, %v406
        %v421 = vmul.f32 %v401, %v406
        %v422 = vmul.f32 %v402, %v406
        %v424 = vlaneseq
        %v425 = vshrl.u32 %v424, 7
        %v426 = vsub.s32 0, %v425
        %v427 = vrot.slane %v316, %v426
        %v429 = vadd.f32 %v407, %v427
        %v430 = vadd.f32 %v408, %v427
        %v431 = vadd.f32 %v409, %v427
        %v432 = vadd.f32 %v410, %v427
        %v433 = vadd.f32 %v411, %v427
        %v434 = vadd.f32 %v412, %v427
        %v435 = vadd.f32 %v413, %v427
        %v436 = vadd.f32 %v414, %v427
        %v437 = vadd.f32 %v415, %v427
        %v438 = vadd.f32 %v416, %v427
        %v439 = vadd.f32 %v417, %v427
        %v440 = vadd.f32 %v418, %v427
        %v441 = vadd.f32 %v419, %v427
        %v442 = vadd.f32 %v420, %v427
        %v443 = vadd.f32 %v421, %v427
        %v444 = vadd.f32 %v422, %v427
        %v445 = vmax.f32 %v429, 0.0
        %v446 = vmax.f32 %v430, 0.0
        %v447 = vmax.f32 %v431, 0.0
        %v448 = vmax.f32 %v432, 0.0
        %v449 = vmax.f32 %v433, 0.0
        %v450 = vmax.f32 %v434, 0.0
        %v451 = vmax.f32 %v435, 0.0
        %v452 = vmax.f32 %v436, 0.0
        %v453 = vmax.f32 %v437, 0.0
        %v454 = vmax.f32 %v438, 0.0
        %v455 = vmax.f32 %v439, 0.0
        %v456 = vmax.f32 %v440, 0.0
        %v457 = vmax.f32 %v441, 0.0
        %v458 = vmax.f32 %v442, 0.0
        %v459 = vmax.f32 %v443, 0.0
        %v460 = vmax.f32 %v444, 0.0
        %v461 = vpack.c.bf16 %v446, %v445
        %v462 = vpack.c.bf16 %v448, %v447
        %v463 = vpack.c.bf16 %v450, %v449
        %v464 = vpack.c.bf16 %v452, %v451
        %v465 = vpack.c.bf16 %v454, %v453
        %v466 = vpack.c.bf16 %v456, %v455
        %v467 = vpack.c.bf16 %v458, %v457
        %v468 = vpack.c.bf16 %v460, %v459
        %v477 = vunpack.c.l.b16 %v461
        %v478 = vunpack.c.h.b16 %v461
        %v479 = vunpack.c.l.b16 %v462
        %v480 = vunpack.c.h.b16 %v462
        %v481 = vunpack.c.l.b16 %v463
        %v482 = vunpack.c.h.b16 %v463
        %v483 = vunpack.c.l.b16 %v464
        %v484 = vunpack.c.h.b16 %v464
        %v485 = vunpack.c.l.b16 %v465
        %v486 = vunpack.c.h.b16 %v465
        %v487 = vunpack.c.l.b16 %v466
        %v488 = vunpack.c.h.b16 %v466
        %v489 = vunpack.c.l.b16 %v467
        %v490 = vunpack.c.h.b16 %v467
        %v491 = vunpack.c.l.b16 %v468
        %v492 = vunpack.c.h.b16 %v468
        %v493 = vpack.c.b16 %v477, %v477
        %v494 = vpack.c.b16 %v478, %v478
        %v495 = vpack.c.b16 %v479, %v479
        %v496 = vpack.c.b16 %v480, %v480
        %v497 = vpack.c.b16 %v481, %v481
        %v498 = vpack.c.b16 %v482, %v482
        %v499 = vpack.c.b16 %v483, %v483
        %v500 = vpack.c.b16 %v484, %v484
        %v501 = vpack.c.b16 %v485, %v485
        %v502 = vpack.c.b16 %v486, %v486
        %v503 = vpack.c.b16 %v487, %v487
        %v504 = vpack.c.b16 %v488, %v488
        %v505 = vpack.c.b16 %v489, %v489
        %v506 = vpack.c.b16 %v490, %v490
        %v507 = vpack.c.b16 %v491, %v491
        %v508 = vpack.c.b16 %v492, %v492
        %vm509 = vsmask.f32 256
        %vm510 = vsmask.f32 4368
        %vm511 = vmor %vm509, %vm510
        %v513 = vshrl.u32 %v493, 16
        %v515 = vrot.slane %v513, 7
        %v516 = vshll.u32 %v493, 16
        %v518 = vor.u32 %v515, %v516
        %v519 = vrot.slane %v515, 4
        %v521 = vshrl.u32 %v494, 16
        %v523 = vrot.slane %v521, 7
        %v524 = vshll.u32 %v494, 16
        %v526 = vor.u32 %v523, %v524
        %v527 = vsel %vm511, %v519, %v526
        %v528 = vrot.slane %v523, 4
        %v530 = vshrl.u32 %v495, 16
        %v532 = vrot.slane %v530, 7
        %v533 = vshll.u32 %v495, 16
        %v535 = vor.u32 %v532, %v533
        %v536 = vrot.slane %v532, 4
        %v538 = vshrl.u32 %v496, 16
        %v540 = vrot.slane %v538, 7
        %v541 = vshll.u32 %v496, 16
        %v543 = vor.u32 %v540, %v541
        %v544 = vsel %vm511, %v536, %v543
        %v545 = vrot.slane %v540, 4
        %v547 = vshrl.u32 %v497, 16
        %v549 = vrot.slane %v547, 7
        %v550 = vshll.u32 %v497, 16
        %v552 = vor.u32 %v549, %v550
        %v553 = vrot.slane %v549, 4
        %v555 = vshrl.u32 %v498, 16
        %v557 = vrot.slane %v555, 7
        %v558 = vshll.u32 %v498, 16
        %v560 = vor.u32 %v557, %v558
        %v561 = vsel %vm511, %v553, %v560
        %v562 = vrot.slane %v557, 4
        %v564 = vshrl.u32 %v499, 16
        %v566 = vrot.slane %v564, 7
        %v567 = vshll.u32 %v499, 16
        %v569 = vor.u32 %v566, %v567
        %v570 = vrot.slane %v566, 4
        %v572 = vshrl.u32 %v500, 16
        %v574 = vrot.slane %v572, 7
        %v575 = vshll.u32 %v500, 16
        %v577 = vor.u32 %v574, %v575
        %v578 = vsel %vm511, %v570, %v577
        %v579 = vrot.slane %v574, 4
        %v581 = vshrl.u32 %v501, 16
        %v583 = vrot.slane %v581, 7
        %v584 = vshll.u32 %v501, 16
        %v586 = vor.u32 %v583, %v584
        %v587 = vrot.slane %v583, 4
        %v589 = vshrl.u32 %v502, 16
        %v591 = vrot.slane %v589, 7
        %v592 = vshll.u32 %v502, 16
        %v594 = vor.u32 %v591, %v592
        %v595 = vsel %vm511, %v587, %v594
        %v596 = vrot.slane %v591, 4
        %v598 = vshrl.u32 %v503, 16
        %v600 = vrot.slane %v598, 7
        %v601 = vshll.u32 %v503, 16
        %v603 = vor.u32 %v600, %v601
        %v604 = vrot.slane %v600, 4
        %v606 = vshrl.u32 %v504, 16
        %v608 = vrot.slane %v606, 7
        %v609 = vshll.u32 %v504, 16
        %v611 = vor.u32 %v608, %v609
        %v612 = vsel %vm511, %v604, %v611
        %v613 = vrot.slane %v608, 4
        %v615 = vshrl.u32 %v505, 16
        %v617 = vrot.slane %v615, 7
        %v618 = vshll.u32 %v505, 16
        %v620 = vor.u32 %v617, %v618
        %v621 = vrot.slane %v617, 4
        %v623 = vshrl.u32 %v506, 16
        %v625 = vrot.slane %v623, 7
        %v626 = vshll.u32 %v506, 16
        %v628 = vor.u32 %v625, %v626
        %v629 = vsel %vm511, %v621, %v628
        %v630 = vrot.slane %v625, 4
        %v632 = vshrl.u32 %v507, 16
        %v634 = vrot.slane %v632, 7
        %v635 = vshll.u32 %v507, 16
        %v637 = vor.u32 %v634, %v635
        %v638 = vrot.slane %v634, 4
        %v640 = vshrl.u32 %v508, 16
        %v642 = vrot.slane %v640, 7
        %v643 = vshll.u32 %v508, 16
        %v645 = vor.u32 %v642, %v643
        %v646 = vsel %vm511, %v638, %v645
        %v647 = vrot.slane %v642, 4
        %s672 = scalar_lea.vmem [#allocation2], 12
        %vm673 = vcmask 1043456
        %vm674 = vsmask.f32 7938
        %vm675 = vmand %vm673, %vm674
        %v676 = vld [vmem:[%s672] sm:$0xf]
        %v677 = vsel %vm675, %v518, %v676
        %678 = vst [vmem:[%s672] sm:$0xf] %v677
        %679 = vst [vmem:[%s672 + $0x4] sm:$0xf] %v527
        %vm680 = vcmask 1040384
        %vm681 = vmand %vm680, %vm509
        %v682 = vld [vmem:[%s672 + $0x8] sm:$0x1]
        %v683 = vsel %vm681, %v528, %v682
        %684 = vst [vmem:[%s672 + $0x8] sm:$0x1] %v683
        %v685 = vld [vmem:[%s672 + $0xc] sm:$0xf]
        %v686 = vsel %vm675, %v535, %v685
        %687 = vst [vmem:[%s672 + $0xc] sm:$0xf] %v686
        %688 = vst [vmem:[%s672 + $0x10] sm:$0xf] %v544
        %v689 = vld [vmem:[%s672 + $0x14] sm:$0x1]
        %v690 = vsel %vm681, %v545, %v689
        %691 = vst [vmem:[%s672 + $0x14] sm:$0x1] %v690
        %v692 = vld [vmem:[%s672 + $0x18] sm:$0xf]
        %v693 = vsel %vm675, %v552, %v692
        %694 = vst [vmem:[%s672 + $0x18] sm:$0xf] %v693
        %695 = vst [vmem:[%s672 + $0x1c] sm:$0xf] %v561
        %v696 = vld [vmem:[%s672 + $0x20] sm:$0x1]
        %v697 = vsel %vm681, %v562, %v696
        %698 = vst [vmem:[%s672 + $0x20] sm:$0x1] %v697
        %v699 = vld [vmem:[%s672 + $0x24] sm:$0xf]
        %v700 = vsel %vm675, %v569, %v699
        %701 = vst [vmem:[%s672 + $0x24] sm:$0xf] %v700
        %702 = vst [vmem:[%s672 + $0x28] sm:$0xf] %v578
        %v703 = vld [vmem:[%s672 + $0x2c] sm:$0x1]
        %v704 = vsel %vm681, %v579, %v703
        %705 = vst [vmem:[%s672 + $0x2c] sm:$0x1] %v704
        %v706 = vld [vmem:[%s672 + $0x30] sm:$0xf]
        %v707 = vsel %vm675, %v586, %v706
        %708 = vst [vmem:[%s672 + $0x30] sm:$0xf] %v707
        %709 = vst [vmem:[%s672 + $0x34] sm:$0xf] %v595
        %v710 = vld [vmem:[%s672 + $0x38] sm:$0x1]
        %v711 = vsel %vm681, %v596, %v710
        %712 = vst [vmem:[%s672 + $0x38] sm:$0x1] %v711
        %v713 = vld [vmem:[%s672 + $0x3c] sm:$0xf]
        %v714 = vsel %vm675, %v603, %v713
        %715 = vst [vmem:[%s672 + $0x3c] sm:$0xf] %v714
        %716 = vst [vmem:[%s672 + $0x40] sm:$0xf] %v612
        %v717 = vld [vmem:[%s672 + $0x44] sm:$0x1]
        %v718 = vsel %vm681, %v613, %v717
        %719 = vst [vmem:[%s672 + $0x44] sm:$0x1] %v718
        %v720 = vld [vmem:[%s672 + $0x48] sm:$0xf]
        %v721 = vsel %vm675, %v620, %v720
        %722 = vst [vmem:[%s672 + $0x48] sm:$0xf] %v721
        %723 = vst [vmem:[%s672 + $0x4c] sm:$0xf] %v629
        %v724 = vld [vmem:[%s672 + $0x50] sm:$0x1]
        %v725 = vsel %vm681, %v630, %v724
        %726 = vst [vmem:[%s672 + $0x50] sm:$0x1] %v725
        %v727 = vld [vmem:[%s672 + $0x54] sm:$0xf]
        %v728 = vsel %vm675, %v637, %v727
        %729 = vst [vmem:[%s672 + $0x54] sm:$0xf] %v728
        %730 = vst [vmem:[%s672 + $0x58] sm:$0xf] %v646
        %v731 = vld [vmem:[%s672 + $0x5c] sm:$0x1]
        %v732 = vsel %vm681, %v647, %v731
        %733 = vst [vmem:[%s672 + $0x5c] sm:$0x1] %v732
        %s734 = scalar_lea.vmem %s278, 64
        %v735 = vld [vmem:[%s734] sm:$0xf]
        %v736 = vld [vmem:[%s734 + $0x4] sm:$0xf]
        %v737 = vld [vmem:[%s734 + $0x8] sm:$0xf]
        %v738 = vld [vmem:[%s734 + $0xc] sm:$0xf]
        %v739 = vld [vmem:[%s734 + $0x10] sm:$0xf]
        %v740 = vld [vmem:[%s734 + $0x14] sm:$0xf]
        %v741 = vld [vmem:[%s734 + $0x18] sm:$0xf]
        %v742 = vld [vmem:[%s734 + $0x1c] sm:$0xf]
        %v743 = vld [vmem:[%s734 + $0x20] sm:$0xf]
        %v744 = vld [vmem:[%s734 + $0x24] sm:$0xf]
        %v745 = vld [vmem:[%s734 + $0x28] sm:$0xf]
        %v746 = vld [vmem:[%s734 + $0x2c] sm:$0xf]
        %v747 = vld [vmem:[%s734 + $0x30] sm:$0xf]
        %v748 = vld [vmem:[%s734 + $0x34] sm:$0xf]
        %v749 = vld [vmem:[%s734 + $0x38] sm:$0xf]
        %v750 = vld [vmem:[%s734 + $0x3c] sm:$0xf]
        %v751 = vunpack.c.l.bf16 %v735
        %v752 = vunpack.c.l.bf16 %v736
        %v753 = vunpack.c.l.bf16 %v737
        %v754 = vunpack.c.l.bf16 %v738
        %v755 = vunpack.c.l.bf16 %v739
        %v756 = vunpack.c.l.bf16 %v740
        %v757 = vunpack.c.l.bf16 %v741
        %v758 = vunpack.c.l.bf16 %v742
        %v759 = vunpack.c.l.bf16 %v743
        %v760 = vunpack.c.l.bf16 %v744
        %v761 = vunpack.c.l.bf16 %v745
        %v762 = vunpack.c.l.bf16 %v746
        %v763 = vunpack.c.l.bf16 %v747
        %v764 = vunpack.c.l.bf16 %v748
        %v765 = vunpack.c.l.bf16 %v749
        %v766 = vunpack.c.l.bf16 %v750
        %v767 = vmul.f32 %v751, %v406
        %v768 = vmul.f32 %v752, %v406
        %v769 = vmul.f32 %v753, %v406
        %v770 = vmul.f32 %v754, %v406
        %v771 = vmul.f32 %v755, %v406
        %v772 = vmul.f32 %v756, %v406
        %v773 = vmul.f32 %v757, %v406
        %v774 = vmul.f32 %v758, %v406
        %v775 = vmul.f32 %v759, %v406
        %v776 = vmul.f32 %v760, %v406
        %v777 = vmul.f32 %v761, %v406
        %v778 = vmul.f32 %v762, %v406
        %v779 = vmul.f32 %v763, %v406
        %v780 = vmul.f32 %v764, %v406
        %v781 = vmul.f32 %v765, %v406
        %v782 = vmul.f32 %v766, %v406
        %v783 = vadd.f32 %v767, %v427
        %v784 = vadd.f32 %v768, %v427
        %v785 = vadd.f32 %v769, %v427
        %v786 = vadd.f32 %v770, %v427
        %v787 = vadd.f32 %v771, %v427
        %v788 = vadd.f32 %v772, %v427
        %v789 = vadd.f32 %v773, %v427
        %v790 = vadd.f32 %v774, %v427
        %v791 = vadd.f32 %v775, %v427
        %v792 = vadd.f32 %v776, %v427
        %v793 = vadd.f32 %v777, %v427
        %v794 = vadd.f32 %v778, %v427
        %v795 = vadd.f32 %v779, %v427
        %v796 = vadd.f32 %v780, %v427
        %v797 = vadd.f32 %v781, %v427
        %v798 = vadd.f32 %v782, %v427
        %v799 = vmax.f32 %v783, 0.0
        %v800 = vmax.f32 %v784, 0.0
        %v801 = vmax.f32 %v785, 0.0
        %v802 = vmax.f32 %v786, 0.0
        %v803 = vmax.f32 %v787, 0.0
        %v804 = vmax.f32 %v788, 0.0
        %v805 = vmax.f32 %v789, 0.0
        %v806 = vmax.f32 %v790, 0.0
        %v807 = vmax.f32 %v791, 0.0
        %v808 = vmax.f32 %v792, 0.0
        %v809 = vmax.f32 %v793, 0.0
        %v810 = vmax.f32 %v794, 0.0
        %v811 = vmax.f32 %v795, 0.0
        %v812 = vmax.f32 %v796, 0.0
        %v813 = vmax.f32 %v797, 0.0
        %v814 = vmax.f32 %v798, 0.0
        %v815 = vpack.c.bf16 %v800, %v799
        %v816 = vpack.c.bf16 %v802, %v801
        %v817 = vpack.c.bf16 %v804, %v803
        %v818 = vpack.c.bf16 %v806, %v805
        %v819 = vpack.c.bf16 %v808, %v807
        %v820 = vpack.c.bf16 %v810, %v809
        %v821 = vpack.c.bf16 %v812, %v811
        %v822 = vpack.c.bf16 %v814, %v813
        %v831 = vunpack.c.l.b16 %v815
        %v832 = vunpack.c.h.b16 %v815
        %v833 = vunpack.c.l.b16 %v816
        %v834 = vunpack.c.h.b16 %v816
        %v835 = vunpack.c.l.b16 %v817
        %v836 = vunpack.c.h.b16 %v817
        %v837 = vunpack.c.l.b16 %v818
        %v838 = vunpack.c.h.b16 %v818
        %v839 = vunpack.c.l.b16 %v819
        %v840 = vunpack.c.h.b16 %v819
        %v841 = vunpack.c.l.b16 %v820
        %v842 = vunpack.c.h.b16 %v820
        %v843 = vunpack.c.l.b16 %v821
        %v844 = vunpack.c.h.b16 %v821
        %v845 = vunpack.c.l.b16 %v822
        %v846 = vunpack.c.h.b16 %v822
        %v847 = vpack.c.b16 %v831, %v831
        %v848 = vpack.c.b16 %v832, %v832
        %v849 = vpack.c.b16 %v833, %v833
        %v850 = vpack.c.b16 %v834, %v834
        %v851 = vpack.c.b16 %v835, %v835
        %v852 = vpack.c.b16 %v836, %v836
        %v853 = vpack.c.b16 %v837, %v837
        %v854 = vpack.c.b16 %v838, %v838
        %v855 = vpack.c.b16 %v839, %v839
        %v856 = vpack.c.b16 %v840, %v840
        %v857 = vpack.c.b16 %v841, %v841
        %v858 = vpack.c.b16 %v842, %v842
        %v859 = vpack.c.b16 %v843, %v843
        %v860 = vpack.c.b16 %v844, %v844
        %v861 = vpack.c.b16 %v845, %v845
        %v862 = vpack.c.b16 %v846, %v846
        %v864 = vshrl.u32 %v847, 16
        %v866 = vrot.slane %v864, 7
        %v867 = vshll.u32 %v847, 16
        %v869 = vor.u32 %v866, %v867
        %v870 = vrot.slane %v866, 4
        %v872 = vshrl.u32 %v848, 16
        %v874 = vrot.slane %v872, 7
        %v875 = vshll.u32 %v848, 16
        %v877 = vor.u32 %v874, %v875
        %v878 = vsel %vm511, %v870, %v877
        %v879 = vrot.slane %v874, 4
        %v881 = vshrl.u32 %v849, 16
        %v883 = vrot.slane %v881, 7
        %v884 = vshll.u32 %v849, 16
        %v886 = vor.u32 %v883, %v884
        %v887 = vrot.slane %v883, 4
        %v889 = vshrl.u32 %v850, 16
        %v891 = vrot.slane %v889, 7
        %v892 = vshll.u32 %v850, 16
        %v894 = vor.u32 %v891, %v892
        %v895 = vsel %vm511, %v887, %v894
        %v896 = vrot.slane %v891, 4
        %v898 = vshrl.u32 %v851, 16
        %v900 = vrot.slane %v898, 7
        %v901 = vshll.u32 %v851, 16
        %v903 = vor.u32 %v900, %v901
        %v904 = vrot.slane %v900, 4
        %v906 = vshrl.u32 %v852, 16
        %v908 = vrot.slane %v906, 7
        %v909 = vshll.u32 %v852, 16
        %v911 = vor.u32 %v908, %v909
        %v912 = vsel %vm511, %v904, %v911
        %v913 = vrot.slane %v908, 4
        %v915 = vshrl.u32 %v853, 16
        %v917 = vrot.slane %v915, 7
        %v918 = vshll.u32 %v853, 16
        %v920 = vor.u32 %v917, %v918
        %v921 = vrot.slane %v917, 4
        %v923 = vshrl.u32 %v854, 16
        %v925 = vrot.slane %v923, 7
        %v926 = vshll.u32 %v854, 16
        %v928 = vor.u32 %v925, %v926
        %v929 = vsel %vm511, %v921, %v928
        %v930 = vrot.slane %v925, 4
        %v932 = vshrl.u32 %v855, 16
        %v934 = vrot.slane %v932, 7
        %v935 = vshll.u32 %v855, 16
        %v937 = vor.u32 %v934, %v935
        %v938 = vrot.slane %v934, 4
        %v940 = vshrl.u32 %v856, 16
        %v942 = vrot.slane %v940, 7
        %v943 = vshll.u32 %v856, 16
        %v945 = vor.u32 %v942, %v943
        %v946 = vsel %vm511, %v938, %v945
        %v947 = vrot.slane %v942, 4
        %v949 = vshrl.u32 %v857, 16
        %v951 = vrot.slane %v949, 7
        %v952 = vshll.u32 %v857, 16
        %v954 = vor.u32 %v951, %v952
        %v955 = vrot.slane %v951, 4
        %v957 = vshrl.u32 %v858, 16
        %v959 = vrot.slane %v957, 7
        %v960 = vshll.u32 %v858, 16
        %v962 = vor.u32 %v959, %v960
        %v963 = vsel %vm511, %v955, %v962
        %v964 = vrot.slane %v959, 4
        %v966 = vshrl.u32 %v859, 16
        %v968 = vrot.slane %v966, 7
        %v969 = vshll.u32 %v859, 16
        %v971 = vor.u32 %v968, %v969
        %v972 = vrot.slane %v968, 4
        %v974 = vshrl.u32 %v860, 16
        %v976 = vrot.slane %v974, 7
        %v977 = vshll.u32 %v860, 16
        %v979 = vor.u32 %v976, %v977
        %v980 = vsel %vm511, %v972, %v979
        %v981 = vrot.slane %v976, 4
        %v983 = vshrl.u32 %v861, 16
        %v985 = vrot.slane %v983, 7
        %v986 = vshll.u32 %v861, 16
        %v988 = vor.u32 %v985, %v986
        %v989 = vrot.slane %v985, 4
        %v991 = vshrl.u32 %v862, 16
        %v993 = vrot.slane %v991, 7
        %v994 = vshll.u32 %v862, 16
        %v996 = vor.u32 %v993, %v994
        %v997 = vsel %vm511, %v989, %v996
        %v998 = vrot.slane %v993, 4
        %s1023 = scalar_lea.vmem [#allocation2], 108
        %v1024 = vld [vmem:[%s1023] sm:$0xf]
        %v1025 = vsel %vm675, %v869, %v1024
        %1026 = vst [vmem:[%s1023] sm:$0xf] %v1025
        %1027 = vst [vmem:[%s1023 + $0x4] sm:$0xf] %v878
        %v1028 = vld [vmem:[%s1023 + $0x8] sm:$0x1]
        %v1029 = vsel %vm681, %v879, %v1028
        %1030 = vst [vmem:[%s1023 + $0x8] sm:$0x1] %v1029
        %v1031 = vld [vmem:[%s1023 + $0xc] sm:$0xf]
        %v1032 = vsel %vm675, %v886, %v1031
        %1033 = vst [vmem:[%s1023 + $0xc] sm:$0xf] %v1032
        %1034 = vst [vmem:[%s1023 + $0x10] sm:$0xf] %v895
        %v1035 = vld [vmem:[%s1023 + $0x14] sm:$0x1]
        %v1036 = vsel %vm681, %v896, %v1035
        %1037 = vst [vmem:[%s1023 + $0x14] sm:$0x1] %v1036
        %v1038 = vld [vmem:[%s1023 + $0x18] sm:$0xf]
        %v1039 = vsel %vm675, %v903, %v1038
        %1040 = vst [vmem:[%s1023 + $0x18] sm:$0xf] %v1039
        %1041 = vst [vmem:[%s1023 + $0x1c] sm:$0xf] %v912
        %v1042 = vld [vmem:[%s1023 + $0x20] sm:$0x1]
        %v1043 = vsel %vm681, %v913, %v1042
        %1044 = vst [vmem:[%s1023 + $0x20] sm:$0x1] %v1043
        %v1045 = vld [vmem:[%s1023 + $0x24] sm:$0xf]
        %v1046 = vsel %vm675, %v920, %v1045
        %1047 = vst [vmem:[%s1023 + $0x24] sm:$0xf] %v1046
        %1048 = vst [vmem:[%s1023 + $0x28] sm:$0xf] %v929
        %v1049 = vld [vmem:[%s1023 + $0x2c] sm:$0x1]
        %v1050 = vsel %vm681, %v930, %v1049
        %1051 = vst [vmem:[%s1023 + $0x2c] sm:$0x1] %v1050
        %v1052 = vld [vmem:[%s1023 + $0x30] sm:$0xf]
        %v1053 = vsel %vm675, %v937, %v1052
        %1054 = vst [vmem:[%s1023 + $0x30] sm:$0xf] %v1053
        %1055 = vst [vmem:[%s1023 + $0x34] sm:$0xf] %v946
        %v1056 = vld [vmem:[%s1023 + $0x38] sm:$0x1]
        %v1057 = vsel %vm681, %v947, %v1056
        %1058 = vst [vmem:[%s1023 + $0x38] sm:$0x1] %v1057
        %v1059 = vld [vmem:[%s1023 + $0x3c] sm:$0xf]
        %v1060 = vsel %vm675, %v954, %v1059
        %1061 = vst [vmem:[%s1023 + $0x3c] sm:$0xf] %v1060
        %1062 = vst [vmem:[%s1023 + $0x40] sm:$0xf] %v963
        %v1063 = vld [vmem:[%s1023 + $0x44] sm:$0x1]
        %v1064 = vsel %vm681, %v964, %v1063
        %1065 = vst [vmem:[%s1023 + $0x44] sm:$0x1] %v1064
        %v1066 = vld [vmem:[%s1023 + $0x48] sm:$0xf]
        %v1067 = vsel %vm675, %v971, %v1066
        %1068 = vst [vmem:[%s1023 + $0x48] sm:$0xf] %v1067
        %1069 = vst [vmem:[%s1023 + $0x4c] sm:$0xf] %v980
        %v1070 = vld [vmem:[%s1023 + $0x50] sm:$0x1]
        %v1071 = vsel %vm681, %v981, %v1070
        %1072 = vst [vmem:[%s1023 + $0x50] sm:$0x1] %v1071
        %v1073 = vld [vmem:[%s1023 + $0x54] sm:$0xf]
        %v1074 = vsel %vm675, %v988, %v1073
        %1075 = vst [vmem:[%s1023 + $0x54] sm:$0xf] %v1074
        %1076 = vst [vmem:[%s1023 + $0x58] sm:$0xf] %v997
        %v1077 = vld [vmem:[%s1023 + $0x5c] sm:$0x1]
        %v1078 = vsel %vm681, %v998, %v1077
        %1079 = vst [vmem:[%s1023 + $0x5c] sm:$0x1] %v1078
      $region44: #{residual50_forward.5} parent=39 // pred_fallthru
        _
      %s1080 = smul.u32 %s23, 8
      %s1081 = smul.u32 %s1080, 3
      %s1082 = smul.addr %s1081, 4
      %s1083 = scalar_lea.vmem [#allocation2], %s1082
      %v1084 = vld [vmem:[%s1083] sm:$0xf]
      %v1085 = vld [vmem:[%s1083 + $0x4] sm:$0xf]
      %v1086 = vld [vmem:[%s1083 + $0xc] sm:$0xf]
      %v1087 = vld [vmem:[%s1083 + $0x10] sm:$0xf]
      %v1088 = vld [vmem:[%s1083 + $0x18] sm:$0xf]
      %v1089 = vld [vmem:[%s1083 + $0x1c] sm:$0xf]
      %v1090 = vld [vmem:[%s1083 + $0x24] sm:$0xf]
      %v1091 = vld [vmem:[%s1083 + $0x28] sm:$0xf]
      %v1092 = vld [vmem:[%s1083 + $0x30] sm:$0xf]
      %v1093 = vld [vmem:[%s1083 + $0x34] sm:$0xf]
      %v1094 = vld [vmem:[%s1083 + $0x3c] sm:$0xf]
      %v1095 = vld [vmem:[%s1083 + $0x40] sm:$0xf]
      %v1096 = vld [vmem:[%s1083 + $0x48] sm:$0xf]
      %v1097 = vld [vmem:[%s1083 + $0x4c] sm:$0xf]
      %v1098 = vld [vmem:[%s1083 + $0x54] sm:$0xf]
      %v1099 = vld [vmem:[%s1083 + $0x58] sm:$0xf]
      %v1116 = vunpack.c.l.b16 %v1084
      %v1117 = vunpack.c.l.b16 %v1085
      %v1118 = vunpack.c.l.b16 %v1086
      %v1119 = vunpack.c.l.b16 %v1087
      %v1120 = vunpack.c.l.b16 %v1088
      %v1121 = vunpack.c.l.b16 %v1089
      %v1122 = vunpack.c.l.b16 %v1090
      %v1123 = vunpack.c.l.b16 %v1091
      %v1124 = vunpack.c.l.b16 %v1092
      %v1125 = vunpack.c.l.b16 %v1093
      %v1126 = vunpack.c.l.b16 %v1094
      %v1127 = vunpack.c.l.b16 %v1095
      %v1128 = vunpack.c.l.b16 %v1096
      %v1129 = vunpack.c.l.b16 %v1097
      %v1130 = vunpack.c.l.b16 %v1098
      %v1131 = vunpack.c.l.b16 %v1099
      %v1132 = vpack.c.b16 %v1117, %v1116
      %v1133 = vpack.c.b16 %v1119, %v1118
      %v1134 = vpack.c.b16 %v1121, %v1120
      %v1135 = vpack.c.b16 %v1123, %v1122
      %v1136 = vpack.c.b16 %v1125, %v1124
      %v1137 = vpack.c.b16 %v1127, %v1126
      %v1138 = vpack.c.b16 %v1129, %v1128
      %v1139 = vpack.c.b16 %v1131, %v1130
      %1148 = vst [vmem:[#allocation3] sm:$0xff] %v1132
      %1149 = vst [vmem:[#allocation3 + $0x48] sm:$0xff] %v1133
      %1150 = vst [vmem:[#allocation3 + $0x90] sm:$0xff] %v1134
      %1151 = vst [vmem:[#allocation3 + $0xd8] sm:$0xff] %v1135
      %1152 = vst [vmem:[#allocation3 + $0x120] sm:$0xff] %v1136
      %1153 = vst [vmem:[#allocation3 + $0x168] sm:$0xff] %v1137
      %1154 = vst [vmem:[#allocation3 + $0x1b0] sm:$0xff] %v1138
      %1155 = vst [vmem:[#allocation3 + $0x1f8] sm:$0xff] %v1139
      %v1156 = vld [vmem:[%s1083] sm:$0xf]
      %v1157 = vld [vmem:[%s1083 + $0x4] sm:$0xf]
      %v1158 = vld [vmem:[%s1083 + $0x8] sm:$0x1]
      %v1159 = vld [vmem:[%s1083 + $0xc] sm:$0xf]
      %v1160 = vld [vmem:[%s1083 + $0x10] sm:$0xf]
      %v1161 = vld [vmem:[%s1083 + $0x14] sm:$0x1]
      %v1162 = vld [vmem:[%s1083 + $0x18] sm:$0xf]
      %v1163 = vld [vmem:[%s1083 + $0x1c] sm:$0xf]
      %v1164 = vld [vmem:[%s1083 + $0x20] sm:$0x1]
      %v1165 = vld [vmem:[%s1083 + $0x24] sm:$0xf]
      %v1166 = vld [vmem:[%s1083 + $0x28] sm:$0xf]
      %v1167 = vld [vmem:[%s1083 + $0x2c] sm:$0x1]
      %v1168 = vld [vmem:[%s1083 + $0x30] sm:$0xf]
      %v1169 = vld [vmem:[%s1083 + $0x34] sm:$0xf]
      %v1170 = vld [vmem:[%s1083 + $0x38] sm:$0x1]
      %v1171 = vld [vmem:[%s1083 + $0x3c] sm:$0xf]
      %v1172 = vld [vmem:[%s1083 + $0x40] sm:$0xf]
      %v1173 = vld [vmem:[%s1083 + $0x44] sm:$0x1]
      %v1174 = vld [vmem:[%s1083 + $0x48] sm:$0xf]
      %v1175 = vld [vmem:[%s1083 + $0x4c] sm:$0xf]
      %v1176 = vld [vmem:[%s1083 + $0x50] sm:$0x1]
      %v1177 = vld [vmem:[%s1083 + $0x54] sm:$0xf]
      %v1178 = vld [vmem:[%s1083 + $0x58] sm:$0xf]
      %v1179 = vld [vmem:[%s1083 + $0x5c] sm:$0x1]
      %vm1180 = vsmask.f32 3328
      %vm1181 = vsmask.f32 7440
      %vm1182 = vmor %vm1180, %vm1181
      %v1184 = vshrl.u32 %v1156, 16
      %v1186 = vrot.slane %v1184, 4
      %v1187 = vshll.u32 %v1156, 16
      %v1189 = vrot.slane %v1187, 5
      %v1190 = vor.u32 %v1186, %v1189
      %v1191 = vrot.slane %v1190, 4
      %v1193 = vshll.u32 %v1157, 16
      %v1195 = vrot.slane %v1193, 5
      %v1196 = vsel %vm1182, %v1191, %v1195
      %v1197 = vshrl.u32 %v1157, 16
      %v1199 = vrot.slane %v1197, 4
      %v1200 = vor.u32 %v1199, %v1195
      %v1201 = vrot.slane %v1200, 4
      %v1203 = vshll.u32 %v1158, 16
      %v1205 = vrot.slane %v1203, 5
      %v1206 = vsel %vm1182, %v1201, %v1205
      %v1208 = vshrl.u32 %v1159, 16
      %v1210 = vrot.slane %v1208, 4
      %v1211 = vshll.u32 %v1159, 16
      %v1213 = vrot.slane %v1211, 5
      %v1214 = vor.u32 %v1210, %v1213
      %v1215 = vrot.slane %v1214, 4
      %v1217 = vshll.u32 %v1160, 16
      %v1219 = vrot.slane %v1217, 5
      %v1220 = vsel %vm1182, %v1215, %v1219
      %v1221 = vshrl.u32 %v1160, 16
      %v1223 = vrot.slane %v1221, 4
      %v1224 = vor.u32 %v1223, %v1219
      %v1225 = vrot.slane %v1224, 4
      %v1227 = vshll.u32 %v1161, 16
      %v1229 = vrot.slane %v1227, 5
      %v1230 = vsel %vm1182, %v1225, %v1229
      %v1232 = vshrl.u32 %v1162, 16
      %v1234 = vrot.slane %v1232, 4
      %v1235 = vshll.u32 %v1162, 16
      %v1237 = vrot.slane %v1235, 5
      %v1238 = vor.u32 %v1234, %v1237
      %v1239 = vrot.slane %v1238, 4
      %v1241 = vshll.u32 %v1163, 16
      %v1243 = vrot.slane %v1241, 5
      %v1244 = vsel %vm1182, %v1239, %v1243
      %v1245 = vshrl.u32 %v1163, 16
      %v1247 = vrot.slane %v1245, 4
      %v1248 = vor.u32 %v1247, %v1243
      %v1249 = vrot.slane %v1248, 4
      %v1251 = vshll.u32 %v1164, 16
      %v1253 = vrot.slane %v1251, 5
      %v1254 = vsel %vm1182, %v1249, %v1253
      %v1256 = vshrl.u32 %v1165, 16
      %v1258 = vrot.slane %v1256, 4
      %v1259 = vshll.u32 %v1165, 16
      %v1261 = vrot.slane %v1259, 5
      %v1262 = vor.u32 %v1258, %v1261
      %v1263 = vrot.slane %v1262, 4
      %v1265 = vshll.u32 %v1166, 16
      %v1267 = vrot.slane %v1265, 5
      %v1268 = vsel %vm1182, %v1263, %v1267
      %v1269 = vshrl.u32 %v1166, 16
      %v1271 = vrot.slane %v1269, 4
      %v1272 = vor.u32 %v1271, %v1267
      %v1273 = vrot.slane %v1272, 4
      %v1275 = vshll.u32 %v1167, 16
      %v1277 = vrot.slane %v1275, 5
      %v1278 = vsel %vm1182, %v1273, %v1277
      %v1280 = vshrl.u32 %v1168, 16
      %v1282 = vrot.slane %v1280, 4
      %v1283 = vshll.u32 %v1168, 16
      %v1285 = vrot.slane %v1283, 5
      %v1286 = vor.u32 %v1282, %v1285
      %v1287 = vrot.slane %v1286, 4
      %v1289 = vshll.u32 %v1169, 16
      %v1291 = vrot.slane %v1289, 5
      %v1292 = vsel %vm1182, %v1287, %v1291
      %v1293 = vshrl.u32 %v1169, 16
      %v1295 = vrot.slane %v1293, 4
      %v1296 = vor.u32 %v1295, %v1291
      %v1297 = vrot.slane %v1296, 4
      %v1299 = vshll.u32 %v1170, 16
      %v1301 = vrot.slane %v1299, 5
      %v1302 = vsel %vm1182, %v1297, %v1301
      %v1304 = vshrl.u32 %v1171, 16
      %v1306 = vrot.slane %v1304, 4
      %v1307 = vshll.u32 %v1171, 16
      %v1309 = vrot.slane %v1307, 5
      %v1310 = vor.u32 %v1306, %v1309
      %v1311 = vrot.slane %v1310, 4
      %v1313 = vshll.u32 %v1172, 16
      %v1315 = vrot.slane %v1313, 5
      %v1316 = vsel %vm1182, %v1311, %v1315
      %v1317 = vshrl.u32 %v1172, 16
      %v1319 = vrot.slane %v1317, 4
      %v1320 = vor.u32 %v1319, %v1315
      %v1321 = vrot.slane %v1320, 4
      %v1323 = vshll.u32 %v1173, 16
      %v1325 = vrot.slane %v1323, 5
      %v1326 = vsel %vm1182, %v1321, %v1325
      %v1328 = vshrl.u32 %v1174, 16
      %v1330 = vrot.slane %v1328, 4
      %v1331 = vshll.u32 %v1174, 16
      %v1333 = vrot.slane %v1331, 5
      %v1334 = vor.u32 %v1330, %v1333
      %v1335 = vrot.slane %v1334, 4
      %v1337 = vshll.u32 %v1175, 16
      %v1339 = vrot.slane %v1337, 5
      %v1340 = vsel %vm1182, %v1335, %v1339
      %v1341 = vshrl.u32 %v1175, 16
      %v1343 = vrot.slane %v1341, 4
      %v1344 = vor.u32 %v1343, %v1339
      %v1345 = vrot.slane %v1344, 4
      %v1347 = vshll.u32 %v1176, 16
      %v1349 = vrot.slane %v1347, 5
      %v1350 = vsel %vm1182, %v1345, %v1349
      %v1352 = vshrl.u32 %v1177, 16
      %v1354 = vrot.slane %v1352, 4
      %v1355 = vshll.u32 %v1177, 16
      %v1357 = vrot.slane %v1355, 5
      %v1358 = vor.u32 %v1354, %v1357
      %v1359 = vrot.slane %v1358, 4
      %v1361 = vshll.u32 %v1178, 16
      %v1363 = vrot.slane %v1361, 5
      %v1364 = vsel %vm1182, %v1359, %v1363
      %v1365 = vshrl.u32 %v1178, 16
      %v1367 = vrot.slane %v1365, 4
      %v1368 = vor.u32 %v1367, %v1363
      %v1369 = vrot.slane %v1368, 4
      %v1371 = vshll.u32 %v1179, 16
      %v1373 = vrot.slane %v1371, 5
      %v1374 = vsel %vm1182, %v1369, %v1373
      %v1375 = vunpack.c.l.b16 %v1196
      %v1376 = vunpack.c.l.b16 %v1206
      %v1377 = vunpack.c.l.b16 %v1220
      %v1378 = vunpack.c.l.b16 %v1230
      %v1379 = vunpack.c.l.b16 %v1244
      %v1380 = vunpack.c.l.b16 %v1254
      %v1381 = vunpack.c.l.b16 %v1268
      %v1382 = vunpack.c.l.b16 %v1278
      %v1383 = vunpack.c.l.b16 %v1292
      %v1384 = vunpack.c.l.b16 %v1302
      %v1385 = vunpack.c.l.b16 %v1316
      %v1386 = vunpack.c.l.b16 %v1326
      %v1387 = vunpack.c.l.b16 %v1340
      %v1388 = vunpack.c.l.b16 %v1350
      %v1389 = vunpack.c.l.b16 %v1364
      %v1390 = vunpack.c.l.b16 %v1374
      %v1391 = vpack.c.b16 %v1376, %v1375
      %v1392 = vpack.c.b16 %v1378, %v1377
      %v1393 = vpack.c.b16 %v1380, %v1379
      %v1394 = vpack.c.b16 %v1382, %v1381
      %v1395 = vpack.c.b16 %v1384, %v1383
      %v1396 = vpack.c.b16 %v1386, %v1385
      %v1397 = vpack.c.b16 %v1388, %v1387
      %v1398 = vpack.c.b16 %v1390, %v1389
      %1407 = vst [vmem:[#allocation3 + $0x8] sm:$0xff] %v1391
      %1408 = vst [vmem:[#allocation3 + $0x50] sm:$0xff] %v1392
      %1409 = vst [vmem:[#allocation3 + $0x98] sm:$0xff] %v1393
      %1410 = vst [vmem:[#allocation3 + $0xe0] sm:$0xff] %v1394
      %1411 = vst [vmem:[#allocation3 + $0x128] sm:$0xff] %v1395
      %1412 = vst [vmem:[#allocation3 + $0x170] sm:$0xff] %v1396
      %1413 = vst [vmem:[#allocation3 + $0x1b8] sm:$0xff] %v1397
      %1414 = vst [vmem:[#allocation3 + $0x200] sm:$0xff] %v1398
      %v1415 = vld [vmem:[%s1083] sm:$0xe]
      %v1416 = vld [vmem:[%s1083 + $0x4] sm:$0xf]
      %v1417 = vld [vmem:[%s1083 + $0x8] sm:$0x1]
      %v1418 = vld [vmem:[%s1083 + $0xc] sm:$0xe]
      %v1419 = vld [vmem:[%s1083 + $0x10] sm:$0xf]
      %v1420 = vld [vmem:[%s1083 + $0x14] sm:$0x1]
      %v1421 = vld [vmem:[%s1083 + $0x18] sm:$0xe]
      %v1422 = vld [vmem:[%s1083 + $0x1c] sm:$0xf]
      %v1423 = vld [vmem:[%s1083 + $0x20] sm:$0x1]
      %v1424 = vld [vmem:[%s1083 + $0x24] sm:$0xe]
      %v1425 = vld [vmem:[%s1083 + $0x28] sm:$0xf]
      %v1426 = vld [vmem:[%s1083 + $0x2c] sm:$0x1]
      %v1427 = vld [vmem:[%s1083 + $0x30] sm:$0xe]
      %v1428 = vld [vmem:[%s1083 + $0x34] sm:$0xf]
      %v1429 = vld [vmem:[%s1083 + $0x38] sm:$0x1]
      %v1430 = vld [vmem:[%s1083 + $0x3c] sm:$0xe]
      %v1431 = vld [vmem:[%s1083 + $0x40] sm:$0xf]
      %v1432 = vld [vmem:[%s1083 + $0x44] sm:$0x1]
      %v1433 = vld [vmem:[%s1083 + $0x48] sm:$0xe]
      %v1434 = vld [vmem:[%s1083 + $0x4c] sm:$0xf]
      %v1435 = vld [vmem:[%s1083 + $0x50] sm:$0x1]
      %v1436 = vld [vmem:[%s1083 + $0x54] sm:$0xe]
      %v1437 = vld [vmem:[%s1083 + $0x58] sm:$0xf]
      %v1438 = vld [vmem:[%s1083 + $0x5c] sm:$0x1]
      %vm1463 = vcmask 1042432
      %vm1464 = vcmask 1046532
      %vm1465 = vmor %vm1463, %vm1464
      %v1466 = vrot.slane %v1415, 5
      %v1467 = vrot.slane %v1466, 4
      %v1468 = vrot.slane %v1416, 5
      %v1469 = vsel %vm1465, %v1467, %v1468
      %v1470 = vrot.slane %v1468, 4
      %v1471 = vrot.slane %v1417, 5
      %v1472 = vsel %vm1465, %v1470, %v1471
      %v1473 = vrot.slane %v1418, 5
      %v1474 = vrot.slane %v1473, 4
      %v1475 = vrot.slane %v1419, 5
      %v1476 = vsel %vm1465, %v1474, %v1475
      %v1477 = vrot.slane %v1475, 4
      %v1478 = vrot.slane %v1420, 5
      %v1479 = vsel %vm1465, %v1477, %v1478
      %v1480 = vrot.slane %v1421, 5
      %v1481 = vrot.slane %v1480, 4
      %v1482 = vrot.slane %v1422, 5
      %v1483 = vsel %vm1465, %v1481, %v1482
      %v1484 = vrot.slane %v1482, 4
      %v1485 = vrot.slane %v1423, 5
      %v1486 = vsel %vm1465, %v1484, %v1485
      %v1487 = vrot.slane %v1424, 5
      %v1488 = vrot.slane %v1487, 4
      %v1489 = vrot.slane %v1425, 5
      %v1490 = vsel %vm1465, %v1488, %v1489
      %v1491 = vrot.slane %v1489, 4
      %v1492 = vrot.slane %v1426, 5
      %v1493 = vsel %vm1465, %v1491, %v1492
      %v1494 = vrot.slane %v1427, 5
      %v1495 = vrot.slane %v1494, 4
      %v1496 = vrot.slane %v1428, 5
      %v1497 = vsel %vm1465, %v1495, %v1496
      %v1498 = vrot.slane %v1496, 4
      %v1499 = vrot.slane %v1429, 5
      %v1500 = vsel %vm1465, %v1498, %v1499
      %v1501 = vrot.slane %v1430, 5
      %v1502 = vrot.slane %v1501, 4
      %v1503 = vrot.slane %v1431, 5
      %v1504 = vsel %vm1465, %v1502, %v1503
      %v1505 = vrot.slane %v1503, 4
      %v1506 = vrot.slane %v1432, 5
      %v1507 = vsel %vm1465, %v1505, %v1506
      %v1508 = vrot.slane %v1433, 5
      %v1509 = vrot.slane %v1508, 4
      %v1510 = vrot.slane %v1434, 5
      %v1511 = vsel %vm1465, %v1509, %v1510
      %v1512 = vrot.slane %v1510, 4
      %v1513 = vrot.slane %v1435, 5
      %v1514 = vsel %vm1465, %v1512, %v1513
      %v1515 = vrot.slane %v1436, 5
      %v1516 = vrot.slane %v1515, 4
      %v1517 = vrot.slane %v1437, 5
      %v1518 = vsel %vm1465, %v1516, %v1517
      %v1519 = vrot.slane %v1517, 4
      %v1520 = vrot.slane %v1438, 5
      %v1521 = vsel %vm1465, %v1519, %v1520
      %v1522 = vunpack.c.l.b16 %v1469
      %v1523 = vunpack.c.l.b16 %v1472
      %v1524 = vunpack.c.l.b16 %v1476
      %v1525 = vunpack.c.l.b16 %v1479
      %v1526 = vunpack.c.l.b16 %v1483
      %v1527 = vunpack.c.l.b16 %v1486
      %v1528 = vunpack.c.l.b16 %v1490
      %v1529 = vunpack.c.l.b16 %v1493
      %v1530 = vunpack.c.l.b16 %v1497
      %v1531 = vunpack.c.l.b16 %v1500
      %v1532 = vunpack.c.l.b16 %v1504
      %v1533 = vunpack.c.l.b16 %v1507
      %v1534 = vunpack.c.l.b16 %v1511
      %v1535 = vunpack.c.l.b16 %v1514
      %v1536 = vunpack.c.l.b16 %v1518
      %v1537 = vunpack.c.l.b16 %v1521
      %v1538 = vpack.c.b16 %v1523, %v1522
      %v1539 = vpack.c.b16 %v1525, %v1524
      %v1540 = vpack.c.b16 %v1527, %v1526
      %v1541 = vpack.c.b16 %v1529, %v1528
      %v1542 = vpack.c.b16 %v1531, %v1530
      %v1543 = vpack.c.b16 %v1533, %v1532
      %v1544 = vpack.c.b16 %v1535, %v1534
      %v1545 = vpack.c.b16 %v1537, %v1536
      %1554 = vst [vmem:[#allocation3 + $0x10] sm:$0xff] %v1538
      %1555 = vst [vmem:[#allocation3 + $0x58] sm:$0xff] %v1539
      %1556 = vst [vmem:[#allocation3 + $0xa0] sm:$0xff] %v1540
      %1557 = vst [vmem:[#allocation3 + $0xe8] sm:$0xff] %v1541
      %1558 = vst [vmem:[#allocation3 + $0x130] sm:$0xff] %v1542
      %1559 = vst [vmem:[#allocation3 + $0x178] sm:$0xff] %v1543
      %1560 = vst [vmem:[#allocation3 + $0x1c0] sm:$0xff] %v1544
      %1561 = vst [vmem:[#allocation3 + $0x208] sm:$0xff] %v1545
      %s1562 = sadd.s32 %s1080, 1
      %s1563 = smul.u32 %s1562, 3
      %s1564 = smul.addr %s1563, 4
      %s1565 = scalar_lea.vmem [#allocation2], %s1564
      %v1566 = vld [vmem:[%s1565] sm:$0xf]
      %v1567 = vld [vmem:[%s1565 + $0x4] sm:$0xf]
      %v1568 = vld [vmem:[%s1565 + $0xc] sm:$0xf]
      %v1569 = vld [vmem:[%s1565 + $0x10] sm:$0xf]
      %v1570 = vld [vmem:[%s1565 + $0x18] sm:$0xf]
      %v1571 = vld [vmem:[%s1565 + $0x1c] sm:$0xf]
      %v1572 = vld [vmem:[%s1565 + $0x24] sm:$0xf]
      %v1573 = vld [vmem:[%s1565 + $0x28] sm:$0xf]
      %v1574 = vld [vmem:[%s1565 + $0x30] sm:$0xf]
      %v1575 = vld [vmem:[%s1565 + $0x34] sm:$0xf]
      %v1576 = vld [vmem:[%s1565 + $0x3c] sm:$0xf]
      %v1577 = vld [vmem:[%s1565 + $0x40] sm:$0xf]
      %v1578 = vld [vmem:[%s1565 + $0x48] sm:$0xf]
      %v1579 = vld [vmem:[%s1565 + $0x4c] sm:$0xf]
      %v1580 = vld [vmem:[%s1565 + $0x54] sm:$0xf]
      %v1581 = vld [vmem:[%s1565 + $0x58] sm:$0xf]
      %v1598 = vunpack.c.l.b16 %v1566
      %v1599 = vunpack.c.l.b16 %v1567
      %v1600 = vunpack.c.l.b16 %v1568
      %v1601 = vunpack.c.l.b16 %v1569
      %v1602 = vunpack.c.l.b16 %v1570
      %v1603 = vunpack.c.l.b16 %v1571
      %v1604 = vunpack.c.l.b16 %v1572
      %v1605 = vunpack.c.l.b16 %v1573
      %v1606 = vunpack.c.l.b16 %v1574
      %v1607 = vunpack.c.l.b16 %v1575
      %v1608 = vunpack.c.l.b16 %v1576
      %v1609 = vunpack.c.l.b16 %v1577
      %v1610 = vunpack.c.l.b16 %v1578
      %v1611 = vunpack.c.l.b16 %v1579
      %v1612 = vunpack.c.l.b16 %v1580
      %v1613 = vunpack.c.l.b16 %v1581
      %v1614 = vpack.c.b16 %v1599, %v1598
      %v1615 = vpack.c.b16 %v1601, %v1600
      %v1616 = vpack.c.b16 %v1603, %v1602
      %v1617 = vpack.c.b16 %v1605, %v1604
      %v1618 = vpack.c.b16 %v1607, %v1606
      %v1619 = vpack.c.b16 %v1609, %v1608
      %v1620 = vpack.c.b16 %v1611, %v1610
      %v1621 = vpack.c.b16 %v1613, %v1612
      %1630 = vst [vmem:[#allocation3 + $0x18] sm:$0xff] %v1614
      %1631 = vst [vmem:[#allocation3 + $0x60] sm:$0xff] %v1615
      %1632 = vst [vmem:[#allocation3 + $0xa8] sm:$0xff] %v1616
      %1633 = vst [vmem:[#allocation3 + $0xf0] sm:$0xff] %v1617
      %1634 = vst [vmem:[#allocation3 + $0x138] sm:$0xff] %v1618
      %1635 = vst [vmem:[#allocation3 + $0x180] sm:$0xff] %v1619
      %1636 = vst [vmem:[#allocation3 + $0x1c8] sm:$0xff] %v1620
      %1637 = vst [vmem:[#allocation3 + $0x210] sm:$0xff] %v1621
      %v1638 = vld [vmem:[%s1565] sm:$0xf]
      %v1639 = vld [vmem:[%s1565 + $0x4] sm:$0xf]
      %v1640 = vld [vmem:[%s1565 + $0x8] sm:$0x1]
      %v1641 = vld [vmem:[%s1565 + $0xc] sm:$0xf]
      %v1642 = vld [vmem:[%s1565 + $0x10] sm:$0xf]
      %v1643 = vld [vmem:[%s1565 + $0x14] sm:$0x1]
      %v1644 = vld [vmem:[%s1565 + $0x18] sm:$0xf]
      %v1645 = vld [vmem:[%s1565 + $0x1c] sm:$0xf]
      %v1646 = vld [vmem:[%s1565 + $0x20] sm:$0x1]
      %v1647 = vld [vmem:[%s1565 + $0x24] sm:$0xf]
      %v1648 = vld [vmem:[%s1565 + $0x28] sm:$0xf]
      %v1649 = vld [vmem:[%s1565 + $0x2c] sm:$0x1]
      %v1650 = vld [vmem:[%s1565 + $0x30] sm:$0xf]
      %v1651 = vld [vmem:[%s1565 + $0x34] sm:$0xf]
      %v1652 = vld [vmem:[%s1565 + $0x38] sm:$0x1]
      %v1653 = vld [vmem:[%s1565 + $0x3c] sm:$0xf]
      %v1654 = vld [vmem:[%s1565 + $0x40] sm:$0xf]
      %v1655 = vld [vmem:[%s1565 + $0x44] sm:$0x1]
      %v1656 = vld [vmem:[%s1565 + $0x48] sm:$0xf]
      %v1657 = vld [vmem:[%s1565 + $0x4c] sm:$0xf]
      %v1658 = vld [vmem:[%s1565 + $0x50] sm:$0x1]
      %v1659 = vld [vmem:[%s1565 + $0x54] sm:$0xf]
      %v1660 = vld [vmem:[%s1565 + $0x58] sm:$0xf]
      %v1661 = vld [vmem:[%s1565 + $0x5c] sm:$0x1]
      %v1663 = vshrl.u32 %v1638, 16
      %v1665 = vrot.slane %v1663, 4
      %v1666 = vshll.u32 %v1638, 16
      %v1668 = vrot.slane %v1666, 5
      %v1669 = vor.u32 %v1665, %v1668
      %v1670 = vrot.slane %v1669, 4
      %v1672 = vshll.u32 %v1639, 16
      %v1674 = vrot.slane %v1672, 5
      %v1675 = vsel %vm1182, %v1670, %v1674
      %v1676 = vshrl.u32 %v1639, 16
      %v1678 = vrot.slane %v1676, 4
      %v1679 = vor.u32 %v1678, %v1674
      %v1680 = vrot.slane %v1679, 4
      %v1682 = vshll.u32 %v1640, 16
      %v1684 = vrot.slane %v1682, 5
      %v1685 = vsel %vm1182, %v1680, %v1684
      %v1687 = vshrl.u32 %v1641, 16
      %v1689 = vrot.slane %v1687, 4
      %v1690 = vshll.u32 %v1641, 16
      %v1692 = vrot.slane %v1690, 5
      %v1693 = vor.u32 %v1689, %v1692
      %v1694 = vrot.slane %v1693, 4
      %v1696 = vshll.u32 %v1642, 16
      %v1698 = vrot.slane %v1696, 5
      %v1699 = vsel %vm1182, %v1694, %v1698
      %v1700 = vshrl.u32 %v1642, 16
      %v1702 = vrot.slane %v1700, 4
      %v1703 = vor.u32 %v1702, %v1698
      %v1704 = vrot.slane %v1703, 4
      %v1706 = vshll.u32 %v1643, 16
      %v1708 = vrot.slane %v1706, 5
      %v1709 = vsel %vm1182, %v1704, %v1708
      %v1711 = vshrl.u32 %v1644, 16
      %v1713 = vrot.slane %v1711, 4
      %v1714 = vshll.u32 %v1644, 16
      %v1716 = vrot.slane %v1714, 5
      %v1717 = vor.u32 %v1713, %v1716
      %v1718 = vrot.slane %v1717, 4
      %v1720 = vshll.u32 %v1645, 16
      %v1722 = vrot.slane %v1720, 5
      %v1723 = vsel %vm1182, %v1718, %v1722
      %v1724 = vshrl.u32 %v1645, 16
      %v1726 = vrot.slane %v1724, 4
      %v1727 = vor.u32 %v1726, %v1722
      %v1728 = vrot.slane %v1727, 4
      %v1730 = vshll.u32 %v1646, 16
      %v1732 = vrot.slane %v1730, 5
      %v1733 = vsel %vm1182, %v1728, %v1732
      %v1735 = vshrl.u32 %v1647, 16
      %v1737 = vrot.slane %v1735, 4
      %v1738 = vshll.u32 %v1647, 16
      %v1740 = vrot.slane %v1738, 5
      %v1741 = vor.u32 %v1737, %v1740
      %v1742 = vrot.slane %v1741, 4
      %v1744 = vshll.u32 %v1648, 16
      %v1746 = vrot.slane %v1744, 5
      %v1747 = vsel %vm1182, %v1742, %v1746
      %v1748 = vshrl.u32 %v1648, 16
      %v1750 = vrot.slane %v1748, 4
      %v1751 = vor.u32 %v1750, %v1746
      %v1752 = vrot.slane %v1751, 4
      %v1754 = vshll.u32 %v1649, 16
      %v1756 = vrot.slane %v1754, 5
      %v1757 = vsel %vm1182, %v1752, %v1756
      %v1759 = vshrl.u32 %v1650, 16
      %v1761 = vrot.slane %v1759, 4
      %v1762 = vshll.u32 %v1650, 16
      %v1764 = vrot.slane %v1762, 5
      %v1765 = vor.u32 %v1761, %v1764
      %v1766 = vrot.slane %v1765, 4
      %v1768 = vshll.u32 %v1651, 16
      %v1770 = vrot.slane %v1768, 5
      %v1771 = vsel %vm1182, %v1766, %v1770
      %v1772 = vshrl.u32 %v1651, 16
      %v1774 = vrot.slane %v1772, 4
      %v1775 = vor.u32 %v1774, %v1770
      %v1776 = vrot.slane %v1775, 4
      %v1778 = vshll.u32 %v1652, 16
      %v1780 = vrot.slane %v1778, 5
      %v1781 = vsel %vm1182, %v1776, %v1780
      %v1783 = vshrl.u32 %v1653, 16
      %v1785 = vrot.slane %v1783, 4
      %v1786 = vshll.u32 %v1653, 16
      %v1788 = vrot.slane %v1786, 5
      %v1789 = vor.u32 %v1785, %v1788
      %v1790 = vrot.slane %v1789, 4
      %v1792 = vshll.u32 %v1654, 16
      %v1794 = vrot.slane %v1792, 5
      %v1795 = vsel %vm1182, %v1790, %v1794
      %v1796 = vshrl.u32 %v1654, 16
      %v1798 = vrot.slane %v1796, 4
      %v1799 = vor.u32 %v1798, %v1794
      %v1800 = vrot.slane %v1799, 4
      %v1802 = vshll.u32 %v1655, 16
      %v1804 = vrot.slane %v1802, 5
      %v1805 = vsel %vm1182, %v1800, %v1804
      %v1807 = vshrl.u32 %v1656, 16
      %v1809 = vrot.slane %v1807, 4
      %v1810 = vshll.u32 %v1656, 16
      %v1812 = vrot.slane %v1810, 5
      %v1813 = vor.u32 %v1809, %v1812
      %v1814 = vrot.slane %v1813, 4
      %v1816 = vshll.u32 %v1657, 16
      %v1818 = vrot.slane %v1816, 5
      %v1819 = vsel %vm1182, %v1814, %v1818
      %v1820 = vshrl.u32 %v1657, 16
      %v1822 = vrot.slane %v1820, 4
      %v1823 = vor.u32 %v1822, %v1818
      %v1824 = vrot.slane %v1823, 4
      %v1826 = vshll.u32 %v1658, 16
      %v1828 = vrot.slane %v1826, 5
      %v1829 = vsel %vm1182, %v1824, %v1828
      %v1831 = vshrl.u32 %v1659, 16
      %v1833 = vrot.slane %v1831, 4
      %v1834 = vshll.u32 %v1659, 16
      %v1836 = vrot.slane %v1834, 5
      %v1837 = vor.u32 %v1833, %v1836
      %v1838 = vrot.slane %v1837, 4
      %v1840 = vshll.u32 %v1660, 16
      %v1842 = vrot.slane %v1840, 5
      %v1843 = vsel %vm1182, %v1838, %v1842
      %v1844 = vshrl.u32 %v1660, 16
      %v1846 = vrot.slane %v1844, 4
      %v1847 = vor.u32 %v1846, %v1842
      %v1848 = vrot.slane %v1847, 4
      %v1850 = vshll.u32 %v1661, 16
      %v1852 = vrot.slane %v1850, 5
      %v1853 = vsel %vm1182, %v1848, %v1852
      %v1854 = vunpack.c.l.b16 %v1675
      %v1855 = vunpack.c.l.b16 %v1685
      %v1856 = vunpack.c.l.b16 %v1699
      %v1857 = vunpack.c.l.b16 %v1709
      %v1858 = vunpack.c.l.b16 %v1723
      %v1859 = vunpack.c.l.b16 %v1733
      %v1860 = vunpack.c.l.b16 %v1747
      %v1861 = vunpack.c.l.b16 %v1757
      %v1862 = vunpack.c.l.b16 %v1771
      %v1863 = vunpack.c.l.b16 %v1781
      %v1864 = vunpack.c.l.b16 %v1795
      %v1865 = vunpack.c.l.b16 %v1805
      %v1866 = vunpack.c.l.b16 %v1819
      %v1867 = vunpack.c.l.b16 %v1829
      %v1868 = vunpack.c.l.b16 %v1843
      %v1869 = vunpack.c.l.b16 %v1853
      %v1870 = vpack.c.b16 %v1855, %v1854
      %v1871 = vpack.c.b16 %v1857, %v1856
      %v1872 = vpack.c.b16 %v1859, %v1858
      %v1873 = vpack.c.b16 %v1861, %v1860
      %v1874 = vpack.c.b16 %v1863, %v1862
      %v1875 = vpack.c.b16 %v1865, %v1864
      %v1876 = vpack.c.b16 %v1867, %v1866
      %v1877 = vpack.c.b16 %v1869, %v1868
      %1886 = vst [vmem:[#allocation3 + $0x20] sm:$0xff] %v1870
      %1887 = vst [vmem:[#allocation3 + $0x68] sm:$0xff] %v1871
      %1888 = vst [vmem:[#allocation3 + $0xb0] sm:$0xff] %v1872
      %1889 = vst [vmem:[#allocation3 + $0xf8] sm:$0xff] %v1873
      %1890 = vst [vmem:[#allocation3 + $0x140] sm:$0xff] %v1874
      %1891 = vst [vmem:[#allocation3 + $0x188] sm:$0xff] %v1875
      %1892 = vst [vmem:[#allocation3 + $0x1d0] sm:$0xff] %v1876
      %1893 = vst [vmem:[#allocation3 + $0x218] sm:$0xff] %v1877
      %v1894 = vld [vmem:[%s1565] sm:$0xe]
      %v1895 = vld [vmem:[%s1565 + $0x4] sm:$0xf]
      %v1896 = vld [vmem:[%s1565 + $0x8] sm:$0x1]
      %v1897 = vld [vmem:[%s1565 + $0xc] sm:$0xe]
      %v1898 = vld [vmem:[%s1565 + $0x10] sm:$0xf]
      %v1899 = vld [vmem:[%s1565 + $0x14] sm:$0x1]
      %v1900 = vld [vmem:[%s1565 + $0x18] sm:$0xe]
      %v1901 = vld [vmem:[%s1565 + $0x1c] sm:$0xf]
      %v1902 = vld [vmem:[%s1565 + $0x20] sm:$0x1]
      %v1903 = vld [vmem:[%s1565 + $0x24] sm:$0xe]
      %v1904 = vld [vmem:[%s1565 + $0x28] sm:$0xf]
      %v1905 = vld [vmem:[%s1565 + $0x2c] sm:$0x1]
      %v1906 = vld [vmem:[%s1565 + $0x30] sm:$0xe]
      %v1907 = vld [vmem:[%s1565 + $0x34] sm:$0xf]
      %v1908 = vld [vmem:[%s1565 + $0x38] sm:$0x1]
      %v1909 = vld [vmem:[%s1565 + $0x3c] sm:$0xe]
      %v1910 = vld [vmem:[%s1565 + $0x40] sm:$0xf]
      %v1911 = vld [vmem:[%s1565 + $0x44] sm:$0x1]
      %v1912 = vld [vmem:[%s1565 + $0x48] sm:$0xe]
      %v1913 = vld [vmem:[%s1565 + $0x4c] sm:$0xf]
      %v1914 = vld [vmem:[%s1565 + $0x50] sm:$0x1]
      %v1915 = vld [vmem:[%s1565 + $0x54] sm:$0xe]
      %v1916 = vld [vmem:[%s1565 + $0x58] sm:$0xf]
      %v1917 = vld [vmem:[%s1565 + $0x5c] sm:$0x1]
      %v1942 = vrot.slane %v1894, 5
      %v1943 = vrot.slane %v1942, 4
      %v1944 = vrot.slane %v1895, 5
      %v1945 = vsel %vm1465, %v1943, %v1944
      %v1946 = vrot.slane %v1944, 4
      %v1947 = vrot.slane %v1896, 5
      %v1948 = vsel %vm1465, %v1946, %v1947
      %v1949 = vrot.slane %v1897, 5
      %v1950 = vrot.slane %v1949, 4
      %v1951 = vrot.slane %v1898, 5
      %v1952 = vsel %vm1465, %v1950, %v1951
      %v1953 = vrot.slane %v1951, 4
      %v1954 = vrot.slane %v1899, 5
      %v1955 = vsel %vm1465, %v1953, %v1954
      %v1956 = vrot.slane %v1900, 5
      %v1957 = vrot.slane %v1956, 4
      %v1958 = vrot.slane %v1901, 5
      %v1959 = vsel %vm1465, %v1957, %v1958
      %v1960 = vrot.slane %v1958, 4
      %v1961 = vrot.slane %v1902, 5
      %v1962 = vsel %vm1465, %v1960, %v1961
      %v1963 = vrot.slane %v1903, 5
      %v1964 = vrot.slane %v1963, 4
      %v1965 = vrot.slane %v1904, 5
      %v1966 = vsel %vm1465, %v1964, %v1965
      %v1967 = vrot.slane %v1965, 4
      %v1968 = vrot.slane %v1905, 5
      %v1969 = vsel %vm1465, %v1967, %v1968
      %v1970 = vrot.slane %v1906, 5
      %v1971 = vrot.slane %v1970, 4
      %v1972 = vrot.slane %v1907, 5
      %v1973 = vsel %vm1465, %v1971, %v1972
      %v1974 = vrot.slane %v1972, 4
      %v1975 = vrot.slane %v1908, 5
      %v1976 = vsel %vm1465, %v1974, %v1975
      %v1977 = vrot.slane %v1909, 5
      %v1978 = vrot.slane %v1977, 4
      %v1979 = vrot.slane %v1910, 5
      %v1980 = vsel %vm1465, %v1978, %v1979
      %v1981 = vrot.slane %v1979, 4
      %v1982 = vrot.slane %v1911, 5
      %v1983 = vsel %vm1465, %v1981, %v1982
      %v1984 = vrot.slane %v1912, 5
      %v1985 = vrot.slane %v1984, 4
      %v1986 = vrot.slane %v1913, 5
      %v1987 = vsel %vm1465, %v1985, %v1986
      %v1988 = vrot.slane %v1986, 4
      %v1989 = vrot.slane %v1914, 5
      %v1990 = vsel %vm1465, %v1988, %v1989
      %v1991 = vrot.slane %v1915, 5
      %v1992 = vrot.slane %v1991, 4
      %v1993 = vrot.slane %v1916, 5
      %v1994 = vsel %vm1465, %v1992, %v1993
      %v1995 = vrot.slane %v1993, 4
      %v1996 = vrot.slane %v1917, 5
      %v1997 = vsel %vm1465, %v1995, %v1996
      %v1998 = vunpack.c.l.b16 %v1945
      %v1999 = vunpack.c.l.b16 %v1948
      %v2000 = vunpack.c.l.b16 %v1952
      %v2001 = vunpack.c.l.b16 %v1955
      %v2002 = vunpack.c.l.b16 %v1959
      %v2003 = vunpack.c.l.b16 %v1962
      %v2004 = vunpack.c.l.b16 %v1966
      %v2005 = vunpack.c.l.b16 %v1969
      %v2006 = vunpack.c.l.b16 %v1973
      %v2007 = vunpack.c.l.b16 %v1976
      %v2008 = vunpack.c.l.b16 %v1980
      %v2009 = vunpack.c.l.b16 %v1983
      %v2010 = vunpack.c.l.b16 %v1987
      %v2011 = vunpack.c.l.b16 %v1990
      %v2012 = vunpack.c.l.b16 %v1994
      %v2013 = vunpack.c.l.b16 %v1997
      %v2014 = vpack.c.b16 %v1999, %v1998
      %v2015 = vpack.c.b16 %v2001, %v2000
      %v2016 = vpack.c.b16 %v2003, %v2002
      %v2017 = vpack.c.b16 %v2005, %v2004
      %v2018 = vpack.c.b16 %v2007, %v2006
      %v2019 = vpack.c.b16 %v2009, %v2008
      %v2020 = vpack.c.b16 %v2011, %v2010
      %v2021 = vpack.c.b16 %v2013, %v2012
      %2030 = vst [vmem:[#allocation3 + $0x28] sm:$0xff] %v2014
      %2031 = vst [vmem:[#allocation3 + $0x70] sm:$0xff] %v2015
      %2032 = vst [vmem:[#allocation3 + $0xb8] sm:$0xff] %v2016
      %2033 = vst [vmem:[#allocation3 + $0x100] sm:$0xff] %v2017
      %2034 = vst [vmem:[#allocation3 + $0x148] sm:$0xff] %v2018
      %2035 = vst [vmem:[#allocation3 + $0x190] sm:$0xff] %v2019
      %2036 = vst [vmem:[#allocation3 + $0x1d8] sm:$0xff] %v2020
      %2037 = vst [vmem:[#allocation3 + $0x220] sm:$0xff] %v2021
      %s2038 = sadd.s32 %s1080, 2
      %s2039 = smul.u32 %s2038, 3
      %s2040 = smul.addr %s2039, 4
      %s2041 = scalar_lea.vmem [#allocation2], %s2040
      %v2042 = vld [vmem:[%s2041] sm:$0xf]
      %v2043 = vld [vmem:[%s2041 + $0x4] sm:$0xf]
      %v2044 = vld [vmem:[%s2041 + $0xc] sm:$0xf]
      %v2045 = vld [vmem:[%s2041 + $0x10] sm:$0xf]
      %v2046 = vld [vmem:[%s2041 + $0x18] sm:$0xf]
      %v2047 = vld [vmem:[%s2041 + $0x1c] sm:$0xf]
      %v2048 = vld [vmem:[%s2041 + $0x24] sm:$0xf]
      %v2049 = vld [vmem:[%s2041 + $0x28] sm:$0xf]
      %v2050 = vld [vmem:[%s2041 + $0x30] sm:$0xf]
      %v2051 = vld [vmem:[%s2041 + $0x34] sm:$0xf]
      %v2052 = vld [vmem:[%s2041 + $0x3c] sm:$0xf]
      %v2053 = vld [vmem:[%s2041 + $0x40] sm:$0xf]
      %v2054 = vld [vmem:[%s2041 + $0x48] sm:$0xf]
      %v2055 = vld [vmem:[%s2041 + $0x4c] sm:$0xf]
      %v2056 = vld [vmem:[%s2041 + $0x54] sm:$0xf]
      %v2057 = vld [vmem:[%s2041 + $0x58] sm:$0xf]
      %v2074 = vunpack.c.l.b16 %v2042
      %v2075 = vunpack.c.l.b16 %v2043
      %v2076 = vunpack.c.l.b16 %v2044
      %v2077 = vunpack.c.l.b16 %v2045
      %v2078 = vunpack.c.l.b16 %v2046
      %v2079 = vunpack.c.l.b16 %v2047
      %v2080 = vunpack.c.l.b16 %v2048
      %v2081 = vunpack.c.l.b16 %v2049
      %v2082 = vunpack.c.l.b16 %v2050
      %v2083 = vunpack.c.l.b16 %v2051
      %v2084 = vunpack.c.l.b16 %v2052
      %v2085 = vunpack.c.l.b16 %v2053
      %v2086 = vunpack.c.l.b16 %v2054
      %v2087 = vunpack.c.l.b16 %v2055
      %v2088 = vunpack.c.l.b16 %v2056
      %v2089 = vunpack.c.l.b16 %v2057
      %v2090 = vpack.c.b16 %v2075, %v2074
      %v2091 = vpack.c.b16 %v2077, %v2076
      %v2092 = vpack.c.b16 %v2079, %v2078
      %v2093 = vpack.c.b16 %v2081, %v2080
      %v2094 = vpack.c.b16 %v2083, %v2082
      %v2095 = vpack.c.b16 %v2085, %v2084
      %v2096 = vpack.c.b16 %v2087, %v2086
      %v2097 = vpack.c.b16 %v2089, %v2088
      %2106 = vst [vmem:[#allocation3 + $0x30] sm:$0xff] %v2090
      %2107 = vst [vmem:[#allocation3 + $0x78] sm:$0xff] %v2091
      %2108 = vst [vmem:[#allocation3 + $0xc0] sm:$0xff] %v2092
      %2109 = vst [vmem:[#allocation3 + $0x108] sm:$0xff] %v2093
      %2110 = vst [vmem:[#allocation3 + $0x150] sm:$0xff] %v2094
      %2111 = vst [vmem:[#allocation3 + $0x198] sm:$0xff] %v2095
      %2112 = vst [vmem:[#allocation3 + $0x1e0] sm:$0xff] %v2096
      %2113 = vst [vmem:[#allocation3 + $0x228] sm:$0xff] %v2097
      %v2114 = vld [vmem:[%s2041] sm:$0xf]
      %v2115 = vld [vmem:[%s2041 + $0x4] sm:$0xf]
      %v2116 = vld [vmem:[%s2041 + $0x8] sm:$0x1]
      %v2117 = vld [vmem:[%s2041 + $0xc] sm:$0xf]
      %v2118 = vld [vmem:[%s2041 + $0x10] sm:$0xf]
      %v2119 = vld [vmem:[%s2041 + $0x14] sm:$0x1]
      %v2120 = vld [vmem:[%s2041 + $0x18] sm:$0xf]
      %v2121 = vld [vmem:[%s2041 + $0x1c] sm:$0xf]
      %v2122 = vld [vmem:[%s2041 + $0x20] sm:$0x1]
      %v2123 = vld [vmem:[%s2041 + $0x24] sm:$0xf]
      %v2124 = vld [vmem:[%s2041 + $0x28] sm:$0xf]
      %v2125 = vld [vmem:[%s2041 + $0x2c] sm:$0x1]
      %v2126 = vld [vmem:[%s2041 + $0x30] sm:$0xf]
      %v2127 = vld [vmem:[%s2041 + $0x34] sm:$0xf]
      %v2128 = vld [vmem:[%s2041 + $0x38] sm:$0x1]
      %v2129 = vld [vmem:[%s2041 + $0x3c] sm:$0xf]
      %v2130 = vld [vmem:[%s2041 + $0x40] sm:$0xf]
      %v2131 = vld [vmem:[%s2041 + $0x44] sm:$0x1]
      %v2132 = vld [vmem:[%s2041 + $0x48] sm:$0xf]
      %v2133 = vld [vmem:[%s2041 + $0x4c] sm:$0xf]
      %v2134 = vld [vmem:[%s2041 + $0x50] sm:$0x1]
      %v2135 = vld [vmem:[%s2041 + $0x54] sm:$0xf]
      %v2136 = vld [vmem:[%s2041 + $0x58] sm:$0xf]
      %v2137 = vld [vmem:[%s2041 + $0x5c] sm:$0x1]
      %v2139 = vshrl.u32 %v2114, 16
      %v2141 = vrot.slane %v2139, 4
      %v2142 = vshll.u32 %v2114, 16
      %v2144 = vrot.slane %v2142, 5
      %v2145 = vor.u32 %v2141, %v2144
      %v2146 = vrot.slane %v2145, 4
      %v2148 = vshll.u32 %v2115, 16
      %v2150 = vrot.slane %v2148, 5
      %v2151 = vsel %vm1182, %v2146, %v2150
      %v2152 = vshrl.u32 %v2115, 16
      %v2154 = vrot.slane %v2152, 4
      %v2155 = vor.u32 %v2154, %v2150
      %v2156 = vrot.slane %v2155, 4
      %v2158 = vshll.u32 %v2116, 16
      %v2160 = vrot.slane %v2158, 5
      %v2161 = vsel %vm1182, %v2156, %v2160
      %v2163 = vshrl.u32 %v2117, 16
      %v2165 = vrot.slane %v2163, 4
      %v2166 = vshll.u32 %v2117, 16
      %v2168 = vrot.slane %v2166, 5
      %v2169 = vor.u32 %v2165, %v2168
      %v2170 = vrot.slane %v2169, 4
      %v2172 = vshll.u32 %v2118, 16
      %v2174 = vrot.slane %v2172, 5
      %v2175 = vsel %vm1182, %v2170, %v2174
      %v2176 = vshrl.u32 %v2118, 16
      %v2178 = vrot.slane %v2176, 4
      %v2179 = vor.u32 %v2178, %v2174
      %v2180 = vrot.slane %v2179, 4
      %v2182 = vshll.u32 %v2119, 16
      %v2184 = vrot.slane %v2182, 5
      %v2185 = vsel %vm1182, %v2180, %v2184
      %v2187 = vshrl.u32 %v2120, 16
      %v2189 = vrot.slane %v2187, 4
      %v2190 = vshll.u32 %v2120, 16
      %v2192 = vrot.slane %v2190, 5
      %v2193 = vor.u32 %v2189, %v2192
      %v2194 = vrot.slane %v2193, 4
      %v2196 = vshll.u32 %v2121, 16
      %v2198 = vrot.slane %v2196, 5
      %v2199 = vsel %vm1182, %v2194, %v2198
      %v2200 = vshrl.u32 %v2121, 16
      %v2202 = vrot.slane %v2200, 4
      %v2203 = vor.u32 %v2202, %v2198
      %v2204 = vrot.slane %v2203, 4
      %v2206 = vshll.u32 %v2122, 16
      %v2208 = vrot.slane %v2206, 5
      %v2209 = vsel %vm1182, %v2204, %v2208
      %v2211 = vshrl.u32 %v2123, 16
      %v2213 = vrot.slane %v2211, 4
      %v2214 = vshll.u32 %v2123, 16
      %v2216 = vrot.slane %v2214, 5
      %v2217 = vor.u32 %v2213, %v2216
      %v2218 = vrot.slane %v2217, 4
      %v2220 = vshll.u32 %v2124, 16
      %v2222 = vrot.slane %v2220, 5
      %v2223 = vsel %vm1182, %v2218, %v2222
      %v2224 = vshrl.u32 %v2124, 16
      %v2226 = vrot.slane %v2224, 4
      %v2227 = vor.u32 %v2226, %v2222
      %v2228 = vrot.slane %v2227, 4
      %v2230 = vshll.u32 %v2125, 16
      %v2232 = vrot.slane %v2230, 5
      %v2233 = vsel %vm1182, %v2228, %v2232
      %v2235 = vshrl.u32 %v2126, 16
      %v2237 = vrot.slane %v2235, 4
      %v2238 = vshll.u32 %v2126, 16
      %v2240 = vrot.slane %v2238, 5
      %v2241 = vor.u32 %v2237, %v2240
      %v2242 = vrot.slane %v2241, 4
      %v2244 = vshll.u32 %v2127, 16
      %v2246 = vrot.slane %v2244, 5
      %v2247 = vsel %vm1182, %v2242, %v2246
      %v2248 = vshrl.u32 %v2127, 16
      %v2250 = vrot.slane %v2248, 4
      %v2251 = vor.u32 %v2250, %v2246
      %v2252 = vrot.slane %v2251, 4
      %v2254 = vshll.u32 %v2128, 16
      %v2256 = vrot.slane %v2254, 5
      %v2257 = vsel %vm1182, %v2252, %v2256
      %v2259 = vshrl.u32 %v2129, 16
      %v2261 = vrot.slane %v2259, 4
      %v2262 = vshll.u32 %v2129, 16
      %v2264 = vrot.slane %v2262, 5
      %v2265 = vor.u32 %v2261, %v2264
      %v2266 = vrot.slane %v2265, 4
      %v2268 = vshll.u32 %v2130, 16
      %v2270 = vrot.slane %v2268, 5
      %v2271 = vsel %vm1182, %v2266, %v2270
      %v2272 = vshrl.u32 %v2130, 16
      %v2274 = vrot.slane %v2272, 4
      %v2275 = vor.u32 %v2274, %v2270
      %v2276 = vrot.slane %v2275, 4
      %v2278 = vshll.u32 %v2131, 16
      %v2280 = vrot.slane %v2278, 5
      %v2281 = vsel %vm1182, %v2276, %v2280
      %v2283 = vshrl.u32 %v2132, 16
      %v2285 = vrot.slane %v2283, 4
      %v2286 = vshll.u32 %v2132, 16
      %v2288 = vrot.slane %v2286, 5
      %v2289 = vor.u32 %v2285, %v2288
      %v2290 = vrot.slane %v2289, 4
      %v2292 = vshll.u32 %v2133, 16
      %v2294 = vrot.slane %v2292, 5
      %v2295 = vsel %vm1182, %v2290, %v2294
      %v2296 = vshrl.u32 %v2133, 16
      %v2298 = vrot.slane %v2296, 4
      %v2299 = vor.u32 %v2298, %v2294
      %v2300 = vrot.slane %v2299, 4
      %v2302 = vshll.u32 %v2134, 16
      %v2304 = vrot.slane %v2302, 5
      %v2305 = vsel %vm1182, %v2300, %v2304
      %v2307 = vshrl.u32 %v2135, 16
      %v2309 = vrot.slane %v2307, 4
      %v2310 = vshll.u32 %v2135, 16
      %v2312 = vrot.slane %v2310, 5
      %v2313 = vor.u32 %v2309, %v2312
      %v2314 = vrot.slane %v2313, 4
      %v2316 = vshll.u32 %v2136, 16
      %v2318 = vrot.slane %v2316, 5
      %v2319 = vsel %vm1182, %v2314, %v2318
      %v2320 = vshrl.u32 %v2136, 16
      %v2322 = vrot.slane %v2320, 4
      %v2323 = vor.u32 %v2322, %v2318
      %v2324 = vrot.slane %v2323, 4
      %v2326 = vshll.u32 %v2137, 16
      %v2328 = vrot.slane %v2326, 5
      %v2329 = vsel %vm1182, %v2324, %v2328
      %v2330 = vunpack.c.l.b16 %v2151
      %v2331 = vunpack.c.l.b16 %v2161
      %v2332 = vunpack.c.l.b16 %v2175
      %v2333 = vunpack.c.l.b16 %v2185
      %v2334 = vunpack.c.l.b16 %v2199
      %v2335 = vunpack.c.l.b16 %v2209
      %v2336 = vunpack.c.l.b16 %v2223
      %v2337 = vunpack.c.l.b16 %v2233
      %v2338 = vunpack.c.l.b16 %v2247
      %v2339 = vunpack.c.l.b16 %v2257
      %v2340 = vunpack.c.l.b16 %v2271
      %v2341 = vunpack.c.l.b16 %v2281
      %v2342 = vunpack.c.l.b16 %v2295
      %v2343 = vunpack.c.l.b16 %v2305
      %v2344 = vunpack.c.l.b16 %v2319
      %v2345 = vunpack.c.l.b16 %v2329
      %v2346 = vpack.c.b16 %v2331, %v2330
      %v2347 = vpack.c.b16 %v2333, %v2332
      %v2348 = vpack.c.b16 %v2335, %v2334
      %v2349 = vpack.c.b16 %v2337, %v2336
      %v2350 = vpack.c.b16 %v2339, %v2338
      %v2351 = vpack.c.b16 %v2341, %v2340
      %v2352 = vpack.c.b16 %v2343, %v2342
      %v2353 = vpack.c.b16 %v2345, %v2344
      %2362 = vst [vmem:[#allocation3 + $0x38] sm:$0xff] %v2346
      %2363 = vst [vmem:[#allocation3 + $0x80] sm:$0xff] %v2347
      %2364 = vst [vmem:[#allocation3 + $0xc8] sm:$0xff] %v2348
      %2365 = vst [vmem:[#allocation3 + $0x110] sm:$0xff] %v2349
      %2366 = vst [vmem:[#allocation3 + $0x158] sm:$0xff] %v2350
      %2367 = vst [vmem:[#allocation3 + $0x1a0] sm:$0xff] %v2351
      %2368 = vst [vmem:[#allocation3 + $0x1e8] sm:$0xff] %v2352
      %2369 = vst [vmem:[#allocation3 + $0x230] sm:$0xff] %v2353
      %v2370 = vld [vmem:[%s2041] sm:$0xe]
      %v2371 = vld [vmem:[%s2041 + $0x4] sm:$0xf]
      %v2372 = vld [vmem:[%s2041 + $0x8] sm:$0x1]
      %v2373 = vld [vmem:[%s2041 + $0xc] sm:$0xe]
      %v2374 = vld [vmem:[%s2041 + $0x10] sm:$0xf]
      %v2375 = vld [vmem:[%s2041 + $0x14] sm:$0x1]
      %v2376 = vld [vmem:[%s2041 + $0x18] sm:$0xe]
      %v2377 = vld [vmem:[%s2041 + $0x1c] sm:$0xf]
      %v2378 = vld [vmem:[%s2041 + $0x20] sm:$0x1]
      %v2379 = vld [vmem:[%s2041 + $0x24] sm:$0xe]
      %v2380 = vld [vmem:[%s2041 + $0x28] sm:$0xf]
      %v2381 = vld [vmem:[%s2041 + $0x2c] sm:$0x1]
      %v2382 = vld [vmem:[%s2041 + $0x30] sm:$0xe]
      %v2383 = vld [vmem:[%s2041 + $0x34] sm:$0xf]
      %v2384 = vld [vmem:[%s2041 + $0x38] sm:$0x1]
      %v2385 = vld [vmem:[%s2041 + $0x3c] sm:$0xe]
      %v2386 = vld [vmem:[%s2041 + $0x40] sm:$0xf]
      %v2387 = vld [vmem:[%s2041 + $0x44] sm:$0x1]
      %v2388 = vld [vmem:[%s2041 + $0x48] sm:$0xe]
      %v2389 = vld [vmem:[%s2041 + $0x4c] sm:$0xf]
      %v2390 = vld [vmem:[%s2041 + $0x50] sm:$0x1]
      %v2391 = vld [vmem:[%s2041 + $0x54] sm:$0xe]
      %v2392 = vld [vmem:[%s2041 + $0x58] sm:$0xf]
      %v2393 = vld [vmem:[%s2041 + $0x5c] sm:$0x1]
      %v2418 = vrot.slane %v2370, 5
      %v2419 = vrot.slane %v2418, 4
      %v2420 = vrot.slane %v2371, 5
      %v2421 = vsel %vm1465, %v2419, %v2420
      %v2422 = vrot.slane %v2420, 4
      %v2423 = vrot.slane %v2372, 5
      %v2424 = vsel %vm1465, %v2422, %v2423
      %v2425 = vrot.slane %v2373, 5
      %v2426 = vrot.slane %v2425, 4
      %v2427 = vrot.slane %v2374, 5
      %v2428 = vsel %vm1465, %v2426, %v2427
      %v2429 = vrot.slane %v2427, 4
      %v2430 = vrot.slane %v2375, 5
      %v2431 = vsel %vm1465, %v2429, %v2430
      %v2432 = vrot.slane %v2376, 5
      %v2433 = vrot.slane %v2432, 4
      %v2434 = vrot.slane %v2377, 5
      %v2435 = vsel %vm1465, %v2433, %v2434
      %v2436 = vrot.slane %v2434, 4
      %v2437 = vrot.slane %v2378, 5
      %v2438 = vsel %vm1465, %v2436, %v2437
      %v2439 = vrot.slane %v2379, 5
      %v2440 = vrot.slane %v2439, 4
      %v2441 = vrot.slane %v2380, 5
      %v2442 = vsel %vm1465, %v2440, %v2441
      %v2443 = vrot.slane %v2441, 4
      %v2444 = vrot.slane %v2381, 5
      %v2445 = vsel %vm1465, %v2443, %v2444
      %v2446 = vrot.slane %v2382, 5
      %v2447 = vrot.slane %v2446, 4
      %v2448 = vrot.slane %v2383, 5
      %v2449 = vsel %vm1465, %v2447, %v2448
      %v2450 = vrot.slane %v2448, 4
      %v2451 = vrot.slane %v2384, 5
      %v2452 = vsel %vm1465, %v2450, %v2451
      %v2453 = vrot.slane %v2385, 5
      %v2454 = vrot.slane %v2453, 4
      %v2455 = vrot.slane %v2386, 5
      %v2456 = vsel %vm1465, %v2454, %v2455
      %v2457 = vrot.slane %v2455, 4
      %v2458 = vrot.slane %v2387, 5
      %v2459 = vsel %vm1465, %v2457, %v2458
      %v2460 = vrot.slane %v2388, 5
      %v2461 = vrot.slane %v2460, 4
      %v2462 = vrot.slane %v2389, 5
      %v2463 = vsel %vm1465, %v2461, %v2462
      %v2464 = vrot.slane %v2462, 4
      %v2465 = vrot.slane %v2390, 5
      %v2466 = vsel %vm1465, %v2464, %v2465
      %v2467 = vrot.slane %v2391, 5
      %v2468 = vrot.slane %v2467, 4
      %v2469 = vrot.slane %v2392, 5
      %v2470 = vsel %vm1465, %v2468, %v2469
      %v2471 = vrot.slane %v2469, 4
      %v2472 = vrot.slane %v2393, 5
      %v2473 = vsel %vm1465, %v2471, %v2472
      %v2474 = vunpack.c.l.b16 %v2421
      %v2475 = vunpack.c.l.b16 %v2424
      %v2476 = vunpack.c.l.b16 %v2428
      %v2477 = vunpack.c.l.b16 %v2431
      %v2478 = vunpack.c.l.b16 %v2435
      %v2479 = vunpack.c.l.b16 %v2438
      %v2480 = vunpack.c.l.b16 %v2442
      %v2481 = vunpack.c.l.b16 %v2445
      %v2482 = vunpack.c.l.b16 %v2449
      %v2483 = vunpack.c.l.b16 %v2452
      %v2484 = vunpack.c.l.b16 %v2456
      %v2485 = vunpack.c.l.b16 %v2459
      %v2486 = vunpack.c.l.b16 %v2463
      %v2487 = vunpack.c.l.b16 %v2466
      %v2488 = vunpack.c.l.b16 %v2470
      %v2489 = vunpack.c.l.b16 %v2473
      %v2490 = vpack.c.b16 %v2475, %v2474
      %v2491 = vpack.c.b16 %v2477, %v2476
      %v2492 = vpack.c.b16 %v2479, %v2478
      %v2493 = vpack.c.b16 %v2481, %v2480
      %v2494 = vpack.c.b16 %v2483, %v2482
      %v2495 = vpack.c.b16 %v2485, %v2484
      %v2496 = vpack.c.b16 %v2487, %v2486
      %v2497 = vpack.c.b16 %v2489, %v2488
      %2506 = vst [vmem:[#allocation3 + $0x40] sm:$0xff] %v2490
      %2507 = vst [vmem:[#allocation3 + $0x88] sm:$0xff] %v2491
      %2508 = vst [vmem:[#allocation3 + $0xd0] sm:$0xff] %v2492
      %2509 = vst [vmem:[#allocation3 + $0x118] sm:$0xff] %v2493
      %2510 = vst [vmem:[#allocation3 + $0x160] sm:$0xff] %v2494
      %2511 = vst [vmem:[#allocation3 + $0x1a8] sm:$0xff] %v2495
      %2512 = vst [vmem:[#allocation3 + $0x1f0] sm:$0xff] %v2496
      %2513 = vst [vmem:[#allocation3 + $0x238] sm:$0xff] %v2497
      %v2514 = vld [vmem:[#allocation3] sm:$0xff]
      %v2515 = vld [vmem:[#allocation3 + $0x8] sm:$0xff]
      %v2516 = vld [vmem:[#allocation3 + $0x10] sm:$0xff]
      %v2517 = vld [vmem:[#allocation3 + $0x18] sm:$0xff]
      %v2518 = vld [vmem:[#allocation3 + $0x20] sm:$0xff]
      %v2519 = vld [vmem:[#allocation3 + $0x28] sm:$0xff]
      %v2520 = vld [vmem:[#allocation3 + $0x30] sm:$0xff]
      %v2521 = vld [vmem:[#allocation3 + $0x38] sm:$0xff]
      %v2522 = vld [vmem:[#allocation3 + $0x40] sm:$0xff]
      %v2523 = vld [vmem:[#allocation3 + $0x48] sm:$0xff]
      %v2524 = vld [vmem:[#allocation3 + $0x50] sm:$0xff]
      %v2525 = vld [vmem:[#allocation3 + $0x58] sm:$0xff]
      %v2526 = vld [vmem:[#allocation3 + $0x60] sm:$0xff]
      %v2527 = vld [vmem:[#allocation3 + $0x68] sm:$0xff]
      %v2528 = vld [vmem:[#allocation3 + $0x70] sm:$0xff]
      %v2529 = vld [vmem:[#allocation3 + $0x78] sm:$0xff]
      %v2530 = vld [vmem:[#allocation3 + $0x80] sm:$0xff]
      %v2531 = vld [vmem:[#allocation3 + $0x88] sm:$0xff]
      %v2532 = vld [vmem:[#allocation3 + $0x90] sm:$0xff]
      %v2533 = vld [vmem:[#allocation3 + $0x98] sm:$0xff]
      %v2534 = vld [vmem:[#allocation3 + $0xa0] sm:$0xff]
      %v2535 = vld [vmem:[#allocation3 + $0xa8] sm:$0xff]
      %v2536 = vld [vmem:[#allocation3 + $0xb0] sm:$0xff]
      %v2537 = vld [vmem:[#allocation3 + $0xb8] sm:$0xff]
      %v2538 = vld [vmem:[#allocation3 + $0xc0] sm:$0xff]
      %v2539 = vld [vmem:[#allocation3 + $0xc8] sm:$0xff]
      %v2540 = vld [vmem:[#allocation3 + $0xd0] sm:$0xff]
      %v2541 = vld [vmem:[#allocation3 + $0xd8] sm:$0xff]
      %v2542 = vld [vmem:[#allocation3 + $0xe0] sm:$0xff]
      %v2543 = vld [vmem:[#allocation3 + $0xe8] sm:$0xff]
      %v2544 = vld [vmem:[#allocation3 + $0xf0] sm:$0xff]
      %v2545 = vld [vmem:[#allocation3 + $0xf8] sm:$0xff]
      %v2546 = vld [vmem:[#allocation3 + $0x100] sm:$0xff]
      %v2547 = vld [vmem:[#allocation3 + $0x108] sm:$0xff]
      %v2548 = vld [vmem:[#allocation3 + $0x110] sm:$0xff]
      %v2549 = vld [vmem:[#allocation3 + $0x118] sm:$0xff]
      %v2550 = vld [vmem:[#allocation3 + $0x120] sm:$0xff]
      %v2551 = vld [vmem:[#allocation3 + $0x128] sm:$0xff]
      %v2552 = vld [vmem:[#allocation3 + $0x130] sm:$0xff]
      %v2553 = vld [vmem:[#allocation3 + $0x138] sm:$0xff]
      %v2554 = vld [vmem:[#allocation3 + $0x140] sm:$0xff]
      %v2555 = vld [vmem:[#allocation3 + $0x148] sm:$0xff]
      %v2556 = vld [vmem:[#allocation3 + $0x150] sm:$0xff]
      %v2557 = vld [vmem:[#allocation3 + $0x158] sm:$0xff]
      %v2558 = vld [vmem:[#allocation3 + $0x160] sm:$0xff]
      %v2559 = vld [vmem:[#allocation3 + $0x168] sm:$0xff]
      %v2560 = vld [vmem:[#allocation3 + $0x170] sm:$0xff]
      %v2561 = vld [vmem:[#allocation3 + $0x178] sm:$0xff]
      %v2562 = vld [vmem:[#allocation3 + $0x180] sm:$0xff]
      %v2563 = vld [vmem:[#allocation3 + $0x188] sm:$0xff]
      %v2564 = vld [vmem:[#allocation3 + $0x190] sm:$0xff]
      %v2565 = vld [vmem:[#allocation3 + $0x198] sm:$0xff]
      %v2566 = vld [vmem:[#allocation3 + $0x1a0] sm:$0xff]
      %v2567 = vld [vmem:[#allocation3 + $0x1a8] sm:$0xff]
      %v2568 = vld [vmem:[#allocation3 + $0x1b0] sm:$0xff]
      %v2569 = vld [vmem:[#allocation3 + $0x1b8] sm:$0xff]
      %v2570 = vld [vmem:[#allocation3 + $0x1c0] sm:$0xff]
      %v2571 = vld [vmem:[#allocation3 + $0x1c8] sm:$0xff]
      %v2572 = vld [vmem:[#allocation3 + $0x1d0] sm:$0xff]
      %v2573 = vld [vmem:[#allocation3 + $0x1d8] sm:$0xff]
      %v2574 = vld [vmem:[#allocation3 + $0x1e0] sm:$0xff]
      %v2575 = vld [vmem:[#allocation3 + $0x1e8] sm:$0xff]
      %v2576 = vld [vmem:[#allocation3 + $0x1f0] sm:$0xff]
      %v2577 = vld [vmem:[#allocation3 + $0x1f8] sm:$0xff]
      %v2578 = vld [vmem:[#allocation3 + $0x200] sm:$0xff]
      %v2579 = vld [vmem:[#allocation3 + $0x208] sm:$0xff]
      %v2580 = vld [vmem:[#allocation3 + $0x210] sm:$0xff]
      %v2581 = vld [vmem:[#allocation3 + $0x218] sm:$0xff]
      %v2582 = vld [vmem:[#allocation3 + $0x220] sm:$0xff]
      %v2583 = vld [vmem:[#allocation3 + $0x228] sm:$0xff]
      %v2584 = vld [vmem:[#allocation3 + $0x230] sm:$0xff]
      %v2585 = vld [vmem:[#allocation3 + $0x238] sm:$0xff]
      %v2586 = vld [vmem:[%s4] sm:$0xf]
      %v2587 = vld [vmem:[%s4 + $0x4] sm:$0xf]
      %v2588 = vld [vmem:[%s4 + $0x8] sm:$0xf]
      %v2589 = vld [vmem:[%s4 + $0xc] sm:$0xf]
      %v2590 = vld [vmem:[%s4 + $0x10] sm:$0xf]
      %v2591 = vld [vmem:[%s4 + $0x14] sm:$0xf]
      %v2592 = vld [vmem:[%s4 + $0x18] sm:$0xf]
      %v2593 = vld [vmem:[%s4 + $0x1c] sm:$0xf]
      %v2594 = vld [vmem:[%s4 + $0x20] sm:$0xf]
      %v2595 = vld [vmem:[%s4 + $0x24] sm:$0xf]
      %v2596 = vld [vmem:[%s4 + $0x28] sm:$0xf]
      %v2597 = vld [vmem:[%s4 + $0x2c] sm:$0xf]
      %v2598 = vld [vmem:[%s4 + $0x30] sm:$0xf]
      %v2599 = vld [vmem:[%s4 + $0x34] sm:$0xf]
      %v2600 = vld [vmem:[%s4 + $0x38] sm:$0xf]
      %v2601 = vld [vmem:[%s4 + $0x3c] sm:$0xf]
      %v2602 = vld [vmem:[%s4 + $0x40] sm:$0xf]
      %v2603 = vld [vmem:[%s4 + $0x44] sm:$0xf]
      %v2604 = vld [vmem:[%s4 + $0x48] sm:$0xf]
      %v2605 = vld [vmem:[%s4 + $0x4c] sm:$0xf]
      %v2606 = vld [vmem:[%s4 + $0x50] sm:$0xf]
      %v2607 = vld [vmem:[%s4 + $0x54] sm:$0xf]
      %v2608 = vld [vmem:[%s4 + $0x58] sm:$0xf]
      %v2609 = vld [vmem:[%s4 + $0x5c] sm:$0xf]
      %v2610 = vld [vmem:[%s4 + $0x60] sm:$0xf]
      %v2611 = vld [vmem:[%s4 + $0x64] sm:$0xf]
      %v2612 = vld [vmem:[%s4 + $0x68] sm:$0xf]
      %v2613 = vld [vmem:[%s4 + $0x6c] sm:$0xf]
      %v2614 = vld [vmem:[%s4 + $0x70] sm:$0xf]
      %v2615 = vld [vmem:[%s4 + $0x74] sm:$0xf]
      %v2616 = vld [vmem:[%s4 + $0x78] sm:$0xf]
      %v2617 = vld [vmem:[%s4 + $0x7c] sm:$0xf]
      %v2618 = vld [vmem:[%s4 + $0x80] sm:$0xf]
      %v2619 = vld [vmem:[%s4 + $0x84] sm:$0xf]
      %v2620 = vld [vmem:[%s4 + $0x88] sm:$0xf]
      %v2621 = vld [vmem:[%s4 + $0x8c] sm:$0xf]
      %v2622 = vld [vmem:[%s4 + $0x90] sm:$0xf]
      %v2623 = vld [vmem:[%s4 + $0x94] sm:$0xf]
      %v2624 = vld [vmem:[%s4 + $0x98] sm:$0xf]
      %v2625 = vld [vmem:[%s4 + $0x9c] sm:$0xf]
      %v2626 = vld [vmem:[%s4 + $0xa0] sm:$0xf]
      %v2627 = vld [vmem:[%s4 + $0xa4] sm:$0xf]
      %v2628 = vld [vmem:[%s4 + $0xa8] sm:$0xf]
      %v2629 = vld [vmem:[%s4 + $0xac] sm:$0xf]
      %v2630 = vld [vmem:[%s4 + $0xb0] sm:$0xf]
      %v2631 = vld [vmem:[%s4 + $0xb4] sm:$0xf]
      %v2632 = vld [vmem:[%s4 + $0xb8] sm:$0xf]
      %v2633 = vld [vmem:[%s4 + $0xbc] sm:$0xf]
      %v2634 = vld [vmem:[%s4 + $0xc0] sm:$0xf]
      %v2635 = vld [vmem:[%s4 + $0xc4] sm:$0xf]
      %v2636 = vld [vmem:[%s4 + $0xc8] sm:$0xf]
      %v2637 = vld [vmem:[%s4 + $0xcc] sm:$0xf]
      %v2638 = vld [vmem:[%s4 + $0xd0] sm:$0xf]
      %v2639 = vld [vmem:[%s4 + $0xd4] sm:$0xf]
      %v2640 = vld [vmem:[%s4 + $0xd8] sm:$0xf]
      %v2641 = vld [vmem:[%s4 + $0xdc] sm:$0xf]
      %v2642 = vld [vmem:[%s4 + $0xe0] sm:$0xf]
      %v2643 = vld [vmem:[%s4 + $0xe4] sm:$0xf]
      %v2644 = vld [vmem:[%s4 + $0xe8] sm:$0xf]
      %v2645 = vld [vmem:[%s4 + $0xec] sm:$0xf]
      %v2646 = vld [vmem:[%s4 + $0xf0] sm:$0xf]
      %v2647 = vld [vmem:[%s4 + $0xf4] sm:$0xf]
      %v2648 = vld [vmem:[%s4 + $0xf8] sm:$0xf]
      %v2649 = vld [vmem:[%s4 + $0xfc] sm:$0xf]
      %v2650 = vld [vmem:[%s4 + $0x100] sm:$0xf]
      %v2651 = vld [vmem:[%s4 + $0x104] sm:$0xf]
      %v2652 = vld [vmem:[%s4 + $0x108] sm:$0xf]
      %v2653 = vld [vmem:[%s4 + $0x10c] sm:$0xf]
      %v2654 = vld [vmem:[%s4 + $0x110] sm:$0xf]
      %v2655 = vld [vmem:[%s4 + $0x114] sm:$0xf]
      %v2656 = vld [vmem:[%s4 + $0x118] sm:$0xf]
      %v2657 = vld [vmem:[%s4 + $0x11c] sm:$0xf]
      %v2658 = vld [vmem:[%s4 + $0x120] sm:$0xf]
      %v2659 = vld [vmem:[%s4 + $0x124] sm:$0xf]
      %v2660 = vld [vmem:[%s4 + $0x128] sm:$0xf]
      %v2661 = vld [vmem:[%s4 + $0x12c] sm:$0xf]
      %v2662 = vld [vmem:[%s4 + $0x130] sm:$0xf]
      %v2663 = vld [vmem:[%s4 + $0x134] sm:$0xf]
      %v2664 = vld [vmem:[%s4 + $0x138] sm:$0xf]
      %v2665 = vld [vmem:[%s4 + $0x13c] sm:$0xf]
      %v2666 = vld [vmem:[%s4 + $0x140] sm:$0xf]
      %v2667 = vld [vmem:[%s4 + $0x144] sm:$0xf]
      %v2668 = vld [vmem:[%s4 + $0x148] sm:$0xf]
      %v2669 = vld [vmem:[%s4 + $0x14c] sm:$0xf]
      %v2670 = vld [vmem:[%s4 + $0x150] sm:$0xf]
      %v2671 = vld [vmem:[%s4 + $0x154] sm:$0xf]
      %v2672 = vld [vmem:[%s4 + $0x158] sm:$0xf]
      %v2673 = vld [vmem:[%s4 + $0x15c] sm:$0xf]
      %v2674 = vld [vmem:[%s4 + $0x160] sm:$0xf]
      %v2675 = vld [vmem:[%s4 + $0x164] sm:$0xf]
      %v2676 = vld [vmem:[%s4 + $0x168] sm:$0xf]
      %v2677 = vld [vmem:[%s4 + $0x16c] sm:$0xf]
      %v2678 = vld [vmem:[%s4 + $0x170] sm:$0xf]
      %v2679 = vld [vmem:[%s4 + $0x174] sm:$0xf]
      %v2680 = vld [vmem:[%s4 + $0x178] sm:$0xf]
      %v2681 = vld [vmem:[%s4 + $0x17c] sm:$0xf]
      %v2682 = vld [vmem:[%s4 + $0x180] sm:$0xf]
      %v2683 = vld [vmem:[%s4 + $0x184] sm:$0xf]
      %v2684 = vld [vmem:[%s4 + $0x188] sm:$0xf]
      %v2685 = vld [vmem:[%s4 + $0x18c] sm:$0xf]
      %v2686 = vld [vmem:[%s4 + $0x190] sm:$0xf]
      %v2687 = vld [vmem:[%s4 + $0x194] sm:$0xf]
      %v2688 = vld [vmem:[%s4 + $0x198] sm:$0xf]
      %v2689 = vld [vmem:[%s4 + $0x19c] sm:$0xf]
      %v2690 = vld [vmem:[%s4 + $0x1a0] sm:$0xf]
      %v2691 = vld [vmem:[%s4 + $0x1a4] sm:$0xf]
      %v2692 = vld [vmem:[%s4 + $0x1a8] sm:$0xf]
      %v2693 = vld [vmem:[%s4 + $0x1ac] sm:$0xf]
      %v2694 = vld [vmem:[%s4 + $0x1b0] sm:$0xf]
      %v2695 = vld [vmem:[%s4 + $0x1b4] sm:$0xf]
      %v2696 = vld [vmem:[%s4 + $0x1b8] sm:$0xf]
      %v2697 = vld [vmem:[%s4 + $0x1bc] sm:$0xf]
      %v2698 = vld [vmem:[%s4 + $0x1c0] sm:$0xf]
      %v2699 = vld [vmem:[%s4 + $0x1c4] sm:$0xf]
      %v2700 = vld [vmem:[%s4 + $0x1c8] sm:$0xf]
      %v2701 = vld [vmem:[%s4 + $0x1cc] sm:$0xf]
      %v2702 = vld [vmem:[%s4 + $0x1d0] sm:$0xf]
      %v2703 = vld [vmem:[%s4 + $0x1d4] sm:$0xf]
      %v2704 = vld [vmem:[%s4 + $0x1d8] sm:$0xf]
      %v2705 = vld [vmem:[%s4 + $0x1dc] sm:$0xf]
      %v2706 = vld [vmem:[%s4 + $0x1e0] sm:$0xf]
      %v2707 = vld [vmem:[%s4 + $0x1e4] sm:$0xf]
      %v2708 = vld [vmem:[%s4 + $0x1e8] sm:$0xf]
      %v2709 = vld [vmem:[%s4 + $0x1ec] sm:$0xf]
      %v2710 = vld [vmem:[%s4 + $0x1f0] sm:$0xf]
      %v2711 = vld [vmem:[%s4 + $0x1f4] sm:$0xf]
      %v2712 = vld [vmem:[%s4 + $0x1f8] sm:$0xf]
      %v2713 = vld [vmem:[%s4 + $0x1fc] sm:$0xf]
      %v2714 = vld [vmem:[%s4 + $0x200] sm:$0xf]
      %v2715 = vld [vmem:[%s4 + $0x204] sm:$0xf]
      %v2716 = vld [vmem:[%s4 + $0x208] sm:$0xf]
      %v2717 = vld [vmem:[%s4 + $0x20c] sm:$0xf]
      %v2718 = vld [vmem:[%s4 + $0x210] sm:$0xf]
      %v2719 = vld [vmem:[%s4 + $0x214] sm:$0xf]
      %v2720 = vld [vmem:[%s4 + $0x218] sm:$0xf]
      %v2721 = vld [vmem:[%s4 + $0x21c] sm:$0xf]
      %v2722 = vld [vmem:[%s4 + $0x220] sm:$0xf]
      %v2723 = vld [vmem:[%s4 + $0x224] sm:$0xf]
      %v2724 = vld [vmem:[%s4 + $0x228] sm:$0xf]
      %v2725 = vld [vmem:[%s4 + $0x22c] sm:$0xf]
      %v2726 = vld [vmem:[%s4 + $0x230] sm:$0xf]
      %v2727 = vld [vmem:[%s4 + $0x234] sm:$0xf]
      %v2728 = vld [vmem:[%s4 + $0x238] sm:$0xf]
      %v2729 = vld [vmem:[%s4 + $0x23c] sm:$0xf]
      %v2874 = vunpack.c.l.b16 %v2586
      %v2875 = vunpack.c.l.b16 %v2587
      %v2876 = vunpack.c.l.b16 %v2588
      %v2877 = vunpack.c.l.b16 %v2589
      %v2878 = vunpack.c.l.b16 %v2590
      %v2879 = vunpack.c.l.b16 %v2591
      %v2880 = vunpack.c.l.b16 %v2592
      %v2881 = vunpack.c.l.b16 %v2593
      %v2882 = vunpack.c.l.b16 %v2594
      %v2883 = vunpack.c.l.b16 %v2595
      %v2884 = vunpack.c.l.b16 %v2596
      %v2885 = vunpack.c.l.b16 %v2597
      %v2886 = vunpack.c.l.b16 %v2598
      %v2887 = vunpack.c.l.b16 %v2599
      %v2888 = vunpack.c.l.b16 %v2600
      %v2889 = vunpack.c.l.b16 %v2601
      %v2890 = vunpack.c.l.b16 %v2602
      %v2891 = vunpack.c.l.b16 %v2603
      %v2892 = vunpack.c.l.b16 %v2604
      %v2893 = vunpack.c.l.b16 %v2605
      %v2894 = vunpack.c.l.b16 %v2606
      %v2895 = vunpack.c.l.b16 %v2607
      %v2896 = vunpack.c.l.b16 %v2608
      %v2897 = vunpack.c.l.b16 %v2609
      %v2898 = vunpack.c.l.b16 %v2610
      %v2899 = vunpack.c.l.b16 %v2611
      %v2900 = vunpack.c.l.b16 %v2612
      %v2901 = vunpack.c.l.b16 %v2613
      %v2902 = vunpack.c.l.b16 %v2614
      %v2903 = vunpack.c.l.b16 %v2615
      %v2904 = vunpack.c.l.b16 %v2616
      %v2905 = vunpack.c.l.b16 %v2617
      %v2906 = vunpack.c.l.b16 %v2618
      %v2907 = vunpack.c.l.b16 %v2619
      %v2908 = vunpack.c.l.b16 %v2620
      %v2909 = vunpack.c.l.b16 %v2621
      %v2910 = vunpack.c.l.b16 %v2622
      %v2911 = vunpack.c.l.b16 %v2623
      %v2912 = vunpack.c.l.b16 %v2624
      %v2913 = vunpack.c.l.b16 %v2625
      %v2914 = vunpack.c.l.b16 %v2626
      %v2915 = vunpack.c.l.b16 %v2627
      %v2916 = vunpack.c.l.b16 %v2628
      %v2917 = vunpack.c.l.b16 %v2629
      %v2918 = vunpack.c.l.b16 %v2630
      %v2919 = vunpack.c.l.b16 %v2631
      %v2920 = vunpack.c.l.b16 %v2632
      %v2921 = vunpack.c.l.b16 %v2633
      %v2922 = vunpack.c.l.b16 %v2634
      %v2923 = vunpack.c.l.b16 %v2635
      %v2924 = vunpack.c.l.b16 %v2636
      %v2925 = vunpack.c.l.b16 %v2637
      %v2926 = vunpack.c.l.b16 %v2638
      %v2927 = vunpack.c.l.b16 %v2639
      %v2928 = vunpack.c.l.b16 %v2640
      %v2929 = vunpack.c.l.b16 %v2641
      %v2930 = vunpack.c.l.b16 %v2642
      %v2931 = vunpack.c.l.b16 %v2643
      %v2932 = vunpack.c.l.b16 %v2644
      %v2933 = vunpack.c.l.b16 %v2645
      %v2934 = vunpack.c.l.b16 %v2646
      %v2935 = vunpack.c.l.b16 %v2647
      %v2936 = vunpack.c.l.b16 %v2648
      %v2937 = vunpack.c.l.b16 %v2649
      %v2938 = vunpack.c.l.b16 %v2650
      %v2939 = vunpack.c.l.b16 %v2651
      %v2940 = vunpack.c.l.b16 %v2652
      %v2941 = vunpack.c.l.b16 %v2653
      %v2942 = vunpack.c.l.b16 %v2654
      %v2943 = vunpack.c.l.b16 %v2655
      %v2944 = vunpack.c.l.b16 %v2656
      %v2945 = vunpack.c.l.b16 %v2657
      %v2946 = vunpack.c.l.b16 %v2658
      %v2947 = vunpack.c.l.b16 %v2659
      %v2948 = vunpack.c.l.b16 %v2660
      %v2949 = vunpack.c.l.b16 %v2661
      %v2950 = vunpack.c.l.b16 %v2662
      %v2951 = vunpack.c.l.b16 %v2663
      %v2952 = vunpack.c.l.b16 %v2664
      %v2953 = vunpack.c.l.b16 %v2665
      %v2954 = vunpack.c.l.b16 %v2666
      %v2955 = vunpack.c.l.b16 %v2667
      %v2956 = vunpack.c.l.b16 %v2668
      %v2957 = vunpack.c.l.b16 %v2669
      %v2958 = vunpack.c.l.b16 %v2670
      %v2959 = vunpack.c.l.b16 %v2671
      %v2960 = vunpack.c.l.b16 %v2672
      %v2961 = vunpack.c.l.b16 %v2673
      %v2962 = vunpack.c.l.b16 %v2674
      %v2963 = vunpack.c.l.b16 %v2675
      %v2964 = vunpack.c.l.b16 %v2676
      %v2965 = vunpack.c.l.b16 %v2677
      %v2966 = vunpack.c.l.b16 %v2678
      %v2967 = vunpack.c.l.b16 %v2679
      %v2968 = vunpack.c.l.b16 %v2680
      %v2969 = vunpack.c.l.b16 %v2681
      %v2970 = vunpack.c.l.b16 %v2682
      %v2971 = vunpack.c.l.b16 %v2683
      %v2972 = vunpack.c.l.b16 %v2684
      %v2973 = vunpack.c.l.b16 %v2685
      %v2974 = vunpack.c.l.b16 %v2686
      %v2975 = vunpack.c.l.b16 %v2687
      %v2976 = vunpack.c.l.b16 %v2688
      %v2977 = vunpack.c.l.b16 %v2689
      %v2978 = vunpack.c.l.b16 %v2690
      %v2979 = vunpack.c.l.b16 %v2691
      %v2980 = vunpack.c.l.b16 %v2692
      %v2981 = vunpack.c.l.b16 %v2693
      %v2982 = vunpack.c.l.b16 %v2694
      %v2983 = vunpack.c.l.b16 %v2695
      %v2984 = vunpack.c.l.b16 %v2696
      %v2985 = vunpack.c.l.b16 %v2697
      %v2986 = vunpack.c.l.b16 %v2698
      %v2987 = vunpack.c.l.b16 %v2699
      %v2988 = vunpack.c.l.b16 %v2700
      %v2989 = vunpack.c.l.b16 %v2701
      %v2990 = vunpack.c.l.b16 %v2702
      %v2991 = vunpack.c.l.b16 %v2703
      %v2992 = vunpack.c.l.b16 %v2704
      %v2993 = vunpack.c.l.b16 %v2705
      %v2994 = vunpack.c.l.b16 %v2706
      %v2995 = vunpack.c.l.b16 %v2707
      %v2996 = vunpack.c.l.b16 %v2708
      %v2997 = vunpack.c.l.b16 %v2709
      %v2998 = vunpack.c.l.b16 %v2710
      %v2999 = vunpack.c.l.b16 %v2711
      %v3000 = vunpack.c.l.b16 %v2712
      %v3001 = vunpack.c.l.b16 %v2713
      %v3002 = vunpack.c.l.b16 %v2714
      %v3003 = vunpack.c.l.b16 %v2715
      %v3004 = vunpack.c.l.b16 %v2716
      %v3005 = vunpack.c.l.b16 %v2717
      %v3006 = vunpack.c.l.b16 %v2718
      %v3007 = vunpack.c.l.b16 %v2719
      %v3008 = vunpack.c.l.b16 %v2720
      %v3009 = vunpack.c.l.b16 %v2721
      %v3010 = vunpack.c.l.b16 %v2722
      %v3011 = vunpack.c.l.b16 %v2723
      %v3012 = vunpack.c.l.b16 %v2724
      %v3013 = vunpack.c.l.b16 %v2725
      %v3014 = vunpack.c.l.b16 %v2726
      %v3015 = vunpack.c.l.b16 %v2727
      %v3016 = vunpack.c.l.b16 %v2728
      %v3017 = vunpack.c.l.b16 %v2729
      %v3018 = vpack.c.b16 %v2875, %v2874
      %v3019 = vpack.c.b16 %v2877, %v2876
      %v3020 = vpack.c.b16 %v2879, %v2878
      %v3021 = vpack.c.b16 %v2881, %v2880
      %v3022 = vpack.c.b16 %v2883, %v2882
      %v3023 = vpack.c.b16 %v2885, %v2884
      %v3024 = vpack.c.b16 %v2887, %v2886
      %v3025 = vpack.c.b16 %v2889, %v2888
      %v3026 = vpack.c.b16 %v2891, %v2890
      %v3027 = vpack.c.b16 %v2893, %v2892
      %v3028 = vpack.c.b16 %v2895, %v2894
      %v3029 = vpack.c.b16 %v2897, %v2896
      %v3030 = vpack.c.b16 %v2899, %v2898
      %v3031 = vpack.c.b16 %v2901, %v2900
      %v3032 = vpack.c.b16 %v2903, %v2902
      %v3033 = vpack.c.b16 %v2905, %v2904
      %v3034 = vpack.c.b16 %v2907, %v2906
      %v3035 = vpack.c.b16 %v2909, %v2908
      %v3036 = vpack.c.b16 %v2911, %v2910
      %v3037 = vpack.c.b16 %v2913, %v2912
      %v3038 = vpack.c.b16 %v2915, %v2914
      %v3039 = vpack.c.b16 %v2917, %v2916
      %v3040 = vpack.c.b16 %v2919, %v2918
      %v3041 = vpack.c.b16 %v2921, %v2920
      %v3042 = vpack.c.b16 %v2923, %v2922
      %v3043 = vpack.c.b16 %v2925, %v2924
      %v3044 = vpack.c.b16 %v2927, %v2926
      %v3045 = vpack.c.b16 %v2929, %v2928
      %v3046 = vpack.c.b16 %v2931, %v2930
      %v3047 = vpack.c.b16 %v2933, %v2932
      %v3048 = vpack.c.b16 %v2935, %v2934
      %v3049 = vpack.c.b16 %v2937, %v2936
      %v3050 = vpack.c.b16 %v2939, %v2938
      %v3051 = vpack.c.b16 %v2941, %v2940
      %v3052 = vpack.c.b16 %v2943, %v2942
      %v3053 = vpack.c.b16 %v2945, %v2944
      %v3054 = vpack.c.b16 %v2947, %v2946
      %v3055 = vpack.c.b16 %v2949, %v2948
      %v3056 = vpack.c.b16 %v2951, %v2950
      %v3057 = vpack.c.b16 %v2953, %v2952
      %v3058 = vpack.c.b16 %v2955, %v2954
      %v3059 = vpack.c.b16 %v2957, %v2956
      %v3060 = vpack.c.b16 %v2959, %v2958
      %v3061 = vpack.c.b16 %v2961, %v2960
      %v3062 = vpack.c.b16 %v2963, %v2962
      %v3063 = vpack.c.b16 %v2965, %v2964
      %v3064 = vpack.c.b16 %v2967, %v2966
      %v3065 = vpack.c.b16 %v2969, %v2968
      %v3066 = vpack.c.b16 %v2971, %v2970
      %v3067 = vpack.c.b16 %v2973, %v2972
      %v3068 = vpack.c.b16 %v2975, %v2974
      %v3069 = vpack.c.b16 %v2977, %v2976
      %v3070 = vpack.c.b16 %v2979, %v2978
      %v3071 = vpack.c.b16 %v2981, %v2980
      %v3072 = vpack.c.b16 %v2983, %v2982
      %v3073 = vpack.c.b16 %v2985, %v2984
      %v3074 = vpack.c.b16 %v2987, %v2986
      %v3075 = vpack.c.b16 %v2989, %v2988
      %v3076 = vpack.c.b16 %v2991, %v2990
      %v3077 = vpack.c.b16 %v2993, %v2992
      %v3078 = vpack.c.b16 %v2995, %v2994
      %v3079 = vpack.c.b16 %v2997, %v2996
      %v3080 = vpack.c.b16 %v2999, %v2998
      %v3081 = vpack.c.b16 %v3001, %v3000
      %v3082 = vpack.c.b16 %v3003, %v3002
      %v3083 = vpack.c.b16 %v3005, %v3004
      %v3084 = vpack.c.b16 %v3007, %v3006
      %v3085 = vpack.c.b16 %v3009, %v3008
      %v3086 = vpack.c.b16 %v3011, %v3010
      %v3087 = vpack.c.b16 %v3013, %v3012
      %v3088 = vpack.c.b16 %v3015, %v3014
      %v3089 = vpack.c.b16 %v3017, %v3016
      %3162 = vmatprep.subr.bf16.mxu0 0
      %3163 = vmatpush1.bf16.msra.mxu0 %v3018
      %3164 = vmatprep.subr.bf16.mxu0 0
      %3165 = vmatpush1.bf16.msra.mxu0 %v3019
      %3166 = vmatprep.subr.bf16.mxu0 0
      %3167 = vmatpush1.bf16.msra.mxu0 %v3020
      %3168 = vmatprep.subr.bf16.mxu0 0
      %3169 = vmatpush1.bf16.msra.mxu0 %v3021
      %3170 = vmatprep.subr.bf16.mxu0 0
      %3171 = vmatpush1.bf16.msra.mxu0 %v3022
      %3172 = vmatprep.subr.bf16.mxu0 0
      %3173 = vmatpush1.bf16.msra.mxu0 %v3023
      %3174 = vmatprep.subr.bf16.mxu0 0
      %3175 = vmatpush1.bf16.msra.mxu0 %v3024
      %3176 = vmatprep.subr.bf16.mxu0 0
      %3177 = vmatpush1.bf16.msra.mxu0 %v3025
      %3178 = vmatprep.subr.bf16.mxu0 0
      %3179 = vmatpush1.bf16.msra.mxu0 %v3026
      %3180 = vmatprep.subr.bf16.mxu0 0
      %3181 = vmatpush1.bf16.msra.mxu0 %v3027
      %3182 = vmatprep.subr.bf16.mxu0 0
      %3183 = vmatpush1.bf16.msra.mxu0 %v3028
      %3184 = vmatprep.subr.bf16.mxu0 0
      %3185 = vmatpush1.bf16.msra.mxu0 %v3029
      %3186 = vmatprep.subr.bf16.mxu0 0
      %3187 = vmatpush1.bf16.msra.mxu0 %v3030
      %3188 = vmatprep.subr.bf16.mxu0 0
      %3189 = vmatpush1.bf16.msra.mxu0 %v3031
      %3190 = vmatprep.subr.bf16.mxu0 0
      %3191 = vmatpush1.bf16.msra.mxu0 %v3032
      %3192 = vmatprep.subr.bf16.mxu0 0
      %3193 = vmatpush1.bf16.msra.mxu0 %v3033
      %3194 = vmatprep.mubr.bf16.mxu0 %v2515
      %3195 = vmatmul.mubr.bf16.gmra.mrb[0].mxu0 %v2514
      %v3196 = vpop.f32.mrb[0].mxu0
      %v3197 = vadd.f32 0.0, %v3196
      %v3198 = vpop.f32.mrb[0].mxu0
      %v3199 = vpop.f32.mrb[0].mxu0
      %v3200 = vadd.f32 0.0, %v3199
      %v3201 = vpop.f32.mrb[0].mxu0
      %3202 = vmatprep.mubr.bf16.mxu0 %v2524
      %3203 = vmatmul.mubr.bf16.gmra.mrb[0].mxu0 %v2523
      %v3204 = vpop.f32.mrb[0].mxu0
      %v3205 = vadd.f32 0.0, %v3204
      %v3206 = vpop.f32.mrb[0].mxu0
      %v3207 = vpop.f32.mrb[0].mxu0
      %v3208 = vadd.f32 0.0, %v3207
      %v3209 = vpop.f32.mrb[0].mxu0
      %3210 = vmatprep.mubr.bf16.mxu0 %v2533
      %3211 = vmatmul.mubr.bf16.gmra.mrb[0].mxu0 %v2532
      %v3212 = vpop.f32.mrb[0].mxu0
      %v3213 = vadd.f32 0.0, %v3212
      %v3214 = vpop.f32.mrb[0].mxu0
      %v3215 = vpop.f32.mrb[0].mxu0
      %v3216 = vadd.f32 0.0, %v3215
      %v3217 = vpop.f32.mrb[0].mxu0
      %3218 = vmatprep.mubr.bf16.mxu0 %v2542
      %3219 = vmatmul.mubr.bf16.gmra.mrb[0].mxu0 %v2541
      %v3220 = vpop.f32.mrb[0].mxu0
      %v3221 = vadd.f32 0.0, %v3220
      %v3222 = vpop.f32.mrb[0].mxu0
      %v3223 = vpop.f32.mrb[0].mxu0
      %v3224 = vadd.f32 0.0, %v3223
      %v3225 = vpop.f32.mrb[0].mxu0
      %3226 = vmatprep.mubr.bf16.mxu0 %v2551
      %3227 = vmatmul.mubr.bf16.gmra.mrb[0].mxu0 %v2550
      %v3228 = vpop.f32.mrb[0].mxu0
      %v3229 = vadd.f32 0.0, %v3228
      %v3230 = vpop.f32.mrb[0].mxu0
      %v3231 = vpop.f32.mrb[0].mxu0
      %v3232 = vadd.f32 0.0, %v3231
      %v3233 = vpop.f32.mrb[0].mxu0
      %3234 = vmatprep.mubr.bf16.mxu0 %v2560
      %3235 = vmatmul.mubr.bf16.gmra.mrb[0].mxu0 %v2559
      %v3236 = vpop.f32.mrb[0].mxu0
      %v3237 = vadd.f32 0.0, %v3236
      %v3238 = vpop.f32.mrb[0].mxu0
      %v3239 = vpop.f32.mrb[0].mxu0
      %v3240 = vadd.f32 0.0, %v3239
      %v3241 = vpop.f32.mrb[0].mxu0
      %3242 = vmatprep.mubr.bf16.mxu0 %v2569
      %3243 = vmatmul.mubr.bf16.gmra.mrb[0].mxu0 %v2568
      %v3244 = vpop.f32.mrb[0].mxu0
      %v3245 = vadd.f32 0.0, %v3244
      %v3246 = vpop.f32.mrb[0].mxu0
      %v3247 = vpop.f32.mrb[0].mxu0
      %v3248 = vadd.f32 0.0, %v3247
      %v3249 = vpop.f32.mrb[0].mxu0
      %3250 = vmatprep.mubr.bf16.mxu0 %v2578
      %3251 = vmatmul.mubr.bf16.gmra.mrb[0].mxu0 %v2577
      %v3252 = vpop.f32.mrb[0].mxu0
      %v3253 = vadd.f32 0.0, %v3252
      %v3254 = vpop.f32.mrb[0].mxu0
      %v3255 = vpop.f32.mrb[0].mxu0
      %v3256 = vadd.f32 0.0, %v3255
      %v3257 = vpop.f32.mrb[0].mxu0
      %3258 = vdwg.mxu0
      %3259 = vmatprep.subr.bf16.mxu0 0
      %3260 = vmatpush1.bf16.msra.mxu0 %v3034
      %3261 = vmatprep.subr.bf16.mxu0 0
      %3262 = vmatpush1.bf16.msra.mxu0 %v3035
      %3263 = vmatprep.subr.bf16.mxu0 0
      %3264 = vmatpush1.bf16.msra.mxu0 %v3036
      %3265 = vmatprep.subr.bf16.mxu0 0
      %3266 = vmatpush1.bf16.msra.mxu0 %v3037
      %3267 = vmatprep.subr.bf16.mxu0 0
      %3268 = vmatpush1.bf16.msra.mxu0 %v3038
      %3269 = vmatprep.subr.bf16.mxu0 0
      %3270 = vmatpush1.bf16.msra.mxu0 %v3039
      %3271 = vmatprep.subr.bf16.mxu0 0
      %3272 = vmatpush1.bf16.msra.mxu0 %v3040
      %3273 = vmatprep.subr.bf16.mxu0 0
      %3274 = vmatpush1.bf16.msra.mxu0 %v3041
      %3275 = vmatprep.subr.bf16.mxu0 0
      %3276 = vmatpush1.bf16.msra.mxu0 %v3042
      %3277 = vmatprep.subr.bf16.mxu0 0
      %3278 = vmatpush1.bf16.msra.mxu0 %v3043
      %3279 = vmatprep.subr.bf16.mxu0 0
      %3280 = vmatpush1.bf16.msra.mxu0 %v3044
      %3281 = vmatprep.subr.bf16.mxu0 0
      %3282 = vmatpush1.bf16.msra.mxu0 %v3045
      %3283 = vmatprep.subr.bf16.mxu0 0
      %3284 = vmatpush1.bf16.msra.mxu0 %v3046
      %3285 = vmatprep.subr.bf16.mxu0 0
      %3286 = vmatpush1.bf16.msra.mxu0 %v3047
      %3287 = vmatprep.subr.bf16.mxu0 0
      %3288 = vmatpush1.bf16.msra.mxu0 %v3048
      %3289 = vmatprep.subr.bf16.mxu0 0
      %3290 = vmatpush1.bf16.msra.mxu0 %v3049
      %3291 = vmatprep.mubr.bf16.mxu0 %v2517
      %3292 = vmatmul.mubr.bf16.gmra.mrb[0].mxu0 %v2516
      %v3293 = vpop.f32.mrb[0].mxu0
      %v3294 = vadd.f32 %v3197, %v3293
      %v3295 = vpop.f32.mrb[0].mxu0
      %v3296 = vpop.f32.mrb[0].mxu0
      %v3297 = vadd.f32 %v3200, %v3296
      %v3298 = vpop.f32.mrb[0].mxu0
      %3299 = vmatprep.mubr.bf16.mxu0 %v2526
      %3300 = vmatmul.mubr.bf16.gmra.mrb[0].mxu0 %v2525
      %v3301 = vpop.f32.mrb[0].mxu0
      %v3302 = vadd.f32 %v3205, %v3301
      %v3303 = vpop.f32.mrb[0].mxu0
      %v3304 = vpop.f32.mrb[0].mxu0
      %v3305 = vadd.f32 %v3208, %v3304
      %v3306 = vpop.f32.mrb[0].mxu0
      %3307 = vmatprep.mubr.bf16.mxu0 %v2535
      %3308 = vmatmul.mubr.bf16.gmra.mrb[0].mxu0 %v2534
      %v3309 = vpop.f32.mrb[0].mxu0
      %v3310 = vadd.f32 %v3213, %v3309
      %v3311 = vpop.f32.mrb[0].mxu0
      %v3312 = vpop.f32.mrb[0].mxu0
      %v3313 = vadd.f32 %v3216, %v3312
      %v3314 = vpop.f32.mrb[0].mxu0
      %3315 = vmatprep.mubr.bf16.mxu0 %v2544
      %3316 = vmatmul.mubr.bf16.gmra.mrb[0].mxu0 %v2543
      %v3317 = vpop.f32.mrb[0].mxu0
      %v3318 = vadd.f32 %v3221, %v3317
      %v3319 = vpop.f32.mrb[0].mxu0
      %v3320 = vpop.f32.mrb[0].mxu0
      %v3321 = vadd.f32 %v3224, %v3320
      %v3322 = vpop.f32.mrb[0].mxu0
      %3323 = vmatprep.mubr.bf16.mxu0 %v2553
      %3324 = vmatmul.mubr.bf16.gmra.mrb[0].mxu0 %v2552
      %v3325 = vpop.f32.mrb[0].mxu0
      %v3326 = vadd.f32 %v3229, %v3325
      %v3327 = vpop.f32.mrb[0].mxu0
      %v3328 = vpop.f32.mrb[0].mxu0
      %v3329 = vadd.f32 %v3232, %v3328
      %v3330 = vpop.f32.mrb[0].mxu0
      %3331 = vmatprep.mubr.bf16.mxu0 %v2562
      %3332 = vmatmul.mubr.bf16.gmra.mrb[0].mxu0 %v2561
      %v3333 = vpop.f32.mrb[0].mxu0
      %v3334 = vadd.f32 %v3237, %v3333
      %v3335 = vpop.f32.mrb[0].mxu0
      %v3336 = vpop.f32.mrb[0].mxu0
      %v3337 = vadd.f32 %v3240, %v3336
      %v3338 = vpop.f32.mrb[0].mxu0
      %3339 = vmatprep.mubr.bf16.mxu0 %v2571
      %3340 = vmatmul.mubr.bf16.gmra.mrb[0].mxu0 %v2570
      %v3341 = vpop.f32.mrb[0].mxu0
      %v3342 = vadd.f32 %v3245, %v3341
      %v3343 = vpop.f32.mrb[0].mxu0
      %v3344 = vpop.f32.mrb[0].mxu0
      %v3345 = vadd.f32 %v3248, %v3344
      %v3346 = vpop.f32.mrb[0].mxu0
      %3347 = vmatprep.mubr.bf16.mxu0 %v2580
      %3348 = vmatmul.mubr.bf16.gmra.mrb[0].mxu0 %v2579
      %v3349 = vpop.f32.mrb[0].mxu0
      %v3350 = vadd.f32 %v3253, %v3349
      %v3351 = vpop.f32.mrb[0].mxu0
      %v3352 = vpop.f32.mrb[0].mxu0
      %v3353 = vadd.f32 %v3256, %v3352
      %v3354 = vpop.f32.mrb[0].mxu0
      %3355 = vdwg.mxu0
      %3356 = vmatprep.subr.bf16.mxu0 0
      %3357 = vmatpush1.bf16.msra.mxu0 %v3050
      %3358 = vmatprep.subr.bf16.mxu0 0
      %3359 = vmatpush1.bf16.msra.mxu0 %v3051
      %3360 = vmatprep.subr.bf16.mxu0 0
      %3361 = vmatpush1.bf16.msra.mxu0 %v3052
      %3362 = vmatprep.subr.bf16.mxu0 0
      %3363 = vmatpush1.bf16.msra.mxu0 %v3053
      %3364 = vmatprep.subr.bf16.mxu0 0
      %3365 = vmatpush1.bf16.msra.mxu0 %v3054
      %3366 = vmatprep.subr.bf16.mxu0 0
      %3367 = vmatpush1.bf16.msra.mxu0 %v3055
      %3368 = vmatprep.subr.bf16.mxu0 0
      %3369 = vmatpush1.bf16.msra.mxu0 %v3056
      %3370 = vmatprep.subr.bf16.mxu0 0
      %3371 = vmatpush1.bf16.msra.mxu0 %v3057
      %3372 = vmatprep.subr.bf16.mxu0 0
      %3373 = vmatpush1.bf16.msra.mxu0 %v3058
      %3374 = vmatprep.subr.bf16.mxu0 0
      %3375 = vmatpush1.bf16.msra.mxu0 %v3059
      %3376 = vmatprep.subr.bf16.mxu0 0
      %3377 = vmatpush1.bf16.msra.mxu0 %v3060
      %3378 = vmatprep.subr.bf16.mxu0 0
      %3379 = vmatpush1.bf16.msra.mxu0 %v3061
      %3380 = vmatprep.subr.bf16.mxu0 0
      %3381 = vmatpush1.bf16.msra.mxu0 %v3062
      %3382 = vmatprep.subr.bf16.mxu0 0
      %3383 = vmatpush1.bf16.msra.mxu0 %v3063
      %3384 = vmatprep.subr.bf16.mxu0 0
      %3385 = vmatpush1.bf16.msra.mxu0 %v3064
      %3386 = vmatprep.subr.bf16.mxu0 0
      %3387 = vmatpush1.bf16.msra.mxu0 %v3065
      %3388 = vmatprep.mubr.bf16.mxu0 %v2519
      %3389 = vmatmul.mubr.bf16.gmra.mrb[0].mxu0 %v2518
      %v3390 = vpop.f32.mrb[0].mxu0
      %v3391 = vadd.f32 %v3294, %v3390
      %v3392 = vpop.f32.mrb[0].mxu0
      %v3393 = vpop.f32.mrb[0].mxu0
      %v3394 = vadd.f32 %v3297, %v3393
      %v3395 = vpop.f32.mrb[0].mxu0
      %3396 = vmatprep.mubr.bf16.mxu0 %v2528
      %3397 = vmatmul.mubr.bf16.gmra.mrb[0].mxu0 %v2527
      %v3398 = vpop.f32.mrb[0].mxu0
      %v3399 = vadd.f32 %v3302, %v3398
      %v3400 = vpop.f32.mrb[0].mxu0
      %v3401 = vpop.f32.mrb[0].mxu0
      %v3402 = vadd.f32 %v3305, %v3401
      %v3403 = vpop.f32.mrb[0].mxu0
      %3404 = vmatprep.mubr.bf16.mxu0 %v2537
      %3405 = vmatmul.mubr.bf16.gmra.mrb[0].mxu0 %v2536
      %v3406 = vpop.f32.mrb[0].mxu0
      %v3407 = vadd.f32 %v3310, %v3406
      %v3408 = vpop.f32.mrb[0].mxu0
      %v3409 = vpop.f32.mrb[0].mxu0
      %v3410 = vadd.f32 %v3313, %v3409
      %v3411 = vpop.f32.mrb[0].mxu0
      %3412 = vmatprep.mubr.bf16.mxu0 %v2546
      %3413 = vmatmul.mubr.bf16.gmra.mrb[0].mxu0 %v2545
      %v3414 = vpop.f32.mrb[0].mxu0
      %v3415 = vadd.f32 %v3318, %v3414
      %v3416 = vpop.f32.mrb[0].mxu0
      %v3417 = vpop.f32.mrb[0].mxu0
      %v3418 = vadd.f32 %v3321, %v3417
      %v3419 = vpop.f32.mrb[0].mxu0
      %3420 = vmatprep.mubr.bf16.mxu0 %v2555
      %3421 = vmatmul.mubr.bf16.gmra.mrb[0].mxu0 %v2554
      %v3422 = vpop.f32.mrb[0].mxu0
      %v3423 = vadd.f32 %v3326, %v3422
      %v3424 = vpop.f32.mrb[0].mxu0
      %v3425 = vpop.f32.mrb[0].mxu0
      %v3426 = vadd.f32 %v3329, %v3425
      %v3427 = vpop.f32.mrb[0].mxu0
      %3428 = vmatprep.mubr.bf16.mxu0 %v2564
      %3429 = vmatmul.mubr.bf16.gmra.mrb[0].mxu0 %v2563
      %v3430 = vpop.f32.mrb[0].mxu0
      %v3431 = vadd.f32 %v3334, %v3430
      %v3432 = vpop.f32.mrb[0].mxu0
      %v3433 = vpop.f32.mrb[0].mxu0
      %v3434 = vadd.f32 %v3337, %v3433
      %v3435 = vpop.f32.mrb[0].mxu0
      %3436 = vmatprep.mubr.bf16.mxu0 %v2573
      %3437 = vmatmul.mubr.bf16.gmra.mrb[0].mxu0 %v2572
      %v3438 = vpop.f32.mrb[0].mxu0
      %v3439 = vadd.f32 %v3342, %v3438
      %v3440 = vpop.f32.mrb[0].mxu0
      %v3441 = vpop.f32.mrb[0].mxu0
      %v3442 = vadd.f32 %v3345, %v3441
      %v3443 = vpop.f32.mrb[0].mxu0
      %3444 = vmatprep.mubr.bf16.mxu0 %v2582
      %3445 = vmatmul.mubr.bf16.gmra.mrb[0].mxu0 %v2581
      %v3446 = vpop.f32.mrb[0].mxu0
      %v3447 = vadd.f32 %v3350, %v3446
      %v3448 = vpop.f32.mrb[0].mxu0
      %v3449 = vpop.f32.mrb[0].mxu0
      %v3450 = vadd.f32 %v3353, %v3449
      %v3451 = vpop.f32.mrb[0].mxu0
      %3452 = vdwg.mxu0
      %3453 = vmatprep.subr.bf16.mxu0 0
      %3454 = vmatpush1.bf16.msra.mxu0 %v3066
      %3455 = vmatprep.subr.bf16.mxu0 0
      %3456 = vmatpush1.bf16.msra.mxu0 %v3067
      %3457 = vmatprep.subr.bf16.mxu0 0
      %3458 = vmatpush1.bf16.msra.mxu0 %v3068
      %3459 = vmatprep.subr.bf16.mxu0 0
      %3460 = vmatpush1.bf16.msra.mxu0 %v3069
      %3461 = vmatprep.subr.bf16.mxu0 0
      %3462 = vmatpush1.bf16.msra.mxu0 %v3070
      %3463 = vmatprep.subr.bf16.mxu0 0
      %3464 = vmatpush1.bf16.msra.mxu0 %v3071
      %3465 = vmatprep.subr.bf16.mxu0 0
      %3466 = vmatpush1.bf16.msra.mxu0 %v3072
      %3467 = vmatprep.subr.bf16.mxu0 0
      %3468 = vmatpush1.bf16.msra.mxu0 %v3073
      %3469 = vmatprep.subr.bf16.mxu0 0
      %3470 = vmatpush1.bf16.msra.mxu0 %v3074
      %3471 = vmatprep.subr.bf16.mxu0 0
      %3472 = vmatpush1.bf16.msra.mxu0 %v3075
      %3473 = vmatprep.subr.bf16.mxu0 0
      %3474 = vmatpush1.bf16.msra.mxu0 %v3076
      %3475 = vmatprep.subr.bf16.mxu0 0
      %3476 = vmatpush1.bf16.msra.mxu0 %v3077
      %3477 = vmatprep.subr.bf16.mxu0 0
      %3478 = vmatpush1.bf16.msra.mxu0 %v3078
      %3479 = vmatprep.subr.bf16.mxu0 0
      %3480 = vmatpush1.bf16.msra.mxu0 %v3079
      %3481 = vmatprep.subr.bf16.mxu0 0
      %3482 = vmatpush1.bf16.msra.mxu0 %v3080
      %3483 = vmatprep.subr.bf16.mxu0 0
      %3484 = vmatpush1.bf16.msra.mxu0 %v3081
      %3485 = vmatprep.mubr.bf16.mxu0 %v2521
      %3486 = vmatmul.mubr.bf16.gmra.mrb[0].mxu0 %v2520
      %v3487 = vpop.f32.mrb[0].mxu0
      %v3488 = vadd.f32 %v3391, %v3487
      %v3489 = vpop.f32.mrb[0].mxu0
      %v3490 = vpop.f32.mrb[0].mxu0
      %v3491 = vadd.f32 %v3394, %v3490
      %v3492 = vpop.f32.mrb[0].mxu0
      %3493 = vmatprep.mubr.bf16.mxu0 %v2530
      %3494 = vmatmul.mubr.bf16.gmra.mrb[0].mxu0 %v2529
      %v3495 = vpop.f32.mrb[0].mxu0
      %v3496 = vadd.f32 %v3399, %v3495
      %v3497 = vpop.f32.mrb[0].mxu0
      %v3498 = vpop.f32.mrb[0].mxu0
      %v3499 = vadd.f32 %v3402, %v3498
      %v3500 = vpop.f32.mrb[0].mxu0
      %3501 = vmatprep.mubr.bf16.mxu0 %v2539
      %3502 = vmatmul.mubr.bf16.gmra.mrb[0].mxu0 %v2538
      %v3503 = vpop.f32.mrb[0].mxu0
      %v3504 = vadd.f32 %v3407, %v3503
      %v3505 = vpop.f32.mrb[0].mxu0
      %v3506 = vpop.f32.mrb[0].mxu0
      %v3507 = vadd.f32 %v3410, %v3506
      %v3508 = vpop.f32.mrb[0].mxu0
      %3509 = vmatprep.mubr.bf16.mxu0 %v2548
      %3510 = vmatmul.mubr.bf16.gmra.mrb[0].mxu0 %v2547
      %v3511 = vpop.f32.mrb[0].mxu0
      %v3512 = vadd.f32 %v3415, %v3511
      %v3513 = vpop.f32.mrb[0].mxu0
      %v3514 = vpop.f32.mrb[0].mxu0
      %v3515 = vadd.f32 %v3418, %v3514
      %v3516 = vpop.f32.mrb[0].mxu0
      %3517 = vmatprep.mubr.bf16.mxu0 %v2557
      %3518 = vmatmul.mubr.bf16.gmra.mrb[0].mxu0 %v2556
      %v3519 = vpop.f32.mrb[0].mxu0
      %v3520 = vadd.f32 %v3423, %v3519
      %v3521 = vpop.f32.mrb[0].mxu0
      %v3522 = vpop.f32.mrb[0].mxu0
      %v3523 = vadd.f32 %v3426, %v3522
      %v3524 = vpop.f32.mrb[0].mxu0
      %3525 = vmatprep.mubr.bf16.mxu0 %v2566
      %3526 = vmatmul.mubr.bf16.gmra.mrb[0].mxu0 %v2565
      %v3527 = vpop.f32.mrb[0].mxu0
      %v3528 = vadd.f32 %v3431, %v3527
      %v3529 = vpop.f32.mrb[0].mxu0
      %v3530 = vpop.f32.mrb[0].mxu0
      %v3531 = vadd.f32 %v3434, %v3530
      %v3532 = vpop.f32.mrb[0].mxu0
      %3533 = vmatprep.mubr.bf16.mxu0 %v2575
      %3534 = vmatmul.mubr.bf16.gmra.mrb[0].mxu0 %v2574
      %v3535 = vpop.f32.mrb[0].mxu0
      %v3536 = vadd.f32 %v3439, %v3535
      %v3537 = vpop.f32.mrb[0].mxu0
      %v3538 = vpop.f32.mrb[0].mxu0
      %v3539 = vadd.f32 %v3442, %v3538
      %v3540 = vpop.f32.mrb[0].mxu0
      %3541 = vmatprep.mubr.bf16.mxu0 %v2584
      %3542 = vmatmul.mubr.bf16.gmra.mrb[0].mxu0 %v2583
      %v3543 = vpop.f32.mrb[0].mxu0
      %v3544 = vadd.f32 %v3447, %v3543
      %v3545 = vpop.f32.mrb[0].mxu0
      %v3546 = vpop.f32.mrb[0].mxu0
      %v3547 = vadd.f32 %v3450, %v3546
      %v3548 = vpop.f32.mrb[0].mxu0
      %3549 = vdwg.mxu0
      %3550 = vmatprep.subr.bf16.mxu0 0
      %3551 = vmatpush1.bf16.msra.mxu0 %v3082
      %3552 = vmatprep.subr.bf16.mxu0 0
      %3553 = vmatpush1.bf16.msra.mxu0 %v3083
      %3554 = vmatprep.subr.bf16.mxu0 0
      %3555 = vmatpush1.bf16.msra.mxu0 %v3084
      %3556 = vmatprep.subr.bf16.mxu0 0
      %3557 = vmatpush1.bf16.msra.mxu0 %v3085
      %3558 = vmatprep.subr.bf16.mxu0 0
      %3559 = vmatpush1.bf16.msra.mxu0 %v3086
      %3560 = vmatprep.subr.bf16.mxu0 0
      %3561 = vmatpush1.bf16.msra.mxu0 %v3087
      %3562 = vmatprep.subr.bf16.mxu0 0
      %3563 = vmatpush1.bf16.msra.mxu0 %v3088
      %3564 = vmatprep.subr.bf16.mxu0 0
      %3565 = vmatpush1.bf16.msra.mxu0 %v3089
      %3566 = vmatprep.subr.bf16.mxu0 0
      %3567 = vmatpush1.bf16.msra.mxu0 0
      %3568 = vmatprep.subr.bf16.mxu0 0
      %3569 = vmatpush1.bf16.msra.mxu0 0
      %3570 = vmatprep.subr.bf16.mxu0 0
      %3571 = vmatpush1.bf16.msra.mxu0 0
      %3572 = vmatprep.subr.bf16.mxu0 0
      %3573 = vmatpush1.bf16.msra.mxu0 0
      %3574 = vmatprep.subr.bf16.mxu0 0
      %3575 = vmatpush1.bf16.msra.mxu0 0
      %3576 = vmatprep.subr.bf16.mxu0 0
      %3577 = vmatpush1.bf16.msra.mxu0 0
      %3578 = vmatprep.subr.bf16.mxu0 0
      %3579 = vmatpush1.bf16.msra.mxu0 0
      %3580 = vmatprep.subr.bf16.mxu0 0
      %3581 = vmatpush1.bf16.msra.mxu0 0
      %3582 = vmatprep.mubr.bf16.mxu0 0
      %3583 = vmatmul.mubr.bf16.gmra.mrb[0].mxu0 %v2522
      %v3584 = vpop.f32.mrb[0].mxu0
      %v3585 = vadd.f32 %v3488, %v3584
      %v3586 = vpop.f32.mrb[0].mxu0
      %v3587 = vpop.f32.mrb[0].mxu0
      %v3588 = vadd.f32 %v3491, %v3587
      %v3589 = vpop.f32.mrb[0].mxu0
      %3590 = vmatprep.mubr.bf16.mxu0 0
      %3591 = vmatmul.mubr.bf16.gmra.mrb[0].mxu0 %v2531
      %v3592 = vpop.f32.mrb[0].mxu0
      %v3593 = vadd.f32 %v3496, %v3592
      %v3594 = vpop.f32.mrb[0].mxu0
      %v3595 = vpop.f32.mrb[0].mxu0
      %v3596 = vadd.f32 %v3499, %v3595
      %v3597 = vpop.f32.mrb[0].mxu0
      %3598 = vmatprep.mubr.bf16.mxu0 0
      %3599 = vmatmul.mubr.bf16.gmra.mrb[0].mxu0 %v2540
      %v3600 = vpop.f32.mrb[0].mxu0
      %v3601 = vadd.f32 %v3504, %v3600
      %v3602 = vpop.f32.mrb[0].mxu0
      %v3603 = vpop.f32.mrb[0].mxu0
      %v3604 = vadd.f32 %v3507, %v3603
      %v3605 = vpop.f32.mrb[0].mxu0
      %3606 = vmatprep.mubr.bf16.mxu0 0
      %3607 = vmatmul.mubr.bf16.gmra.mrb[0].mxu0 %v2549
      %v3608 = vpop.f32.mrb[0].mxu0
      %v3609 = vadd.f32 %v3512, %v3608
      %v3610 = vpop.f32.mrb[0].mxu0
      %v3611 = vpop.f32.mrb[0].mxu0
      %v3612 = vadd.f32 %v3515, %v3611
      %v3613 = vpop.f32.mrb[0].mxu0
      %3614 = vmatprep.mubr.bf16.mxu0 0
      %3615 = vmatmul.mubr.bf16.gmra.mrb[0].mxu0 %v2558
      %v3616 = vpop.f32.mrb[0].mxu0
      %v3617 = vadd.f32 %v3520, %v3616
      %v3618 = vpop.f32.mrb[0].mxu0
      %v3619 = vpop.f32.mrb[0].mxu0
      %v3620 = vadd.f32 %v3523, %v3619
      %v3621 = vpop.f32.mrb[0].mxu0
      %3622 = vmatprep.mubr.bf16.mxu0 0
      %3623 = vmatmul.mubr.bf16.gmra.mrb[0].mxu0 %v2567
      %v3624 = vpop.f32.mrb[0].mxu0
      %v3625 = vadd.f32 %v3528, %v3624
      %v3626 = vpop.f32.mrb[0].mxu0
      %v3627 = vpop.f32.mrb[0].mxu0
      %v3628 = vadd.f32 %v3531, %v3627
      %v3629 = vpop.f32.mrb[0].mxu0
      %3630 = vmatprep.mubr.bf16.mxu0 0
      %3631 = vmatmul.mubr.bf16.gmra.mrb[0].mxu0 %v2576
      %v3632 = vpop.f32.mrb[0].mxu0
      %v3633 = vadd.f32 %v3536, %v3632
      %v3634 = vpop.f32.mrb[0].mxu0
      %v3635 = vpop.f32.mrb[0].mxu0
      %v3636 = vadd.f32 %v3539, %v3635
      %v3637 = vpop.f32.mrb[0].mxu0
      %3638 = vmatprep.mubr.bf16.mxu0 0
      %3639 = vmatmul.mubr.bf16.gmra.mrb[0].mxu0 %v2585
      %v3640 = vpop.f32.mrb[0].mxu0
      %v3641 = vadd.f32 %v3544, %v3640
      %v3642 = vpop.f32.mrb[0].mxu0
      %v3643 = vpop.f32.mrb[0].mxu0
      %v3644 = vadd.f32 %v3547, %v3643
      %v3645 = vpop.f32.mrb[0].mxu0
      %3646 = vdwg.mxu0
      %v3647 = vpack.c.bf16 %v3588, %v3585
      %v3648 = vpack.c.bf16 %v3596, %v3593
      %v3649 = vpack.c.bf16 %v3604, %v3601
      %v3650 = vpack.c.bf16 %v3612, %v3609
      %v3651 = vpack.c.bf16 %v3620, %v3617
      %v3652 = vpack.c.bf16 %v3628, %v3625
      %v3653 = vpack.c.bf16 %v3636, %v3633
      %v3654 = vpack.c.bf16 %v3644, %v3641
      %v3663 = vunpack.c.l.b16 %v3647
      %v3664 = vunpack.c.h.b16 %v3647
      %v3665 = vunpack.c.l.b16 %v3648
      %v3666 = vunpack.c.h.b16 %v3648
      %v3667 = vunpack.c.l.b16 %v3649
      %v3668 = vunpack.c.h.b16 %v3649
      %v3669 = vunpack.c.l.b16 %v3650
      %v3670 = vunpack.c.h.b16 %v3650
      %v3671 = vunpack.c.l.b16 %v3651
      %v3672 = vunpack.c.h.b16 %v3651
      %v3673 = vunpack.c.l.b16 %v3652
      %v3674 = vunpack.c.h.b16 %v3652
      %v3675 = vunpack.c.l.b16 %v3653
      %v3676 = vunpack.c.h.b16 %v3653
      %v3677 = vunpack.c.l.b16 %v3654
      %v3678 = vunpack.c.h.b16 %v3654
      %v3679 = vpack.c.b16 %v3663, %v3663
      %v3680 = vpack.c.b16 %v3664, %v3664
      %v3681 = vpack.c.b16 %v3665, %v3665
      %v3682 = vpack.c.b16 %v3666, %v3666
      %v3683 = vpack.c.b16 %v3667, %v3667
      %v3684 = vpack.c.b16 %v3668, %v3668
      %v3685 = vpack.c.b16 %v3669, %v3669
      %v3686 = vpack.c.b16 %v3670, %v3670
      %v3687 = vpack.c.b16 %v3671, %v3671
      %v3688 = vpack.c.b16 %v3672, %v3672
      %v3689 = vpack.c.b16 %v3673, %v3673
      %v3690 = vpack.c.b16 %v3674, %v3674
      %v3691 = vpack.c.b16 %v3675, %v3675
      %v3692 = vpack.c.b16 %v3676, %v3676
      %v3693 = vpack.c.b16 %v3677, %v3677
      %v3694 = vpack.c.b16 %v3678, %v3678
      %3711 = vst [vmem:[%s288] sm:$0xf] %v3679
      %3712 = vst [vmem:[%s288 + $0x4] sm:$0xf] %v3680
      %3713 = vst [vmem:[%s288 + $0x8] sm:$0xf] %v3681
      %3714 = vst [vmem:[%s288 + $0xc] sm:$0xf] %v3682
      %3715 = vst [vmem:[%s288 + $0x10] sm:$0xf] %v3683
      %3716 = vst [vmem:[%s288 + $0x14] sm:$0xf] %v3684
      %3717 = vst [vmem:[%s288 + $0x18] sm:$0xf] %v3685
      %3718 = vst [vmem:[%s288 + $0x1c] sm:$0xf] %v3686
      %3719 = vst [vmem:[%s288 + $0x20] sm:$0xf] %v3687
      %3720 = vst [vmem:[%s288 + $0x24] sm:$0xf] %v3688
      %3721 = vst [vmem:[%s288 + $0x28] sm:$0xf] %v3689
      %3722 = vst [vmem:[%s288 + $0x2c] sm:$0xf] %v3690
      %3723 = vst [vmem:[%s288 + $0x30] sm:$0xf] %v3691
      %3724 = vst [vmem:[%s288 + $0x34] sm:$0xf] %v3692
      %3725 = vst [vmem:[%s288 + $0x38] sm:$0xf] %v3693
      %3726 = vst [vmem:[%s288 + $0x3c] sm:$0xf] %v3694
      %v3727 = vunpack.c.l.bf16 %v3647
      %v3728 = vunpack.c.h.bf16 %v3647
      %v3729 = vunpack.c.l.bf16 %v3648
      %v3730 = vunpack.c.h.bf16 %v3648
      %v3731 = vunpack.c.l.bf16 %v3649
      %v3732 = vunpack.c.h.bf16 %v3649
      %v3733 = vunpack.c.l.bf16 %v3650
      %v3734 = vunpack.c.h.bf16 %v3650
      %v3735 = vunpack.c.l.bf16 %v3651
      %v3736 = vunpack.c.h.bf16 %v3651
      %v3737 = vunpack.c.l.bf16 %v3652
      %v3738 = vunpack.c.h.bf16 %v3652
      %v3739 = vunpack.c.l.bf16 %v3653
      %v3740 = vunpack.c.h.bf16 %v3653
      %v3741 = vunpack.c.l.bf16 %v3654
      %v3742 = vunpack.c.h.bf16 %v3654
      %v3743 = vadd.f32 %v3727, %v3728
      %v3744 = vadd.f32 %v3743, %v3729
      %v3745 = vadd.f32 %v3744, %v3730
      %v3746 = vadd.f32 %v3745, %v3731
      %v3747 = vadd.f32 %v3746, %v3732
      %v3748 = vadd.f32 %v3747, %v3733
      %v3749 = vadd.f32 %v3748, %v3734
      %v3750 = vadd.f32 %v3749, %v3735
      %v3751 = vadd.f32 %v3750, %v3736
      %v3752 = vadd.f32 %v3751, %v3737
      %v3753 = vadd.f32 %v3752, %v3738
      %v3754 = vadd.f32 %v3753, %v3739
      %v3755 = vadd.f32 %v3754, %v3740
      %v3756 = vadd.f32 %v3755, %v3741
      %v3757 = vadd.f32 %v3756, %v3742
      %v3758 = vrot.slane %v3757, 4
      %v3759 = vadd.f32 %v3757, %v3758
      %v3760 = vrot.slane %v3759, 2
      %v3761 = vadd.f32 %v3759, %v3760
      %v3762 = vrot.slane %v3761, 1
      %v3763 = vadd.f32 %v3761, %v3762
      %3764 = vst [vmem:[%s297] sm:$0x1] %v3763
      %v3765 = vmul.f32 %v3727, %v3727
      %v3766 = vmul.f32 %v3728, %v3728
      %v3767 = vmul.f32 %v3729, %v3729
      %v3768 = vmul.f32 %v3730, %v3730
      %v3769 = vmul.f32 %v3731, %v3731
      %v3770 = vmul.f32 %v3732, %v3732
      %v3771 = vmul.f32 %v3733, %v3733
      %v3772 = vmul.f32 %v3734, %v3734
      %v3773 = vmul.f32 %v3735, %v3735
      %v3774 = vmul.f32 %v3736, %v3736
      %v3775 = vmul.f32 %v3737, %v3737
      %v3776 = vmul.f32 %v3738, %v3738
      %v3777 = vmul.f32 %v3739, %v3739
      %v3778 = vmul.f32 %v3740, %v3740
      %v3779 = vmul.f32 %v3741, %v3741
      %v3780 = vmul.f32 %v3742, %v3742
      %v3781 = vadd.f32 %v3765, %v3766
      %v3782 = vadd.f32 %v3781, %v3767
      %v3783 = vadd.f32 %v3782, %v3768
      %v3784 = vadd.f32 %v3783, %v3769
      %v3785 = vadd.f32 %v3784, %v3770
      %v3786 = vadd.f32 %v3785, %v3771
      %v3787 = vadd.f32 %v3786, %v3772
      %v3788 = vadd.f32 %v3787, %v3773
      %v3789 = vadd.f32 %v3788, %v3774
      %v3790 = vadd.f32 %v3789, %v3775
      %v3791 = vadd.f32 %v3790, %v3776
      %v3792 = vadd.f32 %v3791, %v3777
      %v3793 = vadd.f32 %v3792, %v3778
      %v3794 = vadd.f32 %v3793, %v3779
      %v3795 = vadd.f32 %v3794, %v3780
      %v3796 = vrot.slane %v3795, 4
      %v3797 = vadd.f32 %v3795, %v3796
      %v3798 = vrot.slane %v3797, 2
      %v3799 = vadd.f32 %v3797, %v3798
      %v3800 = vrot.slane %v3799, 1
      %v3801 = vadd.f32 %v3799, %v3800
      %3802 = vst [vmem:[%s297 + $0x1] sm:$0x1] %v3801
      %s3803 = smul.u32 8, %s23
      %p3804 = scmp.lt.s32.totalorder %s22, 1
      %s3805 = scalar_select %p3804, %s22, 1
      %p3806 = scmp.lt.s32.totalorder %s3803, 15
      %s3807 = scalar_select %p3806, %s3803, 15
      %s3808 = smul.addr %s3807, 2
      %s3809 = smul.addr %s3805, 32
      %s3810 = sadd.s32 %s3808, %s3809
      %s3811 = smul.addr %s3810, 4
      %s3812 = scalar_lea.vmem %s5, %s3811
      %p3813 = scmp.lt.s32.totalorder %s22, 1
      %s3814 = scalar_select %p3813, %s22, 1
      %p3815 = scmp.lt.s32.totalorder %s23, 1
      %s3816 = scalar_select %p3815, %s23, 1
      %s3817 = smul.addr %s3814, 2
      %s3818 = sadd.s32 %s3816, %s3817
      %s3819 = smul.addr %s3818, 2
      %s3820 = scalar_lea.vmem %s6, %s3819
      // Predicated region
      $region45: #{residual50_forward.5} parent=39 // pred_check
        %p3821 = pneg %p160
      $region46: #{residual50_forward.5} parent=39 // pred_check_branch
        %3823 = sbr.rel (%p3821) target = $region48
      $region47: #{residual50_forward.5} parent=39 // pred_region
        %s3824 = smul.u32 8, %s23
      $region48: #{residual50_forward.5} parent=39 // pred_fallthru
        _
      // Predicated region
      $region49: #{residual50_forward.5} parent=39 // pred_check
        %p3825 = pneg %p188
      $region50: #{residual50_forward.5} parent=39 // pred_check_branch
        %3827 = sbr.rel (%p3825) target = $region52
      $region51: #{residual50_forward.5} parent=39 // pred_region
        _
      $region52: #{residual50_forward.5} parent=39 // pred_fallthru
        _
    $region40: #{residual50_forward.5} parent=5 // pred_fallthru
      _
    %p3828 = scmp.le.s32.totalorder 2, %s13
    // Predicated region
    $region53: #{residual50_forward.5} parent=5 // pred_check
      %p3829 = pneg %p3828
    $region54: #{residual50_forward.5} parent=5 // pred_check_branch
      %3831 = sbr.rel (%p3829) target = $region56
    $region55: #{residual50_forward.5} parent=5 // pred_region
      %s3832 = ssub.s32 %s13, 2
      // Predicated region
      $region57: #{residual50_forward.5} parent=55 // pred_check
        %p3833 = pneg %p166
      $region58: #{residual50_forward.5} parent=55 // pred_check_branch
        %3835 = sbr.rel (%p3833) target = $region60
      $region59: #{residual50_forward.5} parent=55 // pred_region
        %s3836 = smul.u32 8, %s25
        %p3837 = scmp.lt.s32.totalorder %s24, 1
        %s3838 = scalar_select %p3837, %s24, 1
        %p3839 = scmp.lt.s32.totalorder %s3836, 15
        %s3840 = scalar_select %p3839, %s3836, 15
        %s3841 = smul.addr %s3840, 2
        %s3842 = smul.addr %s3838, 32
        %s3843 = sadd.s32 %s3841, %s3842
        %s3844 = smul.addr %s3843, 4
        %s3845 = scalar_lea.vmem %s5, %s3844
      $region60: #{residual50_forward.5} parent=55 // pred_fallthru
        _
      // Predicated region
      $region61: #{residual50_forward.5} parent=55 // pred_check
        %p3846 = pneg %p194
      $region62: #{residual50_forward.5} parent=55 // pred_check_branch
        %3848 = sbr.rel (%p3846) target = $region64
      $region63: #{residual50_forward.5} parent=55 // pred_region
        %p3849 = scmp.lt.s32.totalorder %s24, 1
        %s3850 = scalar_select %p3849, %s24, 1
        %p3851 = scmp.lt.s32.totalorder %s25, 1
        %s3852 = scalar_select %p3851, %s25, 1
        %s3853 = smul.addr %s3850, 2
        %s3854 = sadd.s32 %s3852, %s3853
        %s3855 = smul.addr %s3854, 2
        %s3856 = scalar_lea.vmem %s6, %s3855
      $region64: #{residual50_forward.5} parent=55 // pred_fallthru
        _
    $region56: #{residual50_forward.5} parent=5 // pred_fallthru
      _
  $region6: #{residual50_forward.5} parent=0 // loop_footer
    %s17 = sadd.s32 1, %s13
  $region7: #{residual50_forward.5} parent=0 // loop_footer_branch
    %12 = sbr.rel target = $region3
  $region8: #{residual50_forward.5} parent=0 // loop_exit
    _

</llo_original>
